<compile_context>
chip_gen: v7x
topology: tpu7x:2x2x1
jax: 0.10.0
libtpu: 0.0.40
codegen_flags: <defaults>
</compile_context>

<pallas_src>
import functools

import jax
import jax.numpy as jnp
from jax import lax
from jax.experimental import pallas as pl
from jax.experimental.pallas import tpu as pltpu


# ----------------------------------------------------------------------------
# Kernel 1: 1x1 conv (y = x @ w.T, bias algebraically cancelled by BN) plus
# per-channel sum / sum-of-squares accumulation.
# grid = (Cout // tn, M_pad // tm); M is the inner ("arbitrary") reduction axis
# for the stats outputs, Cout is "parallel" (megacore-splittable).
# ----------------------------------------------------------------------------
def _conv_stats_kernel(x_ref, w_ref, y_ref, s_ref, ss_ref):
    @pl.when(pl.program_id(1) == 0)
    def _():
        s_ref[...] = jnp.zeros_like(s_ref)
        ss_ref[...] = jnp.zeros_like(ss_ref)

    # x: (tm, Cin) bf16; w: (tn, Cin) bf16; contract dim 1 of both (no
    # materialized weight transpose), f32 accumulation on the MXU.
    y = lax.dot_general(
        x_ref[...], w_ref[...],
        dimension_numbers=(((1,), (1,)), ((), ())),
        preferred_element_type=jnp.float32,
    )                                                      # (tm, tn) f32
    y_ref[...] = y.astype(y_ref.dtype)
    # Zero-padded rows produce y == 0 exactly (no bias), so they add nothing.
    s_ref[...] += jnp.sum(y, axis=0, keepdims=True)        # (1, tn)
    ss_ref[...] += jnp.sum(y * y, axis=0, keepdims=True)   # (1, tn)


# ----------------------------------------------------------------------------
# Kernel 2: apply BN as a single fused scale/shift over lane-dense (tm, Cout)
# tiles; output written in bf16.
# ----------------------------------------------------------------------------
def _bn_apply_kernel(y_ref, scale_ref, shift_ref, o_ref):
    o_ref[...] = (y_ref[...] * scale_ref[...]
                  + shift_ref[...]).astype(o_ref.dtype)


def _clamp_vmem(need_bytes):
    # Explicit scoped-VMEM limit: at least 32 MiB (defaults are 16/32 MiB),
    # capped at 56 MiB so it stays safe on v7x's 64 MiB physical VMEM.
    return int(min(max(need_bytes, 32 << 20), 56 << 20))


@functools.partial(jax.jit, static_argnames=("eps", "tm", "tn"))
def fcn_forward(feat_nchw, conv_w, conv_b, gamma, beta, eps=1e-5,
                tm=512, tn=512):
    """Forward of conv(1x1) -> BatchNorm2d (training-mode batch statistics).

    conv_b is accepted for interface parity but is mathematically a no-op:
    training-mode BN subtracts the per-channel batch mean, which cancels any
    per-channel constant added by the conv bias.
    """
    del conv_b  # cancels exactly under training-mode BatchNorm
    N, C, H, W = feat_nchw.shape
    Cout, Cin = conv_w.shape[0], conv_w.shape[1]
    assert C == Cin
    assert Cout % tn == 0 and tn % 128 == 0 and Cin % 128 == 0
    M = N * H * W

    # M tile: multiple of 16 (bf16 sublane packing); pad M to a whole number
    # of tiles.  Padded rows are zero and contribute 0 to the BN sums.
    if M <= tm:
        tm_eff = ((M + 15) // 16) * 16
    else:
        assert tm % 16 == 0
        tm_eff = tm
    M_pad = ((M + tm_eff - 1) // tm_eff) * tm_eff
    m_tiles = M_pad // tm_eff
    cout_tiles = Cout // tn

    # NCHW -> (M, Cin): channels last (lane axis).  bf16 halves HBM traffic;
    # the matmul accumulates in f32 on the MXU.  (Transpose + cast + pad are
    # expected to fuse into one XLA pass.)
    x = jnp.transpose(feat_nchw, (0, 2, 3, 1)).reshape(M, Cin)
    x = x.astype(jnp.bfloat16)
    if M_pad != M:
        x = jnp.pad(x, ((0, M_pad - M), (0, 0)))

    w_bf16 = conv_w.reshape(Cout, Cin).astype(jnp.bfloat16)

    # ---------------- Kernel 1: conv + stats --------------------------------
    vmem1 = _clamp_vmem(
        2 * tm_eff * Cin * 2        # x, double-buffered, bf16
        + 2 * tn * Cin * 2          # weight, double-buffered, bf16
        + 2 * tm_eff * tn * 4       # y out tile, double-buffered, f32
        + 4 * tn * 4 * 2            # stats accumulators
        + tm_eff * tn * 4           # matmul result temporary
        + (4 << 20))                # slack for Mosaic temporaries
    bytes1 = (cout_tiles * M_pad * Cin * 2   # x re-read once per Cout tile
              + Cout * Cin * 2               # weight read once
              + M_pad * Cout * 4             # y write (f32 intermediate)
              + 2 * Cout * 4)                # stats

    y_flat, s, ss = pl.pallas_call(
        _conv_stats_kernel,
        out_shape=(
            jax.ShapeDtypeStruct((M_pad, Cout), jnp.float32),
            jax.ShapeDtypeStruct((1, Cout), jnp.float32),
            jax.ShapeDtypeStruct((1, Cout), jnp.float32),
        ),
        grid_spec=pltpu.PrefetchScalarGridSpec(
            num_scalar_prefetch=0,
            grid=(cout_tiles, m_tiles),
            in_specs=[
                pl.BlockSpec((tm_eff, Cin), lambda j, i: (i, 0)),   # x
                pl.BlockSpec((tn, Cin), lambda j, i: (j, 0)),       # weight
            ],
            out_specs=(
                pl.BlockSpec((tm_eff, tn), lambda j, i: (i, j)),    # y
                pl.BlockSpec((1, tn), lambda j, i: (0, j)),         # sum
                pl.BlockSpec((1, tn), lambda j, i: (0, j)),         # sumsq
            ),
        ),
        compiler_params=pltpu.CompilerParams(
            dimension_semantics=("parallel", "arbitrary"),
            vmem_limit_bytes=vmem1),
        cost_estimate=pl.CostEstimate(
            flops=2 * M_pad * Cin * Cout,
            transcendentals=0,
            bytes_accessed=bytes1),
    )(x, w_bf16)

    # ---------------- Per-channel scale/shift (tiny, plain XLA) -------------
    inv_m = 1.0 / float(M)
    mean = s * inv_m                                        # (1, Cout)
    var = jnp.maximum(ss * inv_m - mean * mean, 0.0)        # biased (BN train)
    inv_std = lax.rsqrt(var + float(eps))
    g2 = gamma.reshape(1, Cout).astype(jnp.float32)
    b2 = beta.reshape(1, Cout).astype(jnp.float32)
    scale = g2 * inv_std                                    # (1, Cout)
    shift = b2 - mean * scale                               # (1, Cout)

    # ---------------- Kernel 2: apply BN (lane-dense, bf16 writeback) -------
    vmem2 = _clamp_vmem(
        2 * tm_eff * Cout * 4       # y in, double-buffered, f32
        + 2 * tm_eff * Cout * 2     # out, double-buffered, bf16
        + 4 * Cout * 4              # scale/shift
        + (2 << 20))
    bytes2 = (M_pad * Cout * 4 + M_pad * Cout * 2 + 2 * Cout * 4)

    out = pl.pallas_call(
        _bn_apply_kernel,
        out_shape=jax.ShapeDtypeStruct((M_pad, Cout), jnp.bfloat16),
        grid_spec=pltpu.PrefetchScalarGridSpec(
            num_scalar_prefetch=0,
            grid=(m_tiles,),
            in_specs=[
                pl.BlockSpec((tm_eff, Cout), lambda i: (i, 0)),     # y
                pl.BlockSpec((1, Cout), lambda i: (0, 0)),          # scale
                pl.BlockSpec((1, Cout), lambda i: (0, 0)),          # shift
            ],
            out_specs=pl.BlockSpec((tm_eff, Cout), lambda i: (i, 0)),
        ),
        compiler_params=pltpu.CompilerParams(
            dimension_semantics=("parallel",),
            vmem_limit_bytes=vmem2),
        cost_estimate=pl.CostEstimate(
            flops=2 * M_pad * Cout,
            transcendentals=0,
            bytes_accessed=bytes2),
    )(y_flat, scale, shift)

    # (M, Cout) bf16 -> NCHW f32 (cast fuses with the final transpose pass).
    out = out[:M].astype(jnp.float32)
    return jnp.transpose(out.reshape(N, H, W, Cout), (0, 3, 1, 2))


def _reference(feat_nchw, conv_w, conv_b, gamma, beta, eps=1e-5):
    N, C, H, W = feat_nchw.shape
    Cout = conv_w.shape[0]
    x = jnp.transpose(feat_nchw, (0, 2, 3, 1)).reshape(-1, C).astype(jnp.float32)
    w = conv_w.reshape(Cout, C).astype(jnp.float32)
    y = x @ w.T + conv_b                        # bias kept: must cancel in BN
    mean = jnp.mean(y, axis=0)
    var = jnp.mean((y - mean) ** 2, axis=0)     # biased var (BN training mode)
    y = (y - mean) / jnp.sqrt(var + eps) * gamma + beta
    return jnp.transpose(y.reshape(N, H, W, Cout), (0, 3, 1, 2))


if __name__ == "__main__":
    key = jax.random.PRNGKey(0)
    k_feat, k_w, k_b = jax.random.split(key, 3)

    # Small spatial/batch; channel count fixed by the module (Conv2d(2048,2048,1)).
    N, C, H, W = 2, 2048, 4, 4
    feat = jax.random.normal(k_feat, (N, C, H, W), dtype=jnp.float32)

    # Deterministic parameter init (shapes from __init__).
    fan_in = C * 1 * 1
    bound = 1.0 / jnp.sqrt(fan_in)
    conv_w = jax.random.uniform(k_w, (C, C, 1, 1), jnp.float32, -bound, bound)
    conv_b = jax.random.uniform(k_b, (C,), jnp.float32, -bound, bound)
    gamma = jnp.ones((C,), jnp.float32)   # BatchNorm2d default weight init
    beta = jnp.zeros((C,), jnp.float32)   # BatchNorm2d default bias init

    out = fcn_forward(feat, conv_w, conv_b, gamma, beta)
    out = jax.block_until_ready(out)
    assert out.shape == (N, C, H, W)
    assert out.dtype == jnp.float32

    # Tight check against a reference using the same bf16-rounded operands
    # (isolates kernel correctness — including the bias cancellation — from
    # the intentional bf16 quantization of inputs/output).
    feat_q = feat.astype(jnp.bfloat16).astype(jnp.float32)
    conv_w_q = conv_w.astype(jnp.bfloat16).astype(jnp.float32)
    ref_q = _reference(feat_q, conv_w_q, conv_b, gamma, beta)
    assert jnp.allclose(out, ref_q, atol=1e-2, rtol=1e-2)

    # Loose sanity check against the full-f32 reference.
    ref = _reference(feat, conv_w, conv_b, gamma, beta)
    assert jnp.allclose(out, ref, atol=3e-2, rtol=3e-2)

    print("KERNEL_OK")
</pallas_src>

<mosaic_0001>
module attributes {stable_mosaic.version = 11 : i64} {
  func.func @_conv_stats_kernel(%arg0: i32, %arg1: i32, %arg2: memref<32x2048xbf16, #tpu.memory_space<vmem>>, %arg3: memref<512x2048xbf16, #tpu.memory_space<vmem>>, %arg4: memref<32x512xf32, #tpu.memory_space<vmem>>, %arg5: memref<1x512xf32, #tpu.memory_space<vmem>>, %arg6: memref<1x512xf32, #tpu.memory_space<vmem>>) attributes {dimension_semantics = [#tpu.dimension_semantics<parallel>, #tpu.dimension_semantics<arbitrary>], iteration_bounds = array<i64: 4, 1>, scalar_prefetch = 0 : i64, scratch_operands = 0 : i64, tpu.core_type = #tpu.core_type<tc>, window_params = [{transform_indices = @transform_0, window_bounds = array<i64: 32, 2048>}, {transform_indices = @transform_1, window_bounds = array<i64: 512, 2048>}, {transform_indices = @transform_2, window_bounds = array<i64: 32, 512>}, {transform_indices = @transform_3, window_bounds = array<i64: 1, 512>}, {transform_indices = @transform_4, window_bounds = array<i64: 1, 512>}]} {
    %c0_i32 = arith.constant 0 : i32
    %0 = arith.cmpi eq, %arg1, %c0_i32 : i32
    %1 = arith.extui %0 : i1 to i32
    %c0_i32_0 = arith.constant 0 : i32
    %2 = arith.cmpi ne, %1, %c0_i32_0 : i32
    scf.if %2 {
      %cst_16 = arith.constant 0.000000e+00 : f32
      %18 = vector.broadcast %cst_16 : f32 to vector<1x512xf32>
      %c0_17 = arith.constant 0 : index
      %c0_18 = arith.constant 0 : index
      %19 = vector.load %arg5[%c0_17, %c0_18] : memref<1x512xf32, #tpu.memory_space<vmem>>, vector<1x512xf32>
      tpu.vector_store %arg5[%c0_17, %c0_18], %18 {strides = array<i32>} : memref<1x512xf32, #tpu.memory_space<vmem>>, vector<1x512xf32>,
      %cst_19 = arith.constant 0.000000e+00 : f32
      %20 = vector.broadcast %cst_19 : f32 to vector<1x512xf32>
      %c0_20 = arith.constant 0 : index
      %c0_21 = arith.constant 0 : index
      %21 = vector.load %arg6[%c0_20, %c0_21] : memref<1x512xf32, #tpu.memory_space<vmem>>, vector<1x512xf32>
      tpu.vector_store %arg6[%c0_20, %c0_21], %20 {strides = array<i32>} : memref<1x512xf32, #tpu.memory_space<vmem>>, vector<1x512xf32>,
    } else {
    }
    %c0 = arith.constant 0 : index
    %c0_1 = arith.constant 0 : index
    %3 = vector.load %arg2[%c0, %c0_1] : memref<32x2048xbf16, #tpu.memory_space<vmem>>, vector<32x2048xbf16>
    %c0_2 = arith.constant 0 : index
    %c0_3 = arith.constant 0 : index
    %4 = vector.load %arg3[%c0_2, %c0_3] : memref<512x2048xbf16, #tpu.memory_space<vmem>>, vector<512x2048xbf16>
    %cst = arith.constant dense<0.000000e+00> : vector<32x512xf32>
    %5 = tpu.matmul %3, %4, %cst {dimension_numbers = #tpu.dot_dimension_numbers<[1], [1], [0], [0], [0, 0, 1, 0], [], []>} : vector<32x2048xbf16>, vector<512x2048xbf16>, vector<32x512xf32> -> vector<32x512xf32>
    %c0_4 = arith.constant 0 : index
    %c0_5 = arith.constant 0 : index
    %6 = vector.load %arg4[%c0_4, %c0_5] : memref<32x512xf32, #tpu.memory_space<vmem>>, vector<32x512xf32>
    tpu.vector_store %arg4[%c0_4, %c0_5], %5 {strides = array<i32>} : memref<32x512xf32, #tpu.memory_space<vmem>>, vector<32x512xf32>,
    %c0_6 = arith.constant 0 : index
    %c0_7 = arith.constant 0 : index
    %7 = vector.load %arg5[%c0_6, %c0_7] : memref<1x512xf32, #tpu.memory_space<vmem>>, vector<1x512xf32>
    %cst_8 = arith.constant dense<0.000000e+00> : vector<512xf32>
    %8 = vector.multi_reduction <add>, %5, %cst_8 [0] : vector<32x512xf32> to vector<512xf32>
    %9 = vector.shape_cast %8 : vector<512xf32> to vector<1x512xf32>
    %10 = arith.addf %7, %9 : vector<1x512xf32>
    %c0_9 = arith.constant 0 : index
    %c0_10 = arith.constant 0 : index
    %11 = vector.load %arg5[%c0_9, %c0_10] : memref<1x512xf32, #tpu.memory_space<vmem>>, vector<1x512xf32>
    tpu.vector_store %arg5[%c0_9, %c0_10], %10 {strides = array<i32>} : memref<1x512xf32, #tpu.memory_space<vmem>>, vector<1x512xf32>,
    %c0_11 = arith.constant 0 : index
    %c0_12 = arith.constant 0 : index
    %12 = vector.load %arg6[%c0_11, %c0_12] : memref<1x512xf32, #tpu.memory_space<vmem>>, vector<1x512xf32>
    %13 = arith.mulf %5, %5 : vector<32x512xf32>
    %cst_13 = arith.constant dense<0.000000e+00> : vector<512xf32>
    %14 = vector.multi_reduction <add>, %13, %cst_13 [0] : vector<32x512xf32> to vector<512xf32>
    %15 = vector.shape_cast %14 : vector<512xf32> to vector<1x512xf32>
    %16 = arith.addf %12, %15 : vector<1x512xf32>
    %c0_14 = arith.constant 0 : index
    %c0_15 = arith.constant 0 : index
    %17 = vector.load %arg6[%c0_14, %c0_15] : memref<1x512xf32, #tpu.memory_space<vmem>>, vector<1x512xf32>
    tpu.vector_store %arg6[%c0_14, %c0_15], %16 {strides = array<i32>} : memref<1x512xf32, #tpu.memory_space<vmem>>, vector<1x512xf32>,
    return
  }
  func.func @transform_0(%arg0: i32, %arg1: i32) -> (i32, i32) {
    %c0_i32 = arith.constant 0 : i32
    %c0_i32_0 = arith.constant 0 : i32
    return %arg1, %c0_i32 : i32, i32
  }
  func.func @transform_1(%arg0: i32, %arg1: i32) -> (i32, i32) {
    %c0_i32 = arith.constant 0 : i32
    %c0_i32_0 = arith.constant 0 : i32
    return %arg0, %c0_i32 : i32, i32
  }
  func.func @transform_2(%arg0: i32, %arg1: i32) -> (i32, i32) {
    %c0_i32 = arith.constant 0 : i32
    return %arg1, %arg0 : i32, i32
  }
  func.func @transform_3(%arg0: i32, %arg1: i32) -> (i32, i32) {
    %c0_i32 = arith.constant 0 : i32
    %c0_i32_0 = arith.constant 0 : i32
    return %c0_i32, %arg0 : i32, i32
  }
  func.func @transform_4(%arg0: i32, %arg1: i32) -> (i32, i32) {
    %c0_i32 = arith.constant 0 : i32
    %c0_i32_0 = arith.constant 0 : i32
    return %c0_i32, %arg0 : i32, i32
  }
}

module attributes {stable_mosaic.version = 11 : i64} {
  func.func @_bn_apply_kernel(%arg0: i32, %arg1: memref<32x2048xf32, #tpu.memory_space<vmem>>, %arg2: memref<1x2048xf32, #tpu.memory_space<vmem>>, %arg3: memref<1x2048xf32, #tpu.memory_space<vmem>>, %arg4: memref<32x2048xbf16, #tpu.memory_space<vmem>>) attributes {dimension_semantics = [#tpu.dimension_semantics<parallel>], iteration_bounds = array<i64: 1>, scalar_prefetch = 0 : i64, scratch_operands = 0 : i64, tpu.core_type = #tpu.core_type<tc>, window_params = [{transform_indices = @transform_0, window_bounds = array<i64: 32, 2048>}, {pipeline_mode = #tpu.pipeline_mode<synchronous>, transform_indices = @transform_1, window_bounds = array<i64: 1, 2048>}, {pipeline_mode = #tpu.pipeline_mode<synchronous>, transform_indices = @transform_2, window_bounds = array<i64: 1, 2048>}, {transform_indices = @transform_3, window_bounds = array<i64: 32, 2048>}]} {
    %c0 = arith.constant 0 : index
    %c0_0 = arith.constant 0 : index
    %0 = vector.load %arg1[%c0, %c0_0] : memref<32x2048xf32, #tpu.memory_space<vmem>>, vector<32x2048xf32>
    %c0_1 = arith.constant 0 : index
    %c0_2 = arith.constant 0 : index
    %1 = vector.load %arg2[%c0_1, %c0_2] : memref<1x2048xf32, #tpu.memory_space<vmem>>, vector<1x2048xf32>
    %2 = vector.broadcast %1 : vector<1x2048xf32> to vector<32x2048xf32>
    %3 = arith.mulf %0, %2 : vector<32x2048xf32>
    %c0_3 = arith.constant 0 : index
    %c0_4 = arith.constant 0 : index
    %4 = vector.load %arg3[%c0_3, %c0_4] : memref<1x2048xf32, #tpu.memory_space<vmem>>, vector<1x2048xf32>
    %5 = vector.broadcast %4 : vector<1x2048xf32> to vector<32x2048xf32>
    %6 = arith.addf %3, %5 : vector<32x2048xf32>
    %7 = arith.truncf %6 : vector<32x2048xf32> to vector<32x2048xbf16>
    %c0_5 = arith.constant 0 : index
    %c0_6 = arith.constant 0 : index
    %8 = vector.load %arg4[%c0_5, %c0_6] : memref<32x2048xbf16, #tpu.memory_space<vmem>>, vector<32x2048xbf16>
    tpu.vector_store %arg4[%c0_5, %c0_6], %7 {strides = array<i32>} : memref<32x2048xbf16, #tpu.memory_space<vmem>>, vector<32x2048xbf16>,
    return
  }
  func.func @transform_0(%arg0: i32) -> (i32, i32) {
    %c0_i32 = arith.constant 0 : i32
    %c0_i32_0 = arith.constant 0 : i32
    return %arg0, %c0_i32 : i32, i32
  }
  func.func @transform_1(%arg0: i32) -> (i32, i32) {
    %c0_i32 = arith.constant 0 : i32
    %c0_i32_0 = arith.constant 0 : i32
    %c0_i32_1 = arith.constant 0 : i32
    return %c0_i32, %c0_i32_0 : i32, i32
  }
  func.func @transform_2(%arg0: i32) -> (i32, i32) {
    %c0_i32 = arith.constant 0 : i32
    %c0_i32_0 = arith.constant 0 : i32
    %c0_i32_1 = arith.constant 0 : i32
    return %c0_i32, %c0_i32_0 : i32, i32
  }
  func.func @transform_3(%arg0: i32) -> (i32, i32) {
    %c0_i32 = arith.constant 0 : i32
    %c0_i32_0 = arith.constant 0 : i32
    return %arg0, %c0_i32 : i32, i32
  }
}

</mosaic_0001>

<llo_original>
// kernel: fcn_forward.3
$region0: #{fcn_forward.3}
  #allocation0 [shape = 'u32[]', space=smem, size = 0x4, offset = 0x4, fixed_abs, tag = 'smem constant byte address 0x4 - core index']
  #allocation1 [shape = 'u32[144,128]{1,0:T(1,128)}', space=vmem, size = 0x12000, scoped, tag = 'internal scratch']
  %s0 = inlined_call_operand.vmem [shape: f32[32,2048], index: 0, kind: input, shape index: {}]
  %s1 = inlined_call_operand.vmem [shape: f32[1,2048], index: 1, kind: input, shape index: {}]
  %s2 = inlined_call_operand.vmem [shape: f32[1,2048], index: 2, kind: input, shape index: {}]
  %s3 = inlined_call_operand.vmem [shape: bf16[32,2048], index: 3, kind: output, shape index: {}]
  %s4 = sld [smem:[#allocation0]]
  $region22: #{fcn_forward.3} parent=0
    _
  %s6 = ssub.s32 1, %s4
  %s7 = scalar_select 0, %s6, %s4
  // Predicated region
  $region2: #{fcn_forward.3} parent=0 // pred_check
    _
  $region3: #{fcn_forward.3} parent=0 // pred_check_branch
    %9 = sbr.rel (0) target = $region5
  $region4: #{fcn_forward.3} parent=0 // pred_region
    _
  $region5: #{fcn_forward.3} parent=0 // pred_fallthru
    _
  // Predicated region
  $region6: #{fcn_forward.3} parent=0 // pred_check
    _
  $region7: #{fcn_forward.3} parent=0 // pred_check_branch
    %11 = sbr.rel (0) target = $region9
  $region8: #{fcn_forward.3} parent=0 // pred_region
    _
  $region9: #{fcn_forward.3} parent=0 // pred_fallthru
    _
  // Predicated region
  $region10: #{fcn_forward.3} parent=0 // pred_check
    _
  $region11: #{fcn_forward.3} parent=0 // pred_check_branch
    %13 = sbr.rel (0) target = $region13
  $region12: #{fcn_forward.3} parent=0 // pred_region
    _
  $region13: #{fcn_forward.3} parent=0 // pred_fallthru
    _
  %v14 = vld [vmem:[%s0] sm:$0xff]
  %v15 = vld [vmem:[%s0 + $0x8] sm:$0xff]
  %v16 = vld [vmem:[%s0 + $0x10] sm:$0xff]
  %v17 = vld [vmem:[%s0 + $0x18] sm:$0xff]
  %v18 = vld [vmem:[%s0 + $0x20] sm:$0xff]
  %v19 = vld [vmem:[%s0 + $0x28] sm:$0xff]
  %v20 = vld [vmem:[%s0 + $0x30] sm:$0xff]
  %v21 = vld [vmem:[%s0 + $0x38] sm:$0xff]
  %v22 = vld [vmem:[%s0 + $0x40] sm:$0xff]
  %v23 = vld [vmem:[%s0 + $0x48] sm:$0xff]
  %v24 = vld [vmem:[%s0 + $0x50] sm:$0xff]
  %v25 = vld [vmem:[%s0 + $0x58] sm:$0xff]
  %v26 = vld [vmem:[%s0 + $0x60] sm:$0xff]
  %v27 = vld [vmem:[%s0 + $0x68] sm:$0xff]
  %v28 = vld [vmem:[%s0 + $0x70] sm:$0xff]
  %v29 = vld [vmem:[%s0 + $0x78] sm:$0xff]
  %v30 = vld [vmem:[%s0 + $0x80] sm:$0xff]
  %v31 = vld [vmem:[%s0 + $0x88] sm:$0xff]
  %v32 = vld [vmem:[%s0 + $0x90] sm:$0xff]
  %v33 = vld [vmem:[%s0 + $0x98] sm:$0xff]
  %v34 = vld [vmem:[%s0 + $0xa0] sm:$0xff]
  %v35 = vld [vmem:[%s0 + $0xa8] sm:$0xff]
  %v36 = vld [vmem:[%s0 + $0xb0] sm:$0xff]
  %v37 = vld [vmem:[%s0 + $0xb8] sm:$0xff]
  %v38 = vld [vmem:[%s0 + $0xc0] sm:$0xff]
  %v39 = vld [vmem:[%s0 + $0xc8] sm:$0xff]
  %v40 = vld [vmem:[%s0 + $0xd0] sm:$0xff]
  %v41 = vld [vmem:[%s0 + $0xd8] sm:$0xff]
  %v42 = vld [vmem:[%s0 + $0xe0] sm:$0xff]
  %v43 = vld [vmem:[%s0 + $0xe8] sm:$0xff]
  %v44 = vld [vmem:[%s0 + $0xf0] sm:$0xff]
  %v45 = vld [vmem:[%s0 + $0xf8] sm:$0xff]
  %v46 = vld [vmem:[%s0 + $0x100] sm:$0xff]
  %v47 = vld [vmem:[%s0 + $0x108] sm:$0xff]
  %v48 = vld [vmem:[%s0 + $0x110] sm:$0xff]
  %v49 = vld [vmem:[%s0 + $0x118] sm:$0xff]
  %v50 = vld [vmem:[%s0 + $0x120] sm:$0xff]
  %v51 = vld [vmem:[%s0 + $0x128] sm:$0xff]
  %v52 = vld [vmem:[%s0 + $0x130] sm:$0xff]
  %v53 = vld [vmem:[%s0 + $0x138] sm:$0xff]
  %v54 = vld [vmem:[%s0 + $0x140] sm:$0xff]
  %v55 = vld [vmem:[%s0 + $0x148] sm:$0xff]
  %v56 = vld [vmem:[%s0 + $0x150] sm:$0xff]
  %v57 = vld [vmem:[%s0 + $0x158] sm:$0xff]
  %v58 = vld [vmem:[%s0 + $0x160] sm:$0xff]
  %v59 = vld [vmem:[%s0 + $0x168] sm:$0xff]
  %v60 = vld [vmem:[%s0 + $0x170] sm:$0xff]
  %v61 = vld [vmem:[%s0 + $0x178] sm:$0xff]
  %v62 = vld [vmem:[%s0 + $0x180] sm:$0xff]
  %v63 = vld [vmem:[%s0 + $0x188] sm:$0xff]
  %v64 = vld [vmem:[%s0 + $0x190] sm:$0xff]
  %v65 = vld [vmem:[%s0 + $0x198] sm:$0xff]
  %v66 = vld [vmem:[%s0 + $0x1a0] sm:$0xff]
  %v67 = vld [vmem:[%s0 + $0x1a8] sm:$0xff]
  %v68 = vld [vmem:[%s0 + $0x1b0] sm:$0xff]
  %v69 = vld [vmem:[%s0 + $0x1b8] sm:$0xff]
  %v70 = vld [vmem:[%s0 + $0x1c0] sm:$0xff]
  %v71 = vld [vmem:[%s0 + $0x1c8] sm:$0xff]
  %v72 = vld [vmem:[%s0 + $0x1d0] sm:$0xff]
  %v73 = vld [vmem:[%s0 + $0x1d8] sm:$0xff]
  %v74 = vld [vmem:[%s0 + $0x1e0] sm:$0xff]
  %v75 = vld [vmem:[%s0 + $0x1e8] sm:$0xff]
  %v76 = vld [vmem:[%s0 + $0x1f0] sm:$0xff]
  %v77 = vld [vmem:[%s0 + $0x1f8] sm:$0xff]
  %v78 = vld [vmem:[%s1] sm:$0xff]
  %v79 = vld [vmem:[%s1 + $0x8] sm:$0xff]
  %v82 = vlaneseq
  %v83 = vshrl.u32 %v82, 7
  %v84 = vsub.s32 0, %v83
  %v85 = vrot.slane %v78, %v84
  %v86 = vlaneseq
  %v87 = vshrl.u32 %v86, 7
  %v88 = vsub.s32 1, %v87
  %v89 = vrot.slane %v78, %v88
  %v90 = vlaneseq
  %v91 = vshrl.u32 %v90, 7
  %v92 = vsub.s32 2, %v91
  %v93 = vrot.slane %v78, %v92
  %v94 = vlaneseq
  %v95 = vshrl.u32 %v94, 7
  %v96 = vsub.s32 3, %v95
  %v97 = vrot.slane %v78, %v96
  %v98 = vlaneseq
  %v99 = vshrl.u32 %v98, 7
  %v100 = vsub.s32 4, %v99
  %v101 = vrot.slane %v78, %v100
  %v102 = vlaneseq
  %v103 = vshrl.u32 %v102, 7
  %v104 = vsub.s32 5, %v103
  %v105 = vrot.slane %v78, %v104
  %v106 = vlaneseq
  %v107 = vshrl.u32 %v106, 7
  %v108 = vsub.s32 6, %v107
  %v109 = vrot.slane %v78, %v108
  %v110 = vlaneseq
  %v111 = vshrl.u32 %v110, 7
  %v112 = vsub.s32 7, %v111
  %v113 = vrot.slane %v78, %v112
  %v114 = vlaneseq
  %v115 = vshrl.u32 %v114, 7
  %v116 = vsub.s32 0, %v115
  %v117 = vrot.slane %v79, %v116
  %v118 = vlaneseq
  %v119 = vshrl.u32 %v118, 7
  %v120 = vsub.s32 1, %v119
  %v121 = vrot.slane %v79, %v120
  %v122 = vlaneseq
  %v123 = vshrl.u32 %v122, 7
  %v124 = vsub.s32 2, %v123
  %v125 = vrot.slane %v79, %v124
  %v126 = vlaneseq
  %v127 = vshrl.u32 %v126, 7
  %v128 = vsub.s32 3, %v127
  %v129 = vrot.slane %v79, %v128
  %v130 = vlaneseq
  %v131 = vshrl.u32 %v130, 7
  %v132 = vsub.s32 4, %v131
  %v133 = vrot.slane %v79, %v132
  %v134 = vlaneseq
  %v135 = vshrl.u32 %v134, 7
  %v136 = vsub.s32 5, %v135
  %v137 = vrot.slane %v79, %v136
  %v138 = vlaneseq
  %v139 = vshrl.u32 %v138, 7
  %v140 = vsub.s32 6, %v139
  %v141 = vrot.slane %v79, %v140
  %v142 = vlaneseq
  %v143 = vshrl.u32 %v142, 7
  %v144 = vsub.s32 7, %v143
  %v145 = vrot.slane %v79, %v144
  %v162 = vmul.f32 %v14, %v85
  %v163 = vmul.f32 %v15, %v89
  %v164 = vmul.f32 %v16, %v93
  %v165 = vmul.f32 %v17, %v97
  %v166 = vmul.f32 %v18, %v101
  %v167 = vmul.f32 %v19, %v105
  %v168 = vmul.f32 %v20, %v109
  %v169 = vmul.f32 %v21, %v113
  %v170 = vmul.f32 %v22, %v117
  %v171 = vmul.f32 %v23, %v121
  %v172 = vmul.f32 %v24, %v125
  %v173 = vmul.f32 %v25, %v129
  %v174 = vmul.f32 %v26, %v133
  %v175 = vmul.f32 %v27, %v137
  %v176 = vmul.f32 %v28, %v141
  %v177 = vmul.f32 %v29, %v145
  %v178 = vmul.f32 %v30, %v85
  %v179 = vmul.f32 %v31, %v89
  %v180 = vmul.f32 %v32, %v93
  %v181 = vmul.f32 %v33, %v97
  %v182 = vmul.f32 %v34, %v101
  %v183 = vmul.f32 %v35, %v105
  %v184 = vmul.f32 %v36, %v109
  %v185 = vmul.f32 %v37, %v113
  %v186 = vmul.f32 %v38, %v117
  %v187 = vmul.f32 %v39, %v121
  %v188 = vmul.f32 %v40, %v125
  %v189 = vmul.f32 %v41, %v129
  %v190 = vmul.f32 %v42, %v133
  %v191 = vmul.f32 %v43, %v137
  %v192 = vmul.f32 %v44, %v141
  %v193 = vmul.f32 %v45, %v145
  %v194 = vmul.f32 %v46, %v85
  %v195 = vmul.f32 %v47, %v89
  %v196 = vmul.f32 %v48, %v93
  %v197 = vmul.f32 %v49, %v97
  %v198 = vmul.f32 %v50, %v101
  %v199 = vmul.f32 %v51, %v105
  %v200 = vmul.f32 %v52, %v109
  %v201 = vmul.f32 %v53, %v113
  %v202 = vmul.f32 %v54, %v117
  %v203 = vmul.f32 %v55, %v121
  %v204 = vmul.f32 %v56, %v125
  %v205 = vmul.f32 %v57, %v129
  %v206 = vmul.f32 %v58, %v133
  %v207 = vmul.f32 %v59, %v137
  %v208 = vmul.f32 %v60, %v141
  %v209 = vmul.f32 %v61, %v145
  %v210 = vmul.f32 %v62, %v85
  %v211 = vmul.f32 %v63, %v89
  %v212 = vmul.f32 %v64, %v93
  %v213 = vmul.f32 %v65, %v97
  %v214 = vmul.f32 %v66, %v101
  %v215 = vmul.f32 %v67, %v105
  %v216 = vmul.f32 %v68, %v109
  %v217 = vmul.f32 %v69, %v113
  %v218 = vmul.f32 %v70, %v117
  %v219 = vmul.f32 %v71, %v121
  %v220 = vmul.f32 %v72, %v125
  %v221 = vmul.f32 %v73, %v129
  %v222 = vmul.f32 %v74, %v133
  %v223 = vmul.f32 %v75, %v137
  %v224 = vmul.f32 %v76, %v141
  %v225 = vmul.f32 %v77, %v145
  %v226 = vld [vmem:[%s2] sm:$0xff]
  %v227 = vld [vmem:[%s2 + $0x8] sm:$0xff]
  %v230 = vlaneseq
  %v231 = vshrl.u32 %v230, 7
  %v232 = vsub.s32 0, %v231
  %v233 = vrot.slane %v226, %v232
  %v234 = vlaneseq
  %v235 = vshrl.u32 %v234, 7
  %v236 = vsub.s32 1, %v235
  %v237 = vrot.slane %v226, %v236
  %v238 = vlaneseq
  %v239 = vshrl.u32 %v238, 7
  %v240 = vsub.s32 2, %v239
  %v241 = vrot.slane %v226, %v240
  %v242 = vlaneseq
  %v243 = vshrl.u32 %v242, 7
  %v244 = vsub.s32 3, %v243
  %v245 = vrot.slane %v226, %v244
  %v246 = vlaneseq
  %v247 = vshrl.u32 %v246, 7
  %v248 = vsub.s32 4, %v247
  %v249 = vrot.slane %v226, %v248
  %v250 = vlaneseq
  %v251 = vshrl.u32 %v250, 7
  %v252 = vsub.s32 5, %v251
  %v253 = vrot.slane %v226, %v252
  %v254 = vlaneseq
  %v255 = vshrl.u32 %v254, 7
  %v256 = vsub.s32 6, %v255
  %v257 = vrot.slane %v226, %v256
  %v258 = vlaneseq
  %v259 = vshrl.u32 %v258, 7
  %v260 = vsub.s32 7, %v259
  %v261 = vrot.slane %v226, %v260
  %v262 = vlaneseq
  %v263 = vshrl.u32 %v262, 7
  %v264 = vsub.s32 0, %v263
  %v265 = vrot.slane %v227, %v264
  %v266 = vlaneseq
  %v267 = vshrl.u32 %v266, 7
  %v268 = vsub.s32 1, %v267
  %v269 = vrot.slane %v227, %v268
  %v270 = vlaneseq
  %v271 = vshrl.u32 %v270, 7
  %v272 = vsub.s32 2, %v271
  %v273 = vrot.slane %v227, %v272
  %v274 = vlaneseq
  %v275 = vshrl.u32 %v274, 7
  %v276 = vsub.s32 3, %v275
  %v277 = vrot.slane %v227, %v276
  %v278 = vlaneseq
  %v279 = vshrl.u32 %v278, 7
  %v280 = vsub.s32 4, %v279
  %v281 = vrot.slane %v227, %v280
  %v282 = vlaneseq
  %v283 = vshrl.u32 %v282, 7
  %v284 = vsub.s32 5, %v283
  %v285 = vrot.slane %v227, %v284
  %v286 = vlaneseq
  %v287 = vshrl.u32 %v286, 7
  %v288 = vsub.s32 6, %v287
  %v289 = vrot.slane %v227, %v288
  %v290 = vlaneseq
  %v291 = vshrl.u32 %v290, 7
  %v292 = vsub.s32 7, %v291
  %v293 = vrot.slane %v227, %v292
  %v310 = vadd.f32 %v162, %v233
  %v311 = vadd.f32 %v163, %v237
  %v312 = vadd.f32 %v164, %v241
  %v313 = vadd.f32 %v165, %v245
  %v314 = vadd.f32 %v166, %v249
  %v315 = vadd.f32 %v167, %v253
  %v316 = vadd.f32 %v168, %v257
  %v317 = vadd.f32 %v169, %v261
  %v318 = vadd.f32 %v170, %v265
  %v319 = vadd.f32 %v171, %v269
  %v320 = vadd.f32 %v172, %v273
  %v321 = vadd.f32 %v173, %v277
  %v322 = vadd.f32 %v174, %v281
  %v323 = vadd.f32 %v175, %v285
  %v324 = vadd.f32 %v176, %v289
  %v325 = vadd.f32 %v177, %v293
  %v326 = vadd.f32 %v178, %v233
  %v327 = vadd.f32 %v179, %v237
  %v328 = vadd.f32 %v180, %v241
  %v329 = vadd.f32 %v181, %v245
  %v330 = vadd.f32 %v182, %v249
  %v331 = vadd.f32 %v183, %v253
  %v332 = vadd.f32 %v184, %v257
  %v333 = vadd.f32 %v185, %v261
  %v334 = vadd.f32 %v186, %v265
  %v335 = vadd.f32 %v187, %v269
  %v336 = vadd.f32 %v188, %v273
  %v337 = vadd.f32 %v189, %v277
  %v338 = vadd.f32 %v190, %v281
  %v339 = vadd.f32 %v191, %v285
  %v340 = vadd.f32 %v192, %v289
  %v341 = vadd.f32 %v193, %v293
  %v342 = vadd.f32 %v194, %v233
  %v343 = vadd.f32 %v195, %v237
  %v344 = vadd.f32 %v196, %v241
  %v345 = vadd.f32 %v197, %v245
  %v346 = vadd.f32 %v198, %v249
  %v347 = vadd.f32 %v199, %v253
  %v348 = vadd.f32 %v200, %v257
  %v349 = vadd.f32 %v201, %v261
  %v350 = vadd.f32 %v202, %v265
  %v351 = vadd.f32 %v203, %v269
  %v352 = vadd.f32 %v204, %v273
  %v353 = vadd.f32 %v205, %v277
  %v354 = vadd.f32 %v206, %v281
  %v355 = vadd.f32 %v207, %v285
  %v356 = vadd.f32 %v208, %v289
  %v357 = vadd.f32 %v209, %v293
  %v358 = vadd.f32 %v210, %v233
  %v359 = vadd.f32 %v211, %v237
  %v360 = vadd.f32 %v212, %v241
  %v361 = vadd.f32 %v213, %v245
  %v362 = vadd.f32 %v214, %v249
  %v363 = vadd.f32 %v215, %v253
  %v364 = vadd.f32 %v216, %v257
  %v365 = vadd.f32 %v217, %v261
  %v366 = vadd.f32 %v218, %v265
  %v367 = vadd.f32 %v219, %v269
  %v368 = vadd.f32 %v220, %v273
  %v369 = vadd.f32 %v221, %v277
  %v370 = vadd.f32 %v222, %v281
  %v371 = vadd.f32 %v223, %v285
  %v372 = vadd.f32 %v224, %v289
  %v373 = vadd.f32 %v225, %v293
  %v374 = vpack.c.bf16 %v326, %v310
  %v375 = vpack.c.bf16 %v327, %v311
  %v376 = vpack.c.bf16 %v328, %v312
  %v377 = vpack.c.bf16 %v329, %v313
  %v378 = vpack.c.bf16 %v330, %v314
  %v379 = vpack.c.bf16 %v331, %v315
  %v380 = vpack.c.bf16 %v332, %v316
  %v381 = vpack.c.bf16 %v333, %v317
  %v382 = vpack.c.bf16 %v334, %v318
  %v383 = vpack.c.bf16 %v335, %v319
  %v384 = vpack.c.bf16 %v336, %v320
  %v385 = vpack.c.bf16 %v337, %v321
  %v386 = vpack.c.bf16 %v338, %v322
  %v387 = vpack.c.bf16 %v339, %v323
  %v388 = vpack.c.bf16 %v340, %v324
  %v389 = vpack.c.bf16 %v341, %v325
  %v390 = vpack.c.bf16 %v358, %v342
  %v391 = vpack.c.bf16 %v359, %v343
  %v392 = vpack.c.bf16 %v360, %v344
  %v393 = vpack.c.bf16 %v361, %v345
  %v394 = vpack.c.bf16 %v362, %v346
  %v395 = vpack.c.bf16 %v363, %v347
  %v396 = vpack.c.bf16 %v364, %v348
  %v397 = vpack.c.bf16 %v365, %v349
  %v398 = vpack.c.bf16 %v366, %v350
  %v399 = vpack.c.bf16 %v367, %v351
  %v400 = vpack.c.bf16 %v368, %v352
  %v401 = vpack.c.bf16 %v369, %v353
  %v402 = vpack.c.bf16 %v370, %v354
  %v403 = vpack.c.bf16 %v371, %v355
  %v404 = vpack.c.bf16 %v372, %v356
  %v405 = vpack.c.bf16 %v373, %v357
  %v438 = vunpack.c.l.b16 %v374
  %v439 = vunpack.c.l.b16 %v375
  %v440 = vunpack.c.l.b16 %v376
  %v441 = vunpack.c.l.b16 %v377
  %v442 = vunpack.c.l.b16 %v378
  %v443 = vunpack.c.l.b16 %v379
  %v444 = vunpack.c.l.b16 %v380
  %v445 = vunpack.c.l.b16 %v381
  %v446 = vunpack.c.l.b16 %v382
  %v447 = vunpack.c.l.b16 %v383
  %v448 = vunpack.c.l.b16 %v384
  %v449 = vunpack.c.l.b16 %v385
  %v450 = vunpack.c.l.b16 %v386
  %v451 = vunpack.c.l.b16 %v387
  %v452 = vunpack.c.l.b16 %v388
  %v453 = vunpack.c.l.b16 %v389
  %v454 = vunpack.c.h.b16 %v374
  %v455 = vunpack.c.h.b16 %v375
  %v456 = vunpack.c.h.b16 %v376
  %v457 = vunpack.c.h.b16 %v377
  %v458 = vunpack.c.h.b16 %v378
  %v459 = vunpack.c.h.b16 %v379
  %v460 = vunpack.c.h.b16 %v380
  %v461 = vunpack.c.h.b16 %v381
  %v462 = vunpack.c.h.b16 %v382
  %v463 = vunpack.c.h.b16 %v383
  %v464 = vunpack.c.h.b16 %v384
  %v465 = vunpack.c.h.b16 %v385
  %v466 = vunpack.c.h.b16 %v386
  %v467 = vunpack.c.h.b16 %v387
  %v468 = vunpack.c.h.b16 %v388
  %v469 = vunpack.c.h.b16 %v389
  %v470 = vunpack.c.l.b16 %v390
  %v471 = vunpack.c.l.b16 %v391
  %v472 = vunpack.c.l.b16 %v392
  %v473 = vunpack.c.l.b16 %v393
  %v474 = vunpack.c.l.b16 %v394
  %v475 = vunpack.c.l.b16 %v395
  %v476 = vunpack.c.l.b16 %v396
  %v477 = vunpack.c.l.b16 %v397
  %v478 = vunpack.c.l.b16 %v398
  %v479 = vunpack.c.l.b16 %v399
  %v480 = vunpack.c.l.b16 %v400
  %v481 = vunpack.c.l.b16 %v401
  %v482 = vunpack.c.l.b16 %v402
  %v483 = vunpack.c.l.b16 %v403
  %v484 = vunpack.c.l.b16 %v404
  %v485 = vunpack.c.l.b16 %v405
  %v486 = vunpack.c.h.b16 %v390
  %v487 = vunpack.c.h.b16 %v391
  %v488 = vunpack.c.h.b16 %v392
  %v489 = vunpack.c.h.b16 %v393
  %v490 = vunpack.c.h.b16 %v394
  %v491 = vunpack.c.h.b16 %v395
  %v492 = vunpack.c.h.b16 %v396
  %v493 = vunpack.c.h.b16 %v397
  %v494 = vunpack.c.h.b16 %v398
  %v495 = vunpack.c.h.b16 %v399
  %v496 = vunpack.c.h.b16 %v400
  %v497 = vunpack.c.h.b16 %v401
  %v498 = vunpack.c.h.b16 %v402
  %v499 = vunpack.c.h.b16 %v403
  %v500 = vunpack.c.h.b16 %v404
  %v501 = vunpack.c.h.b16 %v405
  %v502 = vpack.c.b16 %v439, %v438
  %v503 = vpack.c.b16 %v441, %v440
  %v504 = vpack.c.b16 %v443, %v442
  %v505 = vpack.c.b16 %v445, %v444
  %v506 = vpack.c.b16 %v447, %v446
  %v507 = vpack.c.b16 %v449, %v448
  %v508 = vpack.c.b16 %v451, %v450
  %v509 = vpack.c.b16 %v453, %v452
  %v510 = vpack.c.b16 %v455, %v454
  %v511 = vpack.c.b16 %v457, %v456
  %v512 = vpack.c.b16 %v459, %v458
  %v513 = vpack.c.b16 %v461, %v460
  %v514 = vpack.c.b16 %v463, %v462
  %v515 = vpack.c.b16 %v465, %v464
  %v516 = vpack.c.b16 %v467, %v466
  %v517 = vpack.c.b16 %v469, %v468
  %v518 = vpack.c.b16 %v471, %v470
  %v519 = vpack.c.b16 %v473, %v472
  %v520 = vpack.c.b16 %v475, %v474
  %v521 = vpack.c.b16 %v477, %v476
  %v522 = vpack.c.b16 %v479, %v478
  %v523 = vpack.c.b16 %v481, %v480
  %v524 = vpack.c.b16 %v483, %v482
  %v525 = vpack.c.b16 %v485, %v484
  %v526 = vpack.c.b16 %v487, %v486
  %v527 = vpack.c.b16 %v489, %v488
  %v528 = vpack.c.b16 %v491, %v490
  %v529 = vpack.c.b16 %v493, %v492
  %v530 = vpack.c.b16 %v495, %v494
  %v531 = vpack.c.b16 %v497, %v496
  %v532 = vpack.c.b16 %v499, %v498
  %v533 = vpack.c.b16 %v501, %v500
  %566 = vst [vmem:[%s3] sm:$0xff] %v502
  %567 = vst [vmem:[%s3 + $0x8] sm:$0xff] %v503
  %568 = vst [vmem:[%s3 + $0x10] sm:$0xff] %v504
  %569 = vst [vmem:[%s3 + $0x18] sm:$0xff] %v505
  %570 = vst [vmem:[%s3 + $0x20] sm:$0xff] %v506
  %571 = vst [vmem:[%s3 + $0x28] sm:$0xff] %v507
  %572 = vst [vmem:[%s3 + $0x30] sm:$0xff] %v508
  %573 = vst [vmem:[%s3 + $0x38] sm:$0xff] %v509
  %574 = vst [vmem:[%s3 + $0x40] sm:$0xff] %v510
  %575 = vst [vmem:[%s3 + $0x48] sm:$0xff] %v511
  %576 = vst [vmem:[%s3 + $0x50] sm:$0xff] %v512
  %577 = vst [vmem:[%s3 + $0x58] sm:$0xff] %v513
  %578 = vst [vmem:[%s3 + $0x60] sm:$0xff] %v514
  %579 = vst [vmem:[%s3 + $0x68] sm:$0xff] %v515
  %580 = vst [vmem:[%s3 + $0x70] sm:$0xff] %v516
  %581 = vst [vmem:[%s3 + $0x78] sm:$0xff] %v517
  %582 = vst [vmem:[%s3 + $0x80] sm:$0xff] %v518
  %583 = vst [vmem:[%s3 + $0x88] sm:$0xff] %v519
  %584 = vst [vmem:[%s3 + $0x90] sm:$0xff] %v520
  %585 = vst [vmem:[%s3 + $0x98] sm:$0xff] %v521
  %586 = vst [vmem:[%s3 + $0xa0] sm:$0xff] %v522
  %587 = vst [vmem:[%s3 + $0xa8] sm:$0xff] %v523
  %588 = vst [vmem:[%s3 + $0xb0] sm:$0xff] %v524
  %589 = vst [vmem:[%s3 + $0xb8] sm:$0xff] %v525
  %590 = vst [vmem:[%s3 + $0xc0] sm:$0xff] %v526
  %591 = vst [vmem:[%s3 + $0xc8] sm:$0xff] %v527
  %592 = vst [vmem:[%s3 + $0xd0] sm:$0xff] %v528
  %593 = vst [vmem:[%s3 + $0xd8] sm:$0xff] %v529
  %594 = vst [vmem:[%s3 + $0xe0] sm:$0xff] %v530
  %595 = vst [vmem:[%s3 + $0xe8] sm:$0xff] %v531
  %596 = vst [vmem:[%s3 + $0xf0] sm:$0xff] %v532
  %597 = vst [vmem:[%s3 + $0xf8] sm:$0xff] %v533
  // Predicated region
  $region14: #{fcn_forward.3} parent=0 // pred_check
    _
  $region15: #{fcn_forward.3} parent=0 // pred_check_branch
    %599 = sbr.rel (0) target = $region17
  $region16: #{fcn_forward.3} parent=0 // pred_region
    _
  $region17: #{fcn_forward.3} parent=0 // pred_fallthru
    _
  // Predicated region
  $region18: #{fcn_forward.3} parent=0 // pred_check
    _
  $region19: #{fcn_forward.3} parent=0 // pred_check_branch
    %601 = sbr.rel (0) target = $region21
  $region20: #{fcn_forward.3} parent=0 // pred_region
    _
  $region21: #{fcn_forward.3} parent=0 // pred_fallthru
    _

// kernel: fcn_forward.2
$region0: #{fcn_forward.2}
  #allocation0 [shape = 'u32[]', space=smem, size = 0x4, offset = 0x4, fixed_abs, tag = 'smem constant byte address 0x4 - core index']
  #allocation1 [shape = 'u32[144,128]{1,0:T(1,128)}', space=vmem, size = 0x12000, scoped, tag = 'internal scratch']
  %s0 = inlined_call_operand.vmem [shape: bf16[32,2048], index: 0, kind: input, shape index: {}]
  %s1 = inlined_call_operand.vmem [shape: bf16[2048,2048], index: 1, kind: input, shape index: {}]
  %s2 = inlined_call_operand.vmem [shape: f32[32,2048], index: 2, kind: output, shape index: {0}]
  %s3 = inlined_call_operand.vmem [shape: f32[1,2048], index: 3, kind: output, shape index: {1}]
  %s4 = inlined_call_operand.vmem [shape: f32[1,2048], index: 4, kind: output, shape index: {2}]
  %5 = xla_tuple %s2, %s3, %s4
  %s6 = sld [smem:[#allocation0]]
  $region80: #{fcn_forward.2} parent=0
    _
  %s8 = ssub.s32 1, %s6
  %s9 = scalar_select 0, %s8, %s6
  $region1: #{fcn_forward.2} parent=0
    #allocation2 [shape = 'u8[131072]{0}', space=vmem, size = 0x20000, scoped, tag = 'output window, operand 0']
    loop: start=0, step=1, limit=6
    $region2: #{fcn_forward.2} parent=1 // loop_pre_header
      _
    $region3: #{fcn_forward.2} parent=1 // loop_header
      %s11 = sphi 0, %s15
      %p12 = scmp.ge.s32.totalorder %s11, 6
      %s18 = sphi 0, %s30
      %s19 = sphi 0, %s26
      %s20 = sphi 0, %s18
      %s21 = sphi 0, %s19
      %s22 = sphi 0, %s20
      %s23 = sphi 0, %s21
      %s33 = sphi 0, %s35
      %s36 = sphi 0, %s33
      %s37 = sphi 0, %s36
      %s53 = sphi 0, %s37
      %s59 = sphi 0, %s61
      %s62 = sphi 0, %s59
      %s63 = sphi 0, %s62
      %s79 = sphi 0, %s63
      %s87 = sphi 0, %s89
      %s90 = sphi 0, %s87
      %s91 = sphi 0, %s90
      %s107 = sphi 0, %s91
      %s113 = sphi 0, %s115
      %s116 = sphi 0, %s113
      %s117 = sphi 0, %s116
      %s133 = sphi 0, %s117
      %s139 = sphi 0, %s141
      %s142 = sphi 0, %s139
      %s143 = sphi 0, %s142
      %s159 = sphi 0, %s143
    $region4: #{fcn_forward.2} parent=1 // loop_header_branch
      %14 = sbr.rel (%p12) target = $region8
    $region5: #{fcn_forward.2} parent=1 // loop_body
      %s16 = ssub.s32 %s11, 1
      %s17 = ssub.s32 %s11, 2
      %s24 = sadd.s32 1, %s19
      %p25 = scmp.ge.s32.totalorder %s24, 1
      %s26 = scalar_select %p25, 0, %s24
      %s27 = sadd.s32 1, %s18
      %s28 = scalar_select %p25, %s27, %s18
      %p29 = scmp.ge.s32.totalorder %s28, 4
      %s30 = scalar_select %p29, 0, %s28
      %s31 = ssub.s32 %s19, %s26
      %p32 = scmp.eq.s32.totalorder %s31, 0
      %s34 = sadd.s32 %s33, 1
      %s35 = scalar_select %p32, %s33, %s34
      %p38 = pneg %p32
      %p39 = scmp.eq.s32.totalorder %s11, 3
      %p40 = por %p38, %p39
      %p41 = scmp.ne.s32.totalorder %s33, %s36
      %p42 = scmp.eq.s32.totalorder %s11, 0
      %p43 = por %p41, %p42
      %p44 = scmp.ne.s32.totalorder %s33, %s36
      %p45 = scmp.eq.s32.totalorder %s16, 3
      %p46 = por %p44, %p45
      %p47 = scmp.ne.s32.totalorder %s36, %s37
      %p48 = scmp.eq.s32.totalorder %s16, 0
      %p49 = por %p47, %p48
      %p50 = scmp.ne.s32.totalorder %s36, %s37
      %p51 = scmp.eq.s32.totalorder %s17, 3
      %p52 = por %p50, %p51
      %p54 = scmp.ne.s32.totalorder %s37, %s53
      %p55 = scmp.eq.s32.totalorder %s17, 0
      %p56 = por %p54, %p55
      %s57 = ssub.s32 %s18, %s30
      %p58 = scmp.eq.s32.totalorder %s57, 0
      %s60 = sadd.s32 %s59, 1
      %s61 = scalar_select %p58, %s59, %s60
      %p64 = pneg %p58
      %p65 = scmp.eq.s32.totalorder %s11, 3
      %p66 = por %p64, %p65
      %p67 = scmp.ne.s32.totalorder %s59, %s62
      %p68 = scmp.eq.s32.totalorder %s11, 0
      %p69 = por %p67, %p68
      %p70 = scmp.ne.s32.totalorder %s59, %s62
      %p71 = scmp.eq.s32.totalorder %s16, 3
      %p72 = por %p70, %p71
      %p73 = scmp.ne.s32.totalorder %s62, %s63
      %p74 = scmp.eq.s32.totalorder %s16, 0
      %p75 = por %p73, %p74
      %p76 = scmp.ne.s32.totalorder %s62, %s63
      %p77 = scmp.eq.s32.totalorder %s17, 3
      %p78 = por %p76, %p77
      %p80 = scmp.ne.s32.totalorder %s63, %s79
      %p81 = scmp.eq.s32.totalorder %s17, 0
      %p82 = por %p80, %p81
      %s83 = ssub.s32 %s19, %s26
      %s84 = ssub.s32 %s18, %s30
      %s85 = sor.u32 %s83, %s84
      %p86 = scmp.eq.s32.totalorder %s85, 0
      %s88 = sadd.s32 %s87, 1
      %s89 = scalar_select %p86, %s87, %s88
      %p92 = pneg %p86
      %p93 = scmp.eq.s32.totalorder %s11, 3
      %p94 = por %p92, %p93
      %p95 = scmp.ne.s32.totalorder %s87, %s90
      %p96 = scmp.eq.s32.totalorder %s11, 0
      %p97 = por %p95, %p96
      %p98 = scmp.ne.s32.totalorder %s87, %s90
      %p99 = scmp.eq.s32.totalorder %s16, 3
      %p100 = por %p98, %p99
      %p101 = scmp.ne.s32.totalorder %s90, %s91
      %p102 = scmp.eq.s32.totalorder %s16, 0
      %p103 = por %p101, %p102
      %p104 = scmp.ne.s32.totalorder %s90, %s91
      %p105 = scmp.eq.s32.totalorder %s17, 3
      %p106 = por %p104, %p105
      %p108 = scmp.ne.s32.totalorder %s91, %s107
      %p109 = scmp.eq.s32.totalorder %s17, 0
      %p110 = por %p108, %p109
      %s111 = ssub.s32 %s18, %s30
      %p112 = scmp.eq.s32.totalorder %s111, 0
      %s114 = sadd.s32 %s113, 1
      %s115 = scalar_select %p112, %s113, %s114
      %p118 = pneg %p112
      %p119 = scmp.eq.s32.totalorder %s11, 3
      %p120 = por %p118, %p119
      %p121 = scmp.ne.s32.totalorder %s113, %s116
      %p122 = scmp.eq.s32.totalorder %s11, 0
      %p123 = por %p121, %p122
      %p124 = scmp.ne.s32.totalorder %s113, %s116
      %p125 = scmp.eq.s32.totalorder %s16, 3
      %p126 = por %p124, %p125
      %p127 = scmp.ne.s32.totalorder %s116, %s117
      %p128 = scmp.eq.s32.totalorder %s16, 0
      %p129 = por %p127, %p128
      %p130 = scmp.ne.s32.totalorder %s116, %s117
      %p131 = scmp.eq.s32.totalorder %s17, 3
      %p132 = por %p130, %p131
      %p134 = scmp.ne.s32.totalorder %s117, %s133
      %p135 = scmp.eq.s32.totalorder %s17, 0
      %p136 = por %p134, %p135
      %s137 = ssub.s32 %s18, %s30
      %p138 = scmp.eq.s32.totalorder %s137, 0
      %s140 = sadd.s32 %s139, 1
      %s141 = scalar_select %p138, %s139, %s140
      %p144 = pneg %p138
      %p145 = scmp.eq.s32.totalorder %s11, 3
      %p146 = por %p144, %p145
      %p147 = scmp.ne.s32.totalorder %s139, %s142
      %p148 = scmp.eq.s32.totalorder %s11, 0
      %p149 = por %p147, %p148
      %p150 = scmp.ne.s32.totalorder %s139, %s142
      %p151 = scmp.eq.s32.totalorder %s16, 3
      %p152 = por %p150, %p151
      %p153 = scmp.ne.s32.totalorder %s142, %s143
      %p154 = scmp.eq.s32.totalorder %s16, 0
      %p155 = por %p153, %p154
      %p156 = scmp.ne.s32.totalorder %s142, %s143
      %p157 = scmp.eq.s32.totalorder %s17, 3
      %p158 = por %p156, %p157
      %p160 = scmp.ne.s32.totalorder %s143, %s159
      %p161 = scmp.eq.s32.totalorder %s17, 0
      %p162 = por %p160, %p161
      %p163 = scmp.le.s32.totalorder 1, %s11
      %p164 = scmp.lt.s32.totalorder %s11, 5
      %p165 = pnand %p163, %p164
      %p166 = pneg %p165
      // Predicated region
      $region9: #{fcn_forward.2} parent=5 // pred_check
        _
      $region10: #{fcn_forward.2} parent=5 // pred_check_branch
        %168 = sbr.rel (%p165) target = $region12
      $region11: #{fcn_forward.2} parent=5 // pred_region
        %s169 = ssub.s32 %s11, 1
        // Predicated region
        $region13: #{fcn_forward.2} parent=11 // pred_check
          %p170 = pneg %p49
        $region14: #{fcn_forward.2} parent=11 // pred_check_branch
          %172 = sbr.rel (%p170) target = $region16
        $region15: #{fcn_forward.2} parent=11 // pred_region
          %s173 = smul.u32 4, %s21
          %p174 = scmp.lt.s32.totalorder %s173, 3
          %s175 = scalar_select %p174, %s173, 3
          %s176 = smul.addr %s175, 16
          %s177 = smul.addr %s176, 4
          %s178 = scalar_lea.vmem %s0, %s177
          %s179 = smul.u32 4, %s21
        $region16: #{fcn_forward.2} parent=11 // pred_fallthru
          _
      $region12: #{fcn_forward.2} parent=5 // pred_fallthru
        _
      %p180 = scmp.lt.s32.totalorder %s11, 4
      // Predicated region
      $region17: #{fcn_forward.2} parent=5 // pred_check
        %p181 = pneg %p180
      $region18: #{fcn_forward.2} parent=5 // pred_check_branch
        %183 = sbr.rel (%p181) target = $region20
      $region19: #{fcn_forward.2} parent=5 // pred_region
        // Predicated region
        $region21: #{fcn_forward.2} parent=19 // pred_check
          %p184 = pneg %p69
        $region22: #{fcn_forward.2} parent=19 // pred_check_branch
          %186 = sbr.rel (%p184) target = $region24
        $region23: #{fcn_forward.2} parent=19 // pred_region
          %s187 = smul.u32 64, %s18
          %p188 = scmp.lt.s32.totalorder %s187, 255
          %s189 = scalar_select %p188, %s187, 255
          %s190 = smul.addr %s189, 16
          %s191 = smul.addr %s190, 4
          %s192 = scalar_lea.vmem %s1, %s191
          %s193 = smul.u32 64, %s18
        $region24: #{fcn_forward.2} parent=19 // pred_fallthru
          _
      $region20: #{fcn_forward.2} parent=5 // pred_fallthru
        _
      %p194 = scmp.le.s32.totalorder 1, %s11
      %p195 = scmp.lt.s32.totalorder %s11, 5
      %p196 = pnand %p194, %p195
      %p197 = pneg %p196
      // Predicated region
      $region25: #{fcn_forward.2} parent=5 // pred_check
        _
      $region26: #{fcn_forward.2} parent=5 // pred_check_branch
        %199 = sbr.rel (%p196) target = $region28
      $region27: #{fcn_forward.2} parent=5 // pred_region
        %s200 = ssub.s32 %s11, 1
        %s201 = smul.u32 4, %s21
        %p202 = scmp.lt.s32.totalorder %s201, 3
        %s203 = scalar_select %p202, %s201, 3
        %s204 = smul.addr %s203, 16
        %s205 = smul.addr %s204, 4
        %s206 = scalar_lea.vmem %s0, %s205
        %p207 = pneg %p49
        %p208 = pneg %p46
        %s209 = smul.u32 64, %s20
        %p210 = scmp.lt.s32.totalorder %s209, 255
        %s211 = scalar_select %p210, %s209, 255
        %s212 = smul.addr %s211, 16
        %s213 = smul.addr %s212, 4
        %s214 = scalar_lea.vmem %s1, %s213
        %p215 = pneg %p75
        %p216 = pneg %p72
        %p217 = pneg %p103
        %p218 = pneg %p100
        %s219 = sand.u32 %s90, 1
        %s220 = sand.u32 %s90, 1
        %s221 = smul.addr %s220, 128
        %s222 = scalar_lea.vmem [#allocation2], %s221
        %p223 = pneg %p129
        %p224 = pneg %p126
        %s225 = smul.u32 4, %s20
        %p226 = scmp.lt.s32.totalorder %s225, 15
        %s227 = scalar_select %p226, %s225, 15
        %s228 = scalar_lea.vmem %s3, %s227
        %p229 = pneg %p155
        %p230 = pneg %p152
        %s231 = smul.u32 4, %s20
        %p232 = scmp.lt.s32.totalorder %s231, 15
        %s233 = scalar_select %p232, %s231, 15
        %s234 = scalar_lea.vmem %s4, %s233
        %s235 = smul.u32 4, %s21
        %p236 = scmp.lt.s32.totalorder %s235, 3
        %s237 = scalar_select %p236, %s235, 3
        %s238 = smul.addr %s237, 16
        %s239 = smul.addr %s238, 4
        %s240 = scalar_lea.vmem %s0, %s239
        %s241 = smul.u32 4, %s21
        %s242 = smul.u32 64, %s20
        %p243 = scmp.lt.s32.totalorder %s242, 255
        %s244 = scalar_select %p243, %s242, 255
        %s245 = smul.addr %s244, 16
        %s246 = smul.addr %s245, 4
        %s247 = scalar_lea.vmem %s1, %s246
        %s248 = smul.u32 64, %s20
        %s249 = smul.u32 4, %s21
        %s250 = smul.u32 4, %s20
        %s251 = smul.u32 4, %s20
        %p252 = scmp.lt.s32.totalorder %s251, 15
        %s253 = scalar_select %p252, %s251, 15
        %s254 = scalar_lea.vmem %s3, %s253
        %s255 = smul.u32 4, %s20
        %s256 = smul.u32 4, %s20
        %p257 = scmp.lt.s32.totalorder %s256, 15
        %s258 = scalar_select %p257, %s256, 15
        %s259 = scalar_lea.vmem %s4, %s258
        %s260 = smul.u32 4, %s20
        %p261 = scmp.eq.s32.totalorder %s21, 0
        // Predicated region
        $region29: #{fcn_forward.2} parent=27 // pred_check
          %p262 = pneg %p261
        $region30: #{fcn_forward.2} parent=27 // pred_check_branch
          %264 = sbr.rel (%p262) target = $region32
        $region31: #{fcn_forward.2} parent=27 // pred_region
          %v265 = vlaneseq
          %vm266 = vcmp.ge.s32.totalorder %v265, 0
          %vm267 = vcmp.lt.s32.totalorder %v265, 512
          %vm268 = vmand %vm266, %vm267
          %269 = vst.msk [vmem:[%s254] sm:$0xf] %vm268, 0.0
          %270 = vst.msk [vmem:[%s259] sm:$0xf] %vm268, 0.0
        $region32: #{fcn_forward.2} parent=27 // pred_fallthru
          _
        %v271 = vld [vmem:[%s240] sm:$0xff]
        %v272 = vld [vmem:[%s240 + $0x8] sm:$0xff]
        %v273 = vld [vmem:[%s240 + $0x10] sm:$0xff]
        %v274 = vld [vmem:[%s240 + $0x18] sm:$0xff]
        %v275 = vld [vmem:[%s240 + $0x20] sm:$0xff]
        %v276 = vld [vmem:[%s240 + $0x28] sm:$0xff]
        %v277 = vld [vmem:[%s240 + $0x30] sm:$0xff]
        %v278 = vld [vmem:[%s240 + $0x38] sm:$0xff]
        %v279 = vld [vmem:[%s240 + $0x40] sm:$0xff]
        %v280 = vld [vmem:[%s240 + $0x48] sm:$0xff]
        %v281 = vld [vmem:[%s240 + $0x50] sm:$0xff]
        %v282 = vld [vmem:[%s240 + $0x58] sm:$0xff]
        %v283 = vld [vmem:[%s240 + $0x60] sm:$0xff]
        %v284 = vld [vmem:[%s240 + $0x68] sm:$0xff]
        %v285 = vld [vmem:[%s240 + $0x70] sm:$0xff]
        %v286 = vld [vmem:[%s240 + $0x78] sm:$0xff]
        %v287 = vld [vmem:[%s240 + $0x80] sm:$0xff]
        %v288 = vld [vmem:[%s240 + $0x88] sm:$0xff]
        %v289 = vld [vmem:[%s240 + $0x90] sm:$0xff]
        %v290 = vld [vmem:[%s240 + $0x98] sm:$0xff]
        %v291 = vld [vmem:[%s240 + $0xa0] sm:$0xff]
        %v292 = vld [vmem:[%s240 + $0xa8] sm:$0xff]
        %v293 = vld [vmem:[%s240 + $0xb0] sm:$0xff]
        %v294 = vld [vmem:[%s240 + $0xb8] sm:$0xff]
        %v295 = vld [vmem:[%s240 + $0xc0] sm:$0xff]
        %v296 = vld [vmem:[%s240 + $0xc8] sm:$0xff]
        %v297 = vld [vmem:[%s240 + $0xd0] sm:$0xff]
        %v298 = vld [vmem:[%s240 + $0xd8] sm:$0xff]
        %v299 = vld [vmem:[%s240 + $0xe0] sm:$0xff]
        %v300 = vld [vmem:[%s240 + $0xe8] sm:$0xff]
        %v301 = vld [vmem:[%s240 + $0xf0] sm:$0xff]
        %v302 = vld [vmem:[%s240 + $0xf8] sm:$0xff]
        %v303 = vld [vmem:[%s247] sm:$0xff]
        %v304 = vld [vmem:[%s247 + $0x8] sm:$0xff]
        %v305 = vld [vmem:[%s247 + $0x10] sm:$0xff]
        %v306 = vld [vmem:[%s247 + $0x18] sm:$0xff]
        %v307 = vld [vmem:[%s247 + $0x20] sm:$0xff]
        %v308 = vld [vmem:[%s247 + $0x28] sm:$0xff]
        %v309 = vld [vmem:[%s247 + $0x30] sm:$0xff]
        %v310 = vld [vmem:[%s247 + $0x38] sm:$0xff]
        %v311 = vld [vmem:[%s247 + $0x40] sm:$0xff]
        %v312 = vld [vmem:[%s247 + $0x48] sm:$0xff]
        %v313 = vld [vmem:[%s247 + $0x50] sm:$0xff]
        %v314 = vld [vmem:[%s247 + $0x58] sm:$0xff]
        %v315 = vld [vmem:[%s247 + $0x60] sm:$0xff]
        %v316 = vld [vmem:[%s247 + $0x68] sm:$0xff]
        %v317 = vld [vmem:[%s247 + $0x70] sm:$0xff]
        %v318 = vld [vmem:[%s247 + $0x78] sm:$0xff]
        %v319 = vld [vmem:[%s247 + $0x80] sm:$0xff]
        %v320 = vld [vmem:[%s247 + $0x88] sm:$0xff]
        %v321 = vld [vmem:[%s247 + $0x90] sm:$0xff]
        %v322 = vld [vmem:[%s247 + $0x98] sm:$0xff]
        %v323 = vld [vmem:[%s247 + $0xa0] sm:$0xff]
        %v324 = vld [vmem:[%s247 + $0xa8] sm:$0xff]
        %v325 = vld [vmem:[%s247 + $0xb0] sm:$0xff]
        %v326 = vld [vmem:[%s247 + $0xb8] sm:$0xff]
        %v327 = vld [vmem:[%s247 + $0xc0] sm:$0xff]
        %v328 = vld [vmem:[%s247 + $0xc8] sm:$0xff]
        %v329 = vld [vmem:[%s247 + $0xd0] sm:$0xff]
        %v330 = vld [vmem:[%s247 + $0xd8] sm:$0xff]
        %v331 = vld [vmem:[%s247 + $0xe0] sm:$0xff]
        %v332 = vld [vmem:[%s247 + $0xe8] sm:$0xff]
        %v333 = vld [vmem:[%s247 + $0xf0] sm:$0xff]
        %v334 = vld [vmem:[%s247 + $0xf8] sm:$0xff]
        %v335 = vld [vmem:[%s247 + $0x100] sm:$0xff]
        %v336 = vld [vmem:[%s247 + $0x108] sm:$0xff]
        %v337 = vld [vmem:[%s247 + $0x110] sm:$0xff]
        %v338 = vld [vmem:[%s247 + $0x118] sm:$0xff]
        %v339 = vld [vmem:[%s247 + $0x120] sm:$0xff]
        %v340 = vld [vmem:[%s247 + $0x128] sm:$0xff]
        %v341 = vld [vmem:[%s247 + $0x130] sm:$0xff]
        %v342 = vld [vmem:[%s247 + $0x138] sm:$0xff]
        %v343 = vld [vmem:[%s247 + $0x140] sm:$0xff]
        %v344 = vld [vmem:[%s247 + $0x148] sm:$0xff]
        %v345 = vld [vmem:[%s247 + $0x150] sm:$0xff]
        %v346 = vld [vmem:[%s247 + $0x158] sm:$0xff]
        %v347 = vld [vmem:[%s247 + $0x160] sm:$0xff]
        %v348 = vld [vmem:[%s247 + $0x168] sm:$0xff]
        %v349 = vld [vmem:[%s247 + $0x170] sm:$0xff]
        %v350 = vld [vmem:[%s247 + $0x178] sm:$0xff]
        %v351 = vld [vmem:[%s247 + $0x180] sm:$0xff]
        %v352 = vld [vmem:[%s247 + $0x188] sm:$0xff]
        %v353 = vld [vmem:[%s247 + $0x190] sm:$0xff]
        %v354 = vld [vmem:[%s247 + $0x198] sm:$0xff]
        %v355 = vld [vmem:[%s247 + $0x1a0] sm:$0xff]
        %v356 = vld [vmem:[%s247 + $0x1a8] sm:$0xff]
        %v357 = vld [vmem:[%s247 + $0x1b0] sm:$0xff]
        %v358 = vld [vmem:[%s247 + $0x1b8] sm:$0xff]
        %v359 = vld [vmem:[%s247 + $0x1c0] sm:$0xff]
        %v360 = vld [vmem:[%s247 + $0x1c8] sm:$0xff]
        %v361 = vld [vmem:[%s247 + $0x1d0] sm:$0xff]
        %v362 = vld [vmem:[%s247 + $0x1d8] sm:$0xff]
        %v363 = vld [vmem:[%s247 + $0x1e0] sm:$0xff]
        %v364 = vld [vmem:[%s247 + $0x1e8] sm:$0xff]
        %v365 = vld [vmem:[%s247 + $0x1f0] sm:$0xff]
        %v366 = vld [vmem:[%s247 + $0x1f8] sm:$0xff]
        %v367 = vld [vmem:[%s247 + $0x200] sm:$0xff]
        %v368 = vld [vmem:[%s247 + $0x208] sm:$0xff]
        %v369 = vld [vmem:[%s247 + $0x210] sm:$0xff]
        %v370 = vld [vmem:[%s247 + $0x218] sm:$0xff]
        %v371 = vld [vmem:[%s247 + $0x220] sm:$0xff]
        %v372 = vld [vmem:[%s247 + $0x228] sm:$0xff]
        %v373 = vld [vmem:[%s247 + $0x230] sm:$0xff]
        %v374 = vld [vmem:[%s247 + $0x238] sm:$0xff]
        %v375 = vld [vmem:[%s247 + $0x240] sm:$0xff]
        %v376 = vld [vmem:[%s247 + $0x248] sm:$0xff]
        %v377 = vld [vmem:[%s247 + $0x250] sm:$0xff]
        %v378 = vld [vmem:[%s247 + $0x258] sm:$0xff]
        %v379 = vld [vmem:[%s247 + $0x260] sm:$0xff]
        %v380 = vld [vmem:[%s247 + $0x268] sm:$0xff]
        %v381 = vld [vmem:[%s247 + $0x270] sm:$0xff]
        %v382 = vld [vmem:[%s247 + $0x278] sm:$0xff]
        %v383 = vld [vmem:[%s247 + $0x280] sm:$0xff]
        %v384 = vld [vmem:[%s247 + $0x288] sm:$0xff]
        %v385 = vld [vmem:[%s247 + $0x290] sm:$0xff]
        %v386 = vld [vmem:[%s247 + $0x298] sm:$0xff]
        %v387 = vld [vmem:[%s247 + $0x2a0] sm:$0xff]
        %v388 = vld [vmem:[%s247 + $0x2a8] sm:$0xff]
        %v389 = vld [vmem:[%s247 + $0x2b0] sm:$0xff]
        %v390 = vld [vmem:[%s247 + $0x2b8] sm:$0xff]
        %v391 = vld [vmem:[%s247 + $0x2c0] sm:$0xff]
        %v392 = vld [vmem:[%s247 + $0x2c8] sm:$0xff]
        %v393 = vld [vmem:[%s247 + $0x2d0] sm:$0xff]
        %v394 = vld [vmem:[%s247 + $0x2d8] sm:$0xff]
        %v395 = vld [vmem:[%s247 + $0x2e0] sm:$0xff]
        %v396 = vld [vmem:[%s247 + $0x2e8] sm:$0xff]
        %v397 = vld [vmem:[%s247 + $0x2f0] sm:$0xff]
        %v398 = vld [vmem:[%s247 + $0x2f8] sm:$0xff]
        %v399 = vld [vmem:[%s247 + $0x300] sm:$0xff]
        %v400 = vld [vmem:[%s247 + $0x308] sm:$0xff]
        %v401 = vld [vmem:[%s247 + $0x310] sm:$0xff]
        %v402 = vld [vmem:[%s247 + $0x318] sm:$0xff]
        %v403 = vld [vmem:[%s247 + $0x320] sm:$0xff]
        %v404 = vld [vmem:[%s247 + $0x328] sm:$0xff]
        %v405 = vld [vmem:[%s247 + $0x330] sm:$0xff]
        %v406 = vld [vmem:[%s247 + $0x338] sm:$0xff]
        %v407 = vld [vmem:[%s247 + $0x340] sm:$0xff]
        %v408 = vld [vmem:[%s247 + $0x348] sm:$0xff]
        %v409 = vld [vmem:[%s247 + $0x350] sm:$0xff]
        %v410 = vld [vmem:[%s247 + $0x358] sm:$0xff]
        %v411 = vld [vmem:[%s247 + $0x360] sm:$0xff]
        %v412 = vld [vmem:[%s247 + $0x368] sm:$0xff]
        %v413 = vld [vmem:[%s247 + $0x370] sm:$0xff]
        %v414 = vld [vmem:[%s247 + $0x378] sm:$0xff]
        %v415 = vld [vmem:[%s247 + $0x380] sm:$0xff]
        %v416 = vld [vmem:[%s247 + $0x388] sm:$0xff]
        %v417 = vld [vmem:[%s247 + $0x390] sm:$0xff]
        %v418 = vld [vmem:[%s247 + $0x398] sm:$0xff]
        %v419 = vld [vmem:[%s247 + $0x3a0] sm:$0xff]
        %v420 = vld [vmem:[%s247 + $0x3a8] sm:$0xff]
        %v421 = vld [vmem:[%s247 + $0x3b0] sm:$0xff]
        %v422 = vld [vmem:[%s247 + $0x3b8] sm:$0xff]
        %v423 = vld [vmem:[%s247 + $0x3c0] sm:$0xff]
        %v424 = vld [vmem:[%s247 + $0x3c8] sm:$0xff]
        %v425 = vld [vmem:[%s247 + $0x3d0] sm:$0xff]
        %v426 = vld [vmem:[%s247 + $0x3d8] sm:$0xff]
        %v427 = vld [vmem:[%s247 + $0x3e0] sm:$0xff]
        %v428 = vld [vmem:[%s247 + $0x3e8] sm:$0xff]
        %v429 = vld [vmem:[%s247 + $0x3f0] sm:$0xff]
        %v430 = vld [vmem:[%s247 + $0x3f8] sm:$0xff]
        %v431 = vld [vmem:[%s247 + $0x400] sm:$0xff]
        %v432 = vld [vmem:[%s247 + $0x408] sm:$0xff]
        %v433 = vld [vmem:[%s247 + $0x410] sm:$0xff]
        %v434 = vld [vmem:[%s247 + $0x418] sm:$0xff]
        %v435 = vld [vmem:[%s247 + $0x420] sm:$0xff]
        %v436 = vld [vmem:[%s247 + $0x428] sm:$0xff]
        %v437 = vld [vmem:[%s247 + $0x430] sm:$0xff]
        %v438 = vld [vmem:[%s247 + $0x438] sm:$0xff]
        %v439 = vld [vmem:[%s247 + $0x440] sm:$0xff]
        %v440 = vld [vmem:[%s247 + $0x448] sm:$0xff]
        %v441 = vld [vmem:[%s247 + $0x450] sm:$0xff]
        %v442 = vld [vmem:[%s247 + $0x458] sm:$0xff]
        %v443 = vld [vmem:[%s247 + $0x460] sm:$0xff]
        %v444 = vld [vmem:[%s247 + $0x468] sm:$0xff]
        %v445 = vld [vmem:[%s247 + $0x470] sm:$0xff]
        %v446 = vld [vmem:[%s247 + $0x478] sm:$0xff]
        %v447 = vld [vmem:[%s247 + $0x480] sm:$0xff]
        %v448 = vld [vmem:[%s247 + $0x488] sm:$0xff]
        %v449 = vld [vmem:[%s247 + $0x490] sm:$0xff]
        %v450 = vld [vmem:[%s247 + $0x498] sm:$0xff]
        %v451 = vld [vmem:[%s247 + $0x4a0] sm:$0xff]
        %v452 = vld [vmem:[%s247 + $0x4a8] sm:$0xff]
        %v453 = vld [vmem:[%s247 + $0x4b0] sm:$0xff]
        %v454 = vld [vmem:[%s247 + $0x4b8] sm:$0xff]
        %v455 = vld [vmem:[%s247 + $0x4c0] sm:$0xff]
        %v456 = vld [vmem:[%s247 + $0x4c8] sm:$0xff]
        %v457 = vld [vmem:[%s247 + $0x4d0] sm:$0xff]
        %v458 = vld [vmem:[%s247 + $0x4d8] sm:$0xff]
        %v459 = vld [vmem:[%s247 + $0x4e0] sm:$0xff]
        %v460 = vld [vmem:[%s247 + $0x4e8] sm:$0xff]
        %v461 = vld [vmem:[%s247 + $0x4f0] sm:$0xff]
        %v462 = vld [vmem:[%s247 + $0x4f8] sm:$0xff]
        %v463 = vld [vmem:[%s247 + $0x500] sm:$0xff]
        %v464 = vld [vmem:[%s247 + $0x508] sm:$0xff]
        %v465 = vld [vmem:[%s247 + $0x510] sm:$0xff]
        %v466 = vld [vmem:[%s247 + $0x518] sm:$0xff]
        %v467 = vld [vmem:[%s247 + $0x520] sm:$0xff]
        %v468 = vld [vmem:[%s247 + $0x528] sm:$0xff]
        %v469 = vld [vmem:[%s247 + $0x530] sm:$0xff]
        %v470 = vld [vmem:[%s247 + $0x538] sm:$0xff]
        %v471 = vld [vmem:[%s247 + $0x540] sm:$0xff]
        %v472 = vld [vmem:[%s247 + $0x548] sm:$0xff]
        %v473 = vld [vmem:[%s247 + $0x550] sm:$0xff]
        %v474 = vld [vmem:[%s247 + $0x558] sm:$0xff]
        %v475 = vld [vmem:[%s247 + $0x560] sm:$0xff]
        %v476 = vld [vmem:[%s247 + $0x568] sm:$0xff]
        %v477 = vld [vmem:[%s247 + $0x570] sm:$0xff]
        %v478 = vld [vmem:[%s247 + $0x578] sm:$0xff]
        %v479 = vld [vmem:[%s247 + $0x580] sm:$0xff]
        %v480 = vld [vmem:[%s247 + $0x588] sm:$0xff]
        %v481 = vld [vmem:[%s247 + $0x590] sm:$0xff]
        %v482 = vld [vmem:[%s247 + $0x598] sm:$0xff]
        %v483 = vld [vmem:[%s247 + $0x5a0] sm:$0xff]
        %v484 = vld [vmem:[%s247 + $0x5a8] sm:$0xff]
        %v485 = vld [vmem:[%s247 + $0x5b0] sm:$0xff]
        %v486 = vld [vmem:[%s247 + $0x5b8] sm:$0xff]
        %v487 = vld [vmem:[%s247 + $0x5c0] sm:$0xff]
        %v488 = vld [vmem:[%s247 + $0x5c8] sm:$0xff]
        %v489 = vld [vmem:[%s247 + $0x5d0] sm:$0xff]
        %v490 = vld [vmem:[%s247 + $0x5d8] sm:$0xff]
        %v491 = vld [vmem:[%s247 + $0x5e0] sm:$0xff]
        %v492 = vld [vmem:[%s247 + $0x5e8] sm:$0xff]
        %v493 = vld [vmem:[%s247 + $0x5f0] sm:$0xff]
        %v494 = vld [vmem:[%s247 + $0x5f8] sm:$0xff]
        %v495 = vld [vmem:[%s247 + $0x600] sm:$0xff]
        %v496 = vld [vmem:[%s247 + $0x608] sm:$0xff]
        %v497 = vld [vmem:[%s247 + $0x610] sm:$0xff]
        %v498 = vld [vmem:[%s247 + $0x618] sm:$0xff]
        %v499 = vld [vmem:[%s247 + $0x620] sm:$0xff]
        %v500 = vld [vmem:[%s247 + $0x628] sm:$0xff]
        %v501 = vld [vmem:[%s247 + $0x630] sm:$0xff]
        %v502 = vld [vmem:[%s247 + $0x638] sm:$0xff]
        %v503 = vld [vmem:[%s247 + $0x640] sm:$0xff]
        %v504 = vld [vmem:[%s247 + $0x648] sm:$0xff]
        %v505 = vld [vmem:[%s247 + $0x650] sm:$0xff]
        %v506 = vld [vmem:[%s247 + $0x658] sm:$0xff]
        %v507 = vld [vmem:[%s247 + $0x660] sm:$0xff]
        %v508 = vld [vmem:[%s247 + $0x668] sm:$0xff]
        %v509 = vld [vmem:[%s247 + $0x670] sm:$0xff]
        %v510 = vld [vmem:[%s247 + $0x678] sm:$0xff]
        %v511 = vld [vmem:[%s247 + $0x680] sm:$0xff]
        %v512 = vld [vmem:[%s247 + $0x688] sm:$0xff]
        %v513 = vld [vmem:[%s247 + $0x690] sm:$0xff]
        %v514 = vld [vmem:[%s247 + $0x698] sm:$0xff]
        %v515 = vld [vmem:[%s247 + $0x6a0] sm:$0xff]
        %v516 = vld [vmem:[%s247 + $0x6a8] sm:$0xff]
        %v517 = vld [vmem:[%s247 + $0x6b0] sm:$0xff]
        %v518 = vld [vmem:[%s247 + $0x6b8] sm:$0xff]
        %v519 = vld [vmem:[%s247 + $0x6c0] sm:$0xff]
        %v520 = vld [vmem:[%s247 + $0x6c8] sm:$0xff]
        %v521 = vld [vmem:[%s247 + $0x6d0] sm:$0xff]
        %v522 = vld [vmem:[%s247 + $0x6d8] sm:$0xff]
        %v523 = vld [vmem:[%s247 + $0x6e0] sm:$0xff]
        %v524 = vld [vmem:[%s247 + $0x6e8] sm:$0xff]
        %v525 = vld [vmem:[%s247 + $0x6f0] sm:$0xff]
        %v526 = vld [vmem:[%s247 + $0x6f8] sm:$0xff]
        %v527 = vld [vmem:[%s247 + $0x700] sm:$0xff]
        %v528 = vld [vmem:[%s247 + $0x708] sm:$0xff]
        %v529 = vld [vmem:[%s247 + $0x710] sm:$0xff]
        %v530 = vld [vmem:[%s247 + $0x718] sm:$0xff]
        %v531 = vld [vmem:[%s247 + $0x720] sm:$0xff]
        %v532 = vld [vmem:[%s247 + $0x728] sm:$0xff]
        %v533 = vld [vmem:[%s247 + $0x730] sm:$0xff]
        %v534 = vld [vmem:[%s247 + $0x738] sm:$0xff]
        %v535 = vld [vmem:[%s247 + $0x740] sm:$0xff]
        %v536 = vld [vmem:[%s247 + $0x748] sm:$0xff]
        %v537 = vld [vmem:[%s247 + $0x750] sm:$0xff]
        %v538 = vld [vmem:[%s247 + $0x758] sm:$0xff]
        %v539 = vld [vmem:[%s247 + $0x760] sm:$0xff]
        %v540 = vld [vmem:[%s247 + $0x768] sm:$0xff]
        %v541 = vld [vmem:[%s247 + $0x770] sm:$0xff]
        %v542 = vld [vmem:[%s247 + $0x778] sm:$0xff]
        %v543 = vld [vmem:[%s247 + $0x780] sm:$0xff]
        %v544 = vld [vmem:[%s247 + $0x788] sm:$0xff]
        %v545 = vld [vmem:[%s247 + $0x790] sm:$0xff]
        %v546 = vld [vmem:[%s247 + $0x798] sm:$0xff]
        %v547 = vld [vmem:[%s247 + $0x7a0] sm:$0xff]
        %v548 = vld [vmem:[%s247 + $0x7a8] sm:$0xff]
        %v549 = vld [vmem:[%s247 + $0x7b0] sm:$0xff]
        %v550 = vld [vmem:[%s247 + $0x7b8] sm:$0xff]
        %v551 = vld [vmem:[%s247 + $0x7c0] sm:$0xff]
        %v552 = vld [vmem:[%s247 + $0x7c8] sm:$0xff]
        %v553 = vld [vmem:[%s247 + $0x7d0] sm:$0xff]
        %v554 = vld [vmem:[%s247 + $0x7d8] sm:$0xff]
        %v555 = vld [vmem:[%s247 + $0x7e0] sm:$0xff]
        %v556 = vld [vmem:[%s247 + $0x7e8] sm:$0xff]
        %v557 = vld [vmem:[%s247 + $0x7f0] sm:$0xff]
        %v558 = vld [vmem:[%s247 + $0x7f8] sm:$0xff]
        %v559 = vld [vmem:[%s247 + $0x800] sm:$0xff]
        %v560 = vld [vmem:[%s247 + $0x808] sm:$0xff]
        %v561 = vld [vmem:[%s247 + $0x810] sm:$0xff]
        %v562 = vld [vmem:[%s247 + $0x818] sm:$0xff]
        %v563 = vld [vmem:[%s247 + $0x820] sm:$0xff]
        %v564 = vld [vmem:[%s247 + $0x828] sm:$0xff]
        %v565 = vld [vmem:[%s247 + $0x830] sm:$0xff]
        %v566 = vld [vmem:[%s247 + $0x838] sm:$0xff]
        %v567 = vld [vmem:[%s247 + $0x840] sm:$0xff]
        %v568 = vld [vmem:[%s247 + $0x848] sm:$0xff]
        %v569 = vld [vmem:[%s247 + $0x850] sm:$0xff]
        %v570 = vld [vmem:[%s247 + $0x858] sm:$0xff]
        %v571 = vld [vmem:[%s247 + $0x860] sm:$0xff]
        %v572 = vld [vmem:[%s247 + $0x868] sm:$0xff]
        %v573 = vld [vmem:[%s247 + $0x870] sm:$0xff]
        %v574 = vld [vmem:[%s247 + $0x878] sm:$0xff]
        %v575 = vld [vmem:[%s247 + $0x880] sm:$0xff]
        %v576 = vld [vmem:[%s247 + $0x888] sm:$0xff]
        %v577 = vld [vmem:[%s247 + $0x890] sm:$0xff]
        %v578 = vld [vmem:[%s247 + $0x898] sm:$0xff]
        %v579 = vld [vmem:[%s247 + $0x8a0] sm:$0xff]
        %v580 = vld [vmem:[%s247 + $0x8a8] sm:$0xff]
        %v581 = vld [vmem:[%s247 + $0x8b0] sm:$0xff]
        %v582 = vld [vmem:[%s247 + $0x8b8] sm:$0xff]
        %v583 = vld [vmem:[%s247 + $0x8c0] sm:$0xff]
        %v584 = vld [vmem:[%s247 + $0x8c8] sm:$0xff]
        %v585 = vld [vmem:[%s247 + $0x8d0] sm:$0xff]
        %v586 = vld [vmem:[%s247 + $0x8d8] sm:$0xff]
        %v587 = vld [vmem:[%s247 + $0x8e0] sm:$0xff]
        %v588 = vld [vmem:[%s247 + $0x8e8] sm:$0xff]
        %v589 = vld [vmem:[%s247 + $0x8f0] sm:$0xff]
        %v590 = vld [vmem:[%s247 + $0x8f8] sm:$0xff]
        %v591 = vld [vmem:[%s247 + $0x900] sm:$0xff]
        %v592 = vld [vmem:[%s247 + $0x908] sm:$0xff]
        %v593 = vld [vmem:[%s247 + $0x910] sm:$0xff]
        %v594 = vld [vmem:[%s247 + $0x918] sm:$0xff]
        %v595 = vld [vmem:[%s247 + $0x920] sm:$0xff]
        %v596 = vld [vmem:[%s247 + $0x928] sm:$0xff]
        %v597 = vld [vmem:[%s247 + $0x930] sm:$0xff]
        %v598 = vld [vmem:[%s247 + $0x938] sm:$0xff]
        %v599 = vld [vmem:[%s247 + $0x940] sm:$0xff]
        %v600 = vld [vmem:[%s247 + $0x948] sm:$0xff]
        %v601 = vld [vmem:[%s247 + $0x950] sm:$0xff]
        %v602 = vld [vmem:[%s247 + $0x958] sm:$0xff]
        %v603 = vld [vmem:[%s247 + $0x960] sm:$0xff]
        %v604 = vld [vmem:[%s247 + $0x968] sm:$0xff]
        %v605 = vld [vmem:[%s247 + $0x970] sm:$0xff]
        %v606 = vld [vmem:[%s247 + $0x978] sm:$0xff]
        %v607 = vld [vmem:[%s247 + $0x980] sm:$0xff]
        %v608 = vld [vmem:[%s247 + $0x988] sm:$0xff]
        %v609 = vld [vmem:[%s247 + $0x990] sm:$0xff]
        %v610 = vld [vmem:[%s247 + $0x998] sm:$0xff]
        %v611 = vld [vmem:[%s247 + $0x9a0] sm:$0xff]
        %v612 = vld [vmem:[%s247 + $0x9a8] sm:$0xff]
        %v613 = vld [vmem:[%s247 + $0x9b0] sm:$0xff]
        %v614 = vld [vmem:[%s247 + $0x9b8] sm:$0xff]
        %v615 = vld [vmem:[%s247 + $0x9c0] sm:$0xff]
        %v616 = vld [vmem:[%s247 + $0x9c8] sm:$0xff]
        %v617 = vld [vmem:[%s247 + $0x9d0] sm:$0xff]
        %v618 = vld [vmem:[%s247 + $0x9d8] sm:$0xff]
        %v619 = vld [vmem:[%s247 + $0x9e0] sm:$0xff]
        %v620 = vld [vmem:[%s247 + $0x9e8] sm:$0xff]
        %v621 = vld [vmem:[%s247 + $0x9f0] sm:$0xff]
        %v622 = vld [vmem:[%s247 + $0x9f8] sm:$0xff]
        %v623 = vld [vmem:[%s247 + $0xa00] sm:$0xff]
        %v624 = vld [vmem:[%s247 + $0xa08] sm:$0xff]
        %v625 = vld [vmem:[%s247 + $0xa10] sm:$0xff]
        %v626 = vld [vmem:[%s247 + $0xa18] sm:$0xff]
        %v627 = vld [vmem:[%s247 + $0xa20] sm:$0xff]
        %v628 = vld [vmem:[%s247 + $0xa28] sm:$0xff]
        %v629 = vld [vmem:[%s247 + $0xa30] sm:$0xff]
        %v630 = vld [vmem:[%s247 + $0xa38] sm:$0xff]
        %v631 = vld [vmem:[%s247 + $0xa40] sm:$0xff]
        %v632 = vld [vmem:[%s247 + $0xa48] sm:$0xff]
        %v633 = vld [vmem:[%s247 + $0xa50] sm:$0xff]
        %v634 = vld [vmem:[%s247 + $0xa58] sm:$0xff]
        %v635 = vld [vmem:[%s247 + $0xa60] sm:$0xff]
        %v636 = vld [vmem:[%s247 + $0xa68] sm:$0xff]
        %v637 = vld [vmem:[%s247 + $0xa70] sm:$0xff]
        %v638 = vld [vmem:[%s247 + $0xa78] sm:$0xff]
        %v639 = vld [vmem:[%s247 + $0xa80] sm:$0xff]
        %v640 = vld [vmem:[%s247 + $0xa88] sm:$0xff]
        %v641 = vld [vmem:[%s247 + $0xa90] sm:$0xff]
        %v642 = vld [vmem:[%s247 + $0xa98] sm:$0xff]
        %v643 = vld [vmem:[%s247 + $0xaa0] sm:$0xff]
        %v644 = vld [vmem:[%s247 + $0xaa8] sm:$0xff]
        %v645 = vld [vmem:[%s247 + $0xab0] sm:$0xff]
        %v646 = vld [vmem:[%s247 + $0xab8] sm:$0xff]
        %v647 = vld [vmem:[%s247 + $0xac0] sm:$0xff]
        %v648 = vld [vmem:[%s247 + $0xac8] sm:$0xff]
        %v649 = vld [vmem:[%s247 + $0xad0] sm:$0xff]
        %v650 = vld [vmem:[%s247 + $0xad8] sm:$0xff]
        %v651 = vld [vmem:[%s247 + $0xae0] sm:$0xff]
        %v652 = vld [vmem:[%s247 + $0xae8] sm:$0xff]
        %v653 = vld [vmem:[%s247 + $0xaf0] sm:$0xff]
        %v654 = vld [vmem:[%s247 + $0xaf8] sm:$0xff]
        %v655 = vld [vmem:[%s247 + $0xb00] sm:$0xff]
        %v656 = vld [vmem:[%s247 + $0xb08] sm:$0xff]
        %v657 = vld [vmem:[%s247 + $0xb10] sm:$0xff]
        %v658 = vld [vmem:[%s247 + $0xb18] sm:$0xff]
        %v659 = vld [vmem:[%s247 + $0xb20] sm:$0xff]
        %v660 = vld [vmem:[%s247 + $0xb28] sm:$0xff]
        %v661 = vld [vmem:[%s247 + $0xb30] sm:$0xff]
        %v662 = vld [vmem:[%s247 + $0xb38] sm:$0xff]
        %v663 = vld [vmem:[%s247 + $0xb40] sm:$0xff]
        %v664 = vld [vmem:[%s247 + $0xb48] sm:$0xff]
        %v665 = vld [vmem:[%s247 + $0xb50] sm:$0xff]
        %v666 = vld [vmem:[%s247 + $0xb58] sm:$0xff]
        %v667 = vld [vmem:[%s247 + $0xb60] sm:$0xff]
        %v668 = vld [vmem:[%s247 + $0xb68] sm:$0xff]
        %v669 = vld [vmem:[%s247 + $0xb70] sm:$0xff]
        %v670 = vld [vmem:[%s247 + $0xb78] sm:$0xff]
        %v671 = vld [vmem:[%s247 + $0xb80] sm:$0xff]
        %v672 = vld [vmem:[%s247 + $0xb88] sm:$0xff]
        %v673 = vld [vmem:[%s247 + $0xb90] sm:$0xff]
        %v674 = vld [vmem:[%s247 + $0xb98] sm:$0xff]
        %v675 = vld [vmem:[%s247 + $0xba0] sm:$0xff]
        %v676 = vld [vmem:[%s247 + $0xba8] sm:$0xff]
        %v677 = vld [vmem:[%s247 + $0xbb0] sm:$0xff]
        %v678 = vld [vmem:[%s247 + $0xbb8] sm:$0xff]
        %v679 = vld [vmem:[%s247 + $0xbc0] sm:$0xff]
        %v680 = vld [vmem:[%s247 + $0xbc8] sm:$0xff]
        %v681 = vld [vmem:[%s247 + $0xbd0] sm:$0xff]
        %v682 = vld [vmem:[%s247 + $0xbd8] sm:$0xff]
        %v683 = vld [vmem:[%s247 + $0xbe0] sm:$0xff]
        %v684 = vld [vmem:[%s247 + $0xbe8] sm:$0xff]
        %v685 = vld [vmem:[%s247 + $0xbf0] sm:$0xff]
        %v686 = vld [vmem:[%s247 + $0xbf8] sm:$0xff]
        %v687 = vld [vmem:[%s247 + $0xc00] sm:$0xff]
        %v688 = vld [vmem:[%s247 + $0xc08] sm:$0xff]
        %v689 = vld [vmem:[%s247 + $0xc10] sm:$0xff]
        %v690 = vld [vmem:[%s247 + $0xc18] sm:$0xff]
        %v691 = vld [vmem:[%s247 + $0xc20] sm:$0xff]
        %v692 = vld [vmem:[%s247 + $0xc28] sm:$0xff]
        %v693 = vld [vmem:[%s247 + $0xc30] sm:$0xff]
        %v694 = vld [vmem:[%s247 + $0xc38] sm:$0xff]
        %v695 = vld [vmem:[%s247 + $0xc40] sm:$0xff]
        %v696 = vld [vmem:[%s247 + $0xc48] sm:$0xff]
        %v697 = vld [vmem:[%s247 + $0xc50] sm:$0xff]
        %v698 = vld [vmem:[%s247 + $0xc58] sm:$0xff]
        %v699 = vld [vmem:[%s247 + $0xc60] sm:$0xff]
        %v700 = vld [vmem:[%s247 + $0xc68] sm:$0xff]
        %v701 = vld [vmem:[%s247 + $0xc70] sm:$0xff]
        %v702 = vld [vmem:[%s247 + $0xc78] sm:$0xff]
        %v703 = vld [vmem:[%s247 + $0xc80] sm:$0xff]
        %v704 = vld [vmem:[%s247 + $0xc88] sm:$0xff]
        %v705 = vld [vmem:[%s247 + $0xc90] sm:$0xff]
        %v706 = vld [vmem:[%s247 + $0xc98] sm:$0xff]
        %v707 = vld [vmem:[%s247 + $0xca0] sm:$0xff]
        %v708 = vld [vmem:[%s247 + $0xca8] sm:$0xff]
        %v709 = vld [vmem:[%s247 + $0xcb0] sm:$0xff]
        %v710 = vld [vmem:[%s247 + $0xcb8] sm:$0xff]
        %v711 = vld [vmem:[%s247 + $0xcc0] sm:$0xff]
        %v712 = vld [vmem:[%s247 + $0xcc8] sm:$0xff]
        %v713 = vld [vmem:[%s247 + $0xcd0] sm:$0xff]
        %v714 = vld [vmem:[%s247 + $0xcd8] sm:$0xff]
        %v715 = vld [vmem:[%s247 + $0xce0] sm:$0xff]
        %v716 = vld [vmem:[%s247 + $0xce8] sm:$0xff]
        %v717 = vld [vmem:[%s247 + $0xcf0] sm:$0xff]
        %v718 = vld [vmem:[%s247 + $0xcf8] sm:$0xff]
        %v719 = vld [vmem:[%s247 + $0xd00] sm:$0xff]
        %v720 = vld [vmem:[%s247 + $0xd08] sm:$0xff]
        %v721 = vld [vmem:[%s247 + $0xd10] sm:$0xff]
        %v722 = vld [vmem:[%s247 + $0xd18] sm:$0xff]
        %v723 = vld [vmem:[%s247 + $0xd20] sm:$0xff]
        %v724 = vld [vmem:[%s247 + $0xd28] sm:$0xff]
        %v725 = vld [vmem:[%s247 + $0xd30] sm:$0xff]
        %v726 = vld [vmem:[%s247 + $0xd38] sm:$0xff]
        %v727 = vld [vmem:[%s247 + $0xd40] sm:$0xff]
        %v728 = vld [vmem:[%s247 + $0xd48] sm:$0xff]
        %v729 = vld [vmem:[%s247 + $0xd50] sm:$0xff]
        %v730 = vld [vmem:[%s247 + $0xd58] sm:$0xff]
        %v731 = vld [vmem:[%s247 + $0xd60] sm:$0xff]
        %v732 = vld [vmem:[%s247 + $0xd68] sm:$0xff]
        %v733 = vld [vmem:[%s247 + $0xd70] sm:$0xff]
        %v734 = vld [vmem:[%s247 + $0xd78] sm:$0xff]
        %v735 = vld [vmem:[%s247 + $0xd80] sm:$0xff]
        %v736 = vld [vmem:[%s247 + $0xd88] sm:$0xff]
        %v737 = vld [vmem:[%s247 + $0xd90] sm:$0xff]
        %v738 = vld [vmem:[%s247 + $0xd98] sm:$0xff]
        %v739 = vld [vmem:[%s247 + $0xda0] sm:$0xff]
        %v740 = vld [vmem:[%s247 + $0xda8] sm:$0xff]
        %v741 = vld [vmem:[%s247 + $0xdb0] sm:$0xff]
        %v742 = vld [vmem:[%s247 + $0xdb8] sm:$0xff]
        %v743 = vld [vmem:[%s247 + $0xdc0] sm:$0xff]
        %v744 = vld [vmem:[%s247 + $0xdc8] sm:$0xff]
        %v745 = vld [vmem:[%s247 + $0xdd0] sm:$0xff]
        %v746 = vld [vmem:[%s247 + $0xdd8] sm:$0xff]
        %v747 = vld [vmem:[%s247 + $0xde0] sm:$0xff]
        %v748 = vld [vmem:[%s247 + $0xde8] sm:$0xff]
        %v749 = vld [vmem:[%s247 + $0xdf0] sm:$0xff]
        %v750 = vld [vmem:[%s247 + $0xdf8] sm:$0xff]
        %v751 = vld [vmem:[%s247 + $0xe00] sm:$0xff]
        %v752 = vld [vmem:[%s247 + $0xe08] sm:$0xff]
        %v753 = vld [vmem:[%s247 + $0xe10] sm:$0xff]
        %v754 = vld [vmem:[%s247 + $0xe18] sm:$0xff]
        %v755 = vld [vmem:[%s247 + $0xe20] sm:$0xff]
        %v756 = vld [vmem:[%s247 + $0xe28] sm:$0xff]
        %v757 = vld [vmem:[%s247 + $0xe30] sm:$0xff]
        %v758 = vld [vmem:[%s247 + $0xe38] sm:$0xff]
        %v759 = vld [vmem:[%s247 + $0xe40] sm:$0xff]
        %v760 = vld [vmem:[%s247 + $0xe48] sm:$0xff]
        %v761 = vld [vmem:[%s247 + $0xe50] sm:$0xff]
        %v762 = vld [vmem:[%s247 + $0xe58] sm:$0xff]
        %v763 = vld [vmem:[%s247 + $0xe60] sm:$0xff]
        %v764 = vld [vmem:[%s247 + $0xe68] sm:$0xff]
        %v765 = vld [vmem:[%s247 + $0xe70] sm:$0xff]
        %v766 = vld [vmem:[%s247 + $0xe78] sm:$0xff]
        %v767 = vld [vmem:[%s247 + $0xe80] sm:$0xff]
        %v768 = vld [vmem:[%s247 + $0xe88] sm:$0xff]
        %v769 = vld [vmem:[%s247 + $0xe90] sm:$0xff]
        %v770 = vld [vmem:[%s247 + $0xe98] sm:$0xff]
        %v771 = vld [vmem:[%s247 + $0xea0] sm:$0xff]
        %v772 = vld [vmem:[%s247 + $0xea8] sm:$0xff]
        %v773 = vld [vmem:[%s247 + $0xeb0] sm:$0xff]
        %v774 = vld [vmem:[%s247 + $0xeb8] sm:$0xff]
        %v775 = vld [vmem:[%s247 + $0xec0] sm:$0xff]
        %v776 = vld [vmem:[%s247 + $0xec8] sm:$0xff]
        %v777 = vld [vmem:[%s247 + $0xed0] sm:$0xff]
        %v778 = vld [vmem:[%s247 + $0xed8] sm:$0xff]
        %v779 = vld [vmem:[%s247 + $0xee0] sm:$0xff]
        %v780 = vld [vmem:[%s247 + $0xee8] sm:$0xff]
        %v781 = vld [vmem:[%s247 + $0xef0] sm:$0xff]
        %v782 = vld [vmem:[%s247 + $0xef8] sm:$0xff]
        %v783 = vld [vmem:[%s247 + $0xf00] sm:$0xff]
        %v784 = vld [vmem:[%s247 + $0xf08] sm:$0xff]
        %v785 = vld [vmem:[%s247 + $0xf10] sm:$0xff]
        %v786 = vld [vmem:[%s247 + $0xf18] sm:$0xff]
        %v787 = vld [vmem:[%s247 + $0xf20] sm:$0xff]
        %v788 = vld [vmem:[%s247 + $0xf28] sm:$0xff]
        %v789 = vld [vmem:[%s247 + $0xf30] sm:$0xff]
        %v790 = vld [vmem:[%s247 + $0xf38] sm:$0xff]
        %v791 = vld [vmem:[%s247 + $0xf40] sm:$0xff]
        %v792 = vld [vmem:[%s247 + $0xf48] sm:$0xff]
        %v793 = vld [vmem:[%s247 + $0xf50] sm:$0xff]
        %v794 = vld [vmem:[%s247 + $0xf58] sm:$0xff]
        %v795 = vld [vmem:[%s247 + $0xf60] sm:$0xff]
        %v796 = vld [vmem:[%s247 + $0xf68] sm:$0xff]
        %v797 = vld [vmem:[%s247 + $0xf70] sm:$0xff]
        %v798 = vld [vmem:[%s247 + $0xf78] sm:$0xff]
        %v799 = vld [vmem:[%s247 + $0xf80] sm:$0xff]
        %v800 = vld [vmem:[%s247 + $0xf88] sm:$0xff]
        %v801 = vld [vmem:[%s247 + $0xf90] sm:$0xff]
        %v802 = vld [vmem:[%s247 + $0xf98] sm:$0xff]
        %v803 = vld [vmem:[%s247 + $0xfa0] sm:$0xff]
        %v804 = vld [vmem:[%s247 + $0xfa8] sm:$0xff]
        %v805 = vld [vmem:[%s247 + $0xfb0] sm:$0xff]
        %v806 = vld [vmem:[%s247 + $0xfb8] sm:$0xff]
        %v807 = vld [vmem:[%s247 + $0xfc0] sm:$0xff]
        %v808 = vld [vmem:[%s247 + $0xfc8] sm:$0xff]
        %v809 = vld [vmem:[%s247 + $0xfd0] sm:$0xff]
        %v810 = vld [vmem:[%s247 + $0xfd8] sm:$0xff]
        %v811 = vld [vmem:[%s247 + $0xfe0] sm:$0xff]
        %v812 = vld [vmem:[%s247 + $0xfe8] sm:$0xff]
        %v813 = vld [vmem:[%s247 + $0xff0] sm:$0xff]
        %v814 = vld [vmem:[%s247 + $0xff8] sm:$0xff]
        %v847 = vunpack.c.l.b16 %v271
        %v848 = vunpack.c.h.b16 %v271
        %v849 = vunpack.c.l.b16 %v272
        %v850 = vunpack.c.h.b16 %v272
        %v851 = vunpack.c.l.b16 %v273
        %v852 = vunpack.c.h.b16 %v273
        %v853 = vunpack.c.l.b16 %v274
        %v854 = vunpack.c.h.b16 %v274
        %v855 = vunpack.c.l.b16 %v275
        %v856 = vunpack.c.h.b16 %v275
        %v857 = vunpack.c.l.b16 %v276
        %v858 = vunpack.c.h.b16 %v276
        %v859 = vunpack.c.l.b16 %v277
        %v860 = vunpack.c.h.b16 %v277
        %v861 = vunpack.c.l.b16 %v278
        %v862 = vunpack.c.h.b16 %v278
        %v863 = vunpack.c.l.b16 %v279
        %v864 = vunpack.c.h.b16 %v279
        %v865 = vunpack.c.l.b16 %v280
        %v866 = vunpack.c.h.b16 %v280
        %v867 = vunpack.c.l.b16 %v281
        %v868 = vunpack.c.h.b16 %v281
        %v869 = vunpack.c.l.b16 %v282
        %v870 = vunpack.c.h.b16 %v282
        %v871 = vunpack.c.l.b16 %v283
        %v872 = vunpack.c.h.b16 %v283
        %v873 = vunpack.c.l.b16 %v284
        %v874 = vunpack.c.h.b16 %v284
        %v875 = vunpack.c.l.b16 %v285
        %v876 = vunpack.c.h.b16 %v285
        %v877 = vunpack.c.l.b16 %v286
        %v878 = vunpack.c.h.b16 %v286
        %v879 = vunpack.c.l.b16 %v287
        %v880 = vunpack.c.h.b16 %v287
        %v881 = vunpack.c.l.b16 %v288
        %v882 = vunpack.c.h.b16 %v288
        %v883 = vunpack.c.l.b16 %v289
        %v884 = vunpack.c.h.b16 %v289
        %v885 = vunpack.c.l.b16 %v290
        %v886 = vunpack.c.h.b16 %v290
        %v887 = vunpack.c.l.b16 %v291
        %v888 = vunpack.c.h.b16 %v291
        %v889 = vunpack.c.l.b16 %v292
        %v890 = vunpack.c.h.b16 %v292
        %v891 = vunpack.c.l.b16 %v293
        %v892 = vunpack.c.h.b16 %v293
        %v893 = vunpack.c.l.b16 %v294
        %v894 = vunpack.c.h.b16 %v294
        %v895 = vunpack.c.l.b16 %v295
        %v896 = vunpack.c.h.b16 %v295
        %v897 = vunpack.c.l.b16 %v296
        %v898 = vunpack.c.h.b16 %v296
        %v899 = vunpack.c.l.b16 %v297
        %v900 = vunpack.c.h.b16 %v297
        %v901 = vunpack.c.l.b16 %v298
        %v902 = vunpack.c.h.b16 %v298
        %v903 = vunpack.c.l.b16 %v299
        %v904 = vunpack.c.h.b16 %v299
        %v905 = vunpack.c.l.b16 %v300
        %v906 = vunpack.c.h.b16 %v300
        %v907 = vunpack.c.l.b16 %v301
        %v908 = vunpack.c.h.b16 %v301
        %v909 = vunpack.c.l.b16 %v302
        %v910 = vunpack.c.h.b16 %v302
        %v911 = vpack.c.b16 %v863, %v847
        %v912 = vpack.c.b16 %v864, %v848
        %v913 = vpack.c.b16 %v865, %v849
        %v914 = vpack.c.b16 %v866, %v850
        %v915 = vpack.c.b16 %v867, %v851
        %v916 = vpack.c.b16 %v868, %v852
        %v917 = vpack.c.b16 %v869, %v853
        %v918 = vpack.c.b16 %v870, %v854
        %v919 = vpack.c.b16 %v871, %v855
        %v920 = vpack.c.b16 %v872, %v856
        %v921 = vpack.c.b16 %v873, %v857
        %v922 = vpack.c.b16 %v874, %v858
        %v923 = vpack.c.b16 %v875, %v859
        %v924 = vpack.c.b16 %v876, %v860
        %v925 = vpack.c.b16 %v877, %v861
        %v926 = vpack.c.b16 %v878, %v862
        %v927 = vpack.c.b16 %v895, %v879
        %v928 = vpack.c.b16 %v896, %v880
        %v929 = vpack.c.b16 %v897, %v881
        %v930 = vpack.c.b16 %v898, %v882
        %v931 = vpack.c.b16 %v899, %v883
        %v932 = vpack.c.b16 %v900, %v884
        %v933 = vpack.c.b16 %v901, %v885
        %v934 = vpack.c.b16 %v902, %v886
        %v935 = vpack.c.b16 %v903, %v887
        %v936 = vpack.c.b16 %v904, %v888
        %v937 = vpack.c.b16 %v905, %v889
        %v938 = vpack.c.b16 %v906, %v890
        %v939 = vpack.c.b16 %v907, %v891
        %v940 = vpack.c.b16 %v908, %v892
        %v941 = vpack.c.b16 %v909, %v893
        %v942 = vpack.c.b16 %v910, %v894
        %v1487 = vunpack.c.l.b16 %v303
        %v1488 = vunpack.c.h.b16 %v303
        %v1489 = vunpack.c.l.b16 %v304
        %v1490 = vunpack.c.h.b16 %v304
        %v1491 = vunpack.c.l.b16 %v305
        %v1492 = vunpack.c.h.b16 %v305
        %v1493 = vunpack.c.l.b16 %v306
        %v1494 = vunpack.c.h.b16 %v306
        %v1495 = vunpack.c.l.b16 %v307
        %v1496 = vunpack.c.h.b16 %v307
        %v1497 = vunpack.c.l.b16 %v308
        %v1498 = vunpack.c.h.b16 %v308
        %v1499 = vunpack.c.l.b16 %v309
        %v1500 = vunpack.c.h.b16 %v309
        %v1501 = vunpack.c.l.b16 %v310
        %v1502 = vunpack.c.h.b16 %v310
        %v1503 = vunpack.c.l.b16 %v311
        %v1504 = vunpack.c.h.b16 %v311
        %v1505 = vunpack.c.l.b16 %v312
        %v1506 = vunpack.c.h.b16 %v312
        %v1507 = vunpack.c.l.b16 %v313
        %v1508 = vunpack.c.h.b16 %v313
        %v1509 = vunpack.c.l.b16 %v314
        %v1510 = vunpack.c.h.b16 %v314
        %v1511 = vunpack.c.l.b16 %v315
        %v1512 = vunpack.c.h.b16 %v315
        %v1513 = vunpack.c.l.b16 %v316
        %v1514 = vunpack.c.h.b16 %v316
        %v1515 = vunpack.c.l.b16 %v317
        %v1516 = vunpack.c.h.b16 %v317
        %v1517 = vunpack.c.l.b16 %v318
        %v1518 = vunpack.c.h.b16 %v318
        %v1519 = vunpack.c.l.b16 %v319
        %v1520 = vunpack.c.h.b16 %v319
        %v1521 = vunpack.c.l.b16 %v320
        %v1522 = vunpack.c.h.b16 %v320
        %v1523 = vunpack.c.l.b16 %v321
        %v1524 = vunpack.c.h.b16 %v321
        %v1525 = vunpack.c.l.b16 %v322
        %v1526 = vunpack.c.h.b16 %v322
        %v1527 = vunpack.c.l.b16 %v323
        %v1528 = vunpack.c.h.b16 %v323
        %v1529 = vunpack.c.l.b16 %v324
        %v1530 = vunpack.c.h.b16 %v324
        %v1531 = vunpack.c.l.b16 %v325
        %v1532 = vunpack.c.h.b16 %v325
        %v1533 = vunpack.c.l.b16 %v326
        %v1534 = vunpack.c.h.b16 %v326
        %v1535 = vunpack.c.l.b16 %v327
        %v1536 = vunpack.c.h.b16 %v327
        %v1537 = vunpack.c.l.b16 %v328
        %v1538 = vunpack.c.h.b16 %v328
        %v1539 = vunpack.c.l.b16 %v329
        %v1540 = vunpack.c.h.b16 %v329
        %v1541 = vunpack.c.l.b16 %v330
        %v1542 = vunpack.c.h.b16 %v330
        %v1543 = vunpack.c.l.b16 %v331
        %v1544 = vunpack.c.h.b16 %v331
        %v1545 = vunpack.c.l.b16 %v332
        %v1546 = vunpack.c.h.b16 %v332
        %v1547 = vunpack.c.l.b16 %v333
        %v1548 = vunpack.c.h.b16 %v333
        %v1549 = vunpack.c.l.b16 %v334
        %v1550 = vunpack.c.h.b16 %v334
        %v1551 = vunpack.c.l.b16 %v335
        %v1552 = vunpack.c.h.b16 %v335
        %v1553 = vunpack.c.l.b16 %v336
        %v1554 = vunpack.c.h.b16 %v336
        %v1555 = vunpack.c.l.b16 %v337
        %v1556 = vunpack.c.h.b16 %v337
        %v1557 = vunpack.c.l.b16 %v338
        %v1558 = vunpack.c.h.b16 %v338
        %v1559 = vunpack.c.l.b16 %v339
        %v1560 = vunpack.c.h.b16 %v339
        %v1561 = vunpack.c.l.b16 %v340
        %v1562 = vunpack.c.h.b16 %v340
        %v1563 = vunpack.c.l.b16 %v341
        %v1564 = vunpack.c.h.b16 %v341
        %v1565 = vunpack.c.l.b16 %v342
        %v1566 = vunpack.c.h.b16 %v342
        %v1567 = vunpack.c.l.b16 %v343
        %v1568 = vunpack.c.h.b16 %v343
        %v1569 = vunpack.c.l.b16 %v344
        %v1570 = vunpack.c.h.b16 %v344
        %v1571 = vunpack.c.l.b16 %v345
        %v1572 = vunpack.c.h.b16 %v345
        %v1573 = vunpack.c.l.b16 %v346
        %v1574 = vunpack.c.h.b16 %v346
        %v1575 = vunpack.c.l.b16 %v347
        %v1576 = vunpack.c.h.b16 %v347
        %v1577 = vunpack.c.l.b16 %v348
        %v1578 = vunpack.c.h.b16 %v348
        %v1579 = vunpack.c.l.b16 %v349
        %v1580 = vunpack.c.h.b16 %v349
        %v1581 = vunpack.c.l.b16 %v350
        %v1582 = vunpack.c.h.b16 %v350
        %v1583 = vunpack.c.l.b16 %v351
        %v1584 = vunpack.c.h.b16 %v351
        %v1585 = vunpack.c.l.b16 %v352
        %v1586 = vunpack.c.h.b16 %v352
        %v1587 = vunpack.c.l.b16 %v353
        %v1588 = vunpack.c.h.b16 %v353
        %v1589 = vunpack.c.l.b16 %v354
        %v1590 = vunpack.c.h.b16 %v354
        %v1591 = vunpack.c.l.b16 %v355
        %v1592 = vunpack.c.h.b16 %v355
        %v1593 = vunpack.c.l.b16 %v356
        %v1594 = vunpack.c.h.b16 %v356
        %v1595 = vunpack.c.l.b16 %v357
        %v1596 = vunpack.c.h.b16 %v357
        %v1597 = vunpack.c.l.b16 %v358
        %v1598 = vunpack.c.h.b16 %v358
        %v1599 = vunpack.c.l.b16 %v359
        %v1600 = vunpack.c.h.b16 %v359
        %v1601 = vunpack.c.l.b16 %v360
        %v1602 = vunpack.c.h.b16 %v360
        %v1603 = vunpack.c.l.b16 %v361
        %v1604 = vunpack.c.h.b16 %v361
        %v1605 = vunpack.c.l.b16 %v362
        %v1606 = vunpack.c.h.b16 %v362
        %v1607 = vunpack.c.l.b16 %v363
        %v1608 = vunpack.c.h.b16 %v363
        %v1609 = vunpack.c.l.b16 %v364
        %v1610 = vunpack.c.h.b16 %v364
        %v1611 = vunpack.c.l.b16 %v365
        %v1612 = vunpack.c.h.b16 %v365
        %v1613 = vunpack.c.l.b16 %v366
        %v1614 = vunpack.c.h.b16 %v366
        %v1615 = vunpack.c.l.b16 %v367
        %v1616 = vunpack.c.h.b16 %v367
        %v1617 = vunpack.c.l.b16 %v368
        %v1618 = vunpack.c.h.b16 %v368
        %v1619 = vunpack.c.l.b16 %v369
        %v1620 = vunpack.c.h.b16 %v369
        %v1621 = vunpack.c.l.b16 %v370
        %v1622 = vunpack.c.h.b16 %v370
        %v1623 = vunpack.c.l.b16 %v371
        %v1624 = vunpack.c.h.b16 %v371
        %v1625 = vunpack.c.l.b16 %v372
        %v1626 = vunpack.c.h.b16 %v372
        %v1627 = vunpack.c.l.b16 %v373
        %v1628 = vunpack.c.h.b16 %v373
        %v1629 = vunpack.c.l.b16 %v374
        %v1630 = vunpack.c.h.b16 %v374
        %v1631 = vunpack.c.l.b16 %v375
        %v1632 = vunpack.c.h.b16 %v375
        %v1633 = vunpack.c.l.b16 %v376
        %v1634 = vunpack.c.h.b16 %v376
        %v1635 = vunpack.c.l.b16 %v377
        %v1636 = vunpack.c.h.b16 %v377
        %v1637 = vunpack.c.l.b16 %v378
        %v1638 = vunpack.c.h.b16 %v378
        %v1639 = vunpack.c.l.b16 %v379
        %v1640 = vunpack.c.h.b16 %v379
        %v1641 = vunpack.c.l.b16 %v380
        %v1642 = vunpack.c.h.b16 %v380
        %v1643 = vunpack.c.l.b16 %v381
        %v1644 = vunpack.c.h.b16 %v381
        %v1645 = vunpack.c.l.b16 %v382
        %v1646 = vunpack.c.h.b16 %v382
        %v1647 = vunpack.c.l.b16 %v383
        %v1648 = vunpack.c.h.b16 %v383
        %v1649 = vunpack.c.l.b16 %v384
        %v1650 = vunpack.c.h.b16 %v384
        %v1651 = vunpack.c.l.b16 %v385
        %v1652 = vunpack.c.h.b16 %v385
        %v1653 = vunpack.c.l.b16 %v386
        %v1654 = vunpack.c.h.b16 %v386
        %v1655 = vunpack.c.l.b16 %v387
        %v1656 = vunpack.c.h.b16 %v387
        %v1657 = vunpack.c.l.b16 %v388
        %v1658 = vunpack.c.h.b16 %v388
        %v1659 = vunpack.c.l.b16 %v389
        %v1660 = vunpack.c.h.b16 %v389
        %v1661 = vunpack.c.l.b16 %v390
        %v1662 = vunpack.c.h.b16 %v390
        %v1663 = vunpack.c.l.b16 %v391
        %v1664 = vunpack.c.h.b16 %v391
        %v1665 = vunpack.c.l.b16 %v392
        %v1666 = vunpack.c.h.b16 %v392
        %v1667 = vunpack.c.l.b16 %v393
        %v1668 = vunpack.c.h.b16 %v393
        %v1669 = vunpack.c.l.b16 %v394
        %v1670 = vunpack.c.h.b16 %v394
        %v1671 = vunpack.c.l.b16 %v395
        %v1672 = vunpack.c.h.b16 %v395
        %v1673 = vunpack.c.l.b16 %v396
        %v1674 = vunpack.c.h.b16 %v396
        %v1675 = vunpack.c.l.b16 %v397
        %v1676 = vunpack.c.h.b16 %v397
        %v1677 = vunpack.c.l.b16 %v398
        %v1678 = vunpack.c.h.b16 %v398
        %v1679 = vunpack.c.l.b16 %v399
        %v1680 = vunpack.c.h.b16 %v399
        %v1681 = vunpack.c.l.b16 %v400
        %v1682 = vunpack.c.h.b16 %v400
        %v1683 = vunpack.c.l.b16 %v401
        %v1684 = vunpack.c.h.b16 %v401
        %v1685 = vunpack.c.l.b16 %v402
        %v1686 = vunpack.c.h.b16 %v402
        %v1687 = vunpack.c.l.b16 %v403
        %v1688 = vunpack.c.h.b16 %v403
        %v1689 = vunpack.c.l.b16 %v404
        %v1690 = vunpack.c.h.b16 %v404
        %v1691 = vunpack.c.l.b16 %v405
        %v1692 = vunpack.c.h.b16 %v405
        %v1693 = vunpack.c.l.b16 %v406
        %v1694 = vunpack.c.h.b16 %v406
        %v1695 = vunpack.c.l.b16 %v407
        %v1696 = vunpack.c.h.b16 %v407
        %v1697 = vunpack.c.l.b16 %v408
        %v1698 = vunpack.c.h.b16 %v408
        %v1699 = vunpack.c.l.b16 %v409
        %v1700 = vunpack.c.h.b16 %v409
        %v1701 = vunpack.c.l.b16 %v410
        %v1702 = vunpack.c.h.b16 %v410
        %v1703 = vunpack.c.l.b16 %v411
        %v1704 = vunpack.c.h.b16 %v411
        %v1705 = vunpack.c.l.b16 %v412
        %v1706 = vunpack.c.h.b16 %v412
        %v1707 = vunpack.c.l.b16 %v413
        %v1708 = vunpack.c.h.b16 %v413
        %v1709 = vunpack.c.l.b16 %v414
        %v1710 = vunpack.c.h.b16 %v414
        %v1711 = vunpack.c.l.b16 %v415
        %v1712 = vunpack.c.h.b16 %v415
        %v1713 = vunpack.c.l.b16 %v416
        %v1714 = vunpack.c.h.b16 %v416
        %v1715 = vunpack.c.l.b16 %v417
        %v1716 = vunpack.c.h.b16 %v417
        %v1717 = vunpack.c.l.b16 %v418
        %v1718 = vunpack.c.h.b16 %v418
        %v1719 = vunpack.c.l.b16 %v419
        %v1720 = vunpack.c.h.b16 %v419
        %v1721 = vunpack.c.l.b16 %v420
        %v1722 = vunpack.c.h.b16 %v420
        %v1723 = vunpack.c.l.b16 %v421
        %v1724 = vunpack.c.h.b16 %v421
        %v1725 = vunpack.c.l.b16 %v422
        %v1726 = vunpack.c.h.b16 %v422
        %v1727 = vunpack.c.l.b16 %v423
        %v1728 = vunpack.c.h.b16 %v423
        %v1729 = vunpack.c.l.b16 %v424
        %v1730 = vunpack.c.h.b16 %v424
        %v1731 = vunpack.c.l.b16 %v425
        %v1732 = vunpack.c.h.b16 %v425
        %v1733 = vunpack.c.l.b16 %v426
        %v1734 = vunpack.c.h.b16 %v426
        %v1735 = vunpack.c.l.b16 %v427
        %v1736 = vunpack.c.h.b16 %v427
        %v1737 = vunpack.c.l.b16 %v428
        %v1738 = vunpack.c.h.b16 %v428
        %v1739 = vunpack.c.l.b16 %v429
        %v1740 = vunpack.c.h.b16 %v429
        %v1741 = vunpack.c.l.b16 %v430
        %v1742 = vunpack.c.h.b16 %v430
        %v1743 = vunpack.c.l.b16 %v431
        %v1744 = vunpack.c.h.b16 %v431
        %v1745 = vunpack.c.l.b16 %v432
        %v1746 = vunpack.c.h.b16 %v432
        %v1747 = vunpack.c.l.b16 %v433
        %v1748 = vunpack.c.h.b16 %v433
        %v1749 = vunpack.c.l.b16 %v434
        %v1750 = vunpack.c.h.b16 %v434
        %v1751 = vunpack.c.l.b16 %v435
        %v1752 = vunpack.c.h.b16 %v435
        %v1753 = vunpack.c.l.b16 %v436
        %v1754 = vunpack.c.h.b16 %v436
        %v1755 = vunpack.c.l.b16 %v437
        %v1756 = vunpack.c.h.b16 %v437
        %v1757 = vunpack.c.l.b16 %v438
        %v1758 = vunpack.c.h.b16 %v438
        %v1759 = vunpack.c.l.b16 %v439
        %v1760 = vunpack.c.h.b16 %v439
        %v1761 = vunpack.c.l.b16 %v440
        %v1762 = vunpack.c.h.b16 %v440
        %v1763 = vunpack.c.l.b16 %v441
        %v1764 = vunpack.c.h.b16 %v441
        %v1765 = vunpack.c.l.b16 %v442
        %v1766 = vunpack.c.h.b16 %v442
        %v1767 = vunpack.c.l.b16 %v443
        %v1768 = vunpack.c.h.b16 %v443
        %v1769 = vunpack.c.l.b16 %v444
        %v1770 = vunpack.c.h.b16 %v444
        %v1771 = vunpack.c.l.b16 %v445
        %v1772 = vunpack.c.h.b16 %v445
        %v1773 = vunpack.c.l.b16 %v446
        %v1774 = vunpack.c.h.b16 %v446
        %v1775 = vunpack.c.l.b16 %v447
        %v1776 = vunpack.c.h.b16 %v447
        %v1777 = vunpack.c.l.b16 %v448
        %v1778 = vunpack.c.h.b16 %v448
        %v1779 = vunpack.c.l.b16 %v449
        %v1780 = vunpack.c.h.b16 %v449
        %v1781 = vunpack.c.l.b16 %v450
        %v1782 = vunpack.c.h.b16 %v450
        %v1783 = vunpack.c.l.b16 %v451
        %v1784 = vunpack.c.h.b16 %v451
        %v1785 = vunpack.c.l.b16 %v452
        %v1786 = vunpack.c.h.b16 %v452
        %v1787 = vunpack.c.l.b16 %v453
        %v1788 = vunpack.c.h.b16 %v453
        %v1789 = vunpack.c.l.b16 %v454
        %v1790 = vunpack.c.h.b16 %v454
        %v1791 = vunpack.c.l.b16 %v455
        %v1792 = vunpack.c.h.b16 %v455
        %v1793 = vunpack.c.l.b16 %v456
        %v1794 = vunpack.c.h.b16 %v456
        %v1795 = vunpack.c.l.b16 %v457
        %v1796 = vunpack.c.h.b16 %v457
        %v1797 = vunpack.c.l.b16 %v458
        %v1798 = vunpack.c.h.b16 %v458
        %v1799 = vunpack.c.l.b16 %v459
        %v1800 = vunpack.c.h.b16 %v459
        %v1801 = vunpack.c.l.b16 %v460
        %v1802 = vunpack.c.h.b16 %v460
        %v1803 = vunpack.c.l.b16 %v461
        %v1804 = vunpack.c.h.b16 %v461
        %v1805 = vunpack.c.l.b16 %v462
        %v1806 = vunpack.c.h.b16 %v462
        %v1807 = vunpack.c.l.b16 %v463
        %v1808 = vunpack.c.h.b16 %v463
        %v1809 = vunpack.c.l.b16 %v464
        %v1810 = vunpack.c.h.b16 %v464
        %v1811 = vunpack.c.l.b16 %v465
        %v1812 = vunpack.c.h.b16 %v465
        %v1813 = vunpack.c.l.b16 %v466
        %v1814 = vunpack.c.h.b16 %v466
        %v1815 = vunpack.c.l.b16 %v467
        %v1816 = vunpack.c.h.b16 %v467
        %v1817 = vunpack.c.l.b16 %v468
        %v1818 = vunpack.c.h.b16 %v468
        %v1819 = vunpack.c.l.b16 %v469
        %v1820 = vunpack.c.h.b16 %v469
        %v1821 = vunpack.c.l.b16 %v470
        %v1822 = vunpack.c.h.b16 %v470
        %v1823 = vunpack.c.l.b16 %v471
        %v1824 = vunpack.c.h.b16 %v471
        %v1825 = vunpack.c.l.b16 %v472
        %v1826 = vunpack.c.h.b16 %v472
        %v1827 = vunpack.c.l.b16 %v473
        %v1828 = vunpack.c.h.b16 %v473
        %v1829 = vunpack.c.l.b16 %v474
        %v1830 = vunpack.c.h.b16 %v474
        %v1831 = vunpack.c.l.b16 %v475
        %v1832 = vunpack.c.h.b16 %v475
        %v1833 = vunpack.c.l.b16 %v476
        %v1834 = vunpack.c.h.b16 %v476
        %v1835 = vunpack.c.l.b16 %v477
        %v1836 = vunpack.c.h.b16 %v477
        %v1837 = vunpack.c.l.b16 %v478
        %v1838 = vunpack.c.h.b16 %v478
        %v1839 = vunpack.c.l.b16 %v479
        %v1840 = vunpack.c.h.b16 %v479
        %v1841 = vunpack.c.l.b16 %v480
        %v1842 = vunpack.c.h.b16 %v480
        %v1843 = vunpack.c.l.b16 %v481
        %v1844 = vunpack.c.h.b16 %v481
        %v1845 = vunpack.c.l.b16 %v482
        %v1846 = vunpack.c.h.b16 %v482
        %v1847 = vunpack.c.l.b16 %v483
        %v1848 = vunpack.c.h.b16 %v483
        %v1849 = vunpack.c.l.b16 %v484
        %v1850 = vunpack.c.h.b16 %v484
        %v1851 = vunpack.c.l.b16 %v485
        %v1852 = vunpack.c.h.b16 %v485
        %v1853 = vunpack.c.l.b16 %v486
        %v1854 = vunpack.c.h.b16 %v486
        %v1855 = vunpack.c.l.b16 %v487
        %v1856 = vunpack.c.h.b16 %v487
        %v1857 = vunpack.c.l.b16 %v488
        %v1858 = vunpack.c.h.b16 %v488
        %v1859 = vunpack.c.l.b16 %v489
        %v1860 = vunpack.c.h.b16 %v489
        %v1861 = vunpack.c.l.b16 %v490
        %v1862 = vunpack.c.h.b16 %v490
        %v1863 = vunpack.c.l.b16 %v491
        %v1864 = vunpack.c.h.b16 %v491
        %v1865 = vunpack.c.l.b16 %v492
        %v1866 = vunpack.c.h.b16 %v492
        %v1867 = vunpack.c.l.b16 %v493
        %v1868 = vunpack.c.h.b16 %v493
        %v1869 = vunpack.c.l.b16 %v494
        %v1870 = vunpack.c.h.b16 %v494
        %v1871 = vunpack.c.l.b16 %v495
        %v1872 = vunpack.c.h.b16 %v495
        %v1873 = vunpack.c.l.b16 %v496
        %v1874 = vunpack.c.h.b16 %v496
        %v1875 = vunpack.c.l.b16 %v497
        %v1876 = vunpack.c.h.b16 %v497
        %v1877 = vunpack.c.l.b16 %v498
        %v1878 = vunpack.c.h.b16 %v498
        %v1879 = vunpack.c.l.b16 %v499
        %v1880 = vunpack.c.h.b16 %v499
        %v1881 = vunpack.c.l.b16 %v500
        %v1882 = vunpack.c.h.b16 %v500
        %v1883 = vunpack.c.l.b16 %v501
        %v1884 = vunpack.c.h.b16 %v501
        %v1885 = vunpack.c.l.b16 %v502
        %v1886 = vunpack.c.h.b16 %v502
        %v1887 = vunpack.c.l.b16 %v503
        %v1888 = vunpack.c.h.b16 %v503
        %v1889 = vunpack.c.l.b16 %v504
        %v1890 = vunpack.c.h.b16 %v504
        %v1891 = vunpack.c.l.b16 %v505
        %v1892 = vunpack.c.h.b16 %v505
        %v1893 = vunpack.c.l.b16 %v506
        %v1894 = vunpack.c.h.b16 %v506
        %v1895 = vunpack.c.l.b16 %v507
        %v1896 = vunpack.c.h.b16 %v507
        %v1897 = vunpack.c.l.b16 %v508
        %v1898 = vunpack.c.h.b16 %v508
        %v1899 = vunpack.c.l.b16 %v509
        %v1900 = vunpack.c.h.b16 %v509
        %v1901 = vunpack.c.l.b16 %v510
        %v1902 = vunpack.c.h.b16 %v510
        %v1903 = vunpack.c.l.b16 %v511
        %v1904 = vunpack.c.h.b16 %v511
        %v1905 = vunpack.c.l.b16 %v512
        %v1906 = vunpack.c.h.b16 %v512
        %v1907 = vunpack.c.l.b16 %v513
        %v1908 = vunpack.c.h.b16 %v513
        %v1909 = vunpack.c.l.b16 %v514
        %v1910 = vunpack.c.h.b16 %v514
        %v1911 = vunpack.c.l.b16 %v515
        %v1912 = vunpack.c.h.b16 %v515
        %v1913 = vunpack.c.l.b16 %v516
        %v1914 = vunpack.c.h.b16 %v516
        %v1915 = vunpack.c.l.b16 %v517
        %v1916 = vunpack.c.h.b16 %v517
        %v1917 = vunpack.c.l.b16 %v518
        %v1918 = vunpack.c.h.b16 %v518
        %v1919 = vunpack.c.l.b16 %v519
        %v1920 = vunpack.c.h.b16 %v519
        %v1921 = vunpack.c.l.b16 %v520
        %v1922 = vunpack.c.h.b16 %v520
        %v1923 = vunpack.c.l.b16 %v521
        %v1924 = vunpack.c.h.b16 %v521
        %v1925 = vunpack.c.l.b16 %v522
        %v1926 = vunpack.c.h.b16 %v522
        %v1927 = vunpack.c.l.b16 %v523
        %v1928 = vunpack.c.h.b16 %v523
        %v1929 = vunpack.c.l.b16 %v524
        %v1930 = vunpack.c.h.b16 %v524
        %v1931 = vunpack.c.l.b16 %v525
        %v1932 = vunpack.c.h.b16 %v525
        %v1933 = vunpack.c.l.b16 %v526
        %v1934 = vunpack.c.h.b16 %v526
        %v1935 = vunpack.c.l.b16 %v527
        %v1936 = vunpack.c.h.b16 %v527
        %v1937 = vunpack.c.l.b16 %v528
        %v1938 = vunpack.c.h.b16 %v528
        %v1939 = vunpack.c.l.b16 %v529
        %v1940 = vunpack.c.h.b16 %v529
        %v1941 = vunpack.c.l.b16 %v530
        %v1942 = vunpack.c.h.b16 %v530
        %v1943 = vunpack.c.l.b16 %v531
        %v1944 = vunpack.c.h.b16 %v531
        %v1945 = vunpack.c.l.b16 %v532
        %v1946 = vunpack.c.h.b16 %v532
        %v1947 = vunpack.c.l.b16 %v533
        %v1948 = vunpack.c.h.b16 %v533
        %v1949 = vunpack.c.l.b16 %v534
        %v1950 = vunpack.c.h.b16 %v534
        %v1951 = vunpack.c.l.b16 %v535
        %v1952 = vunpack.c.h.b16 %v535
        %v1953 = vunpack.c.l.b16 %v536
        %v1954 = vunpack.c.h.b16 %v536
        %v1955 = vunpack.c.l.b16 %v537
        %v1956 = vunpack.c.h.b16 %v537
        %v1957 = vunpack.c.l.b16 %v538
        %v1958 = vunpack.c.h.b16 %v538
        %v1959 = vunpack.c.l.b16 %v539
        %v1960 = vunpack.c.h.b16 %v539
        %v1961 = vunpack.c.l.b16 %v540
        %v1962 = vunpack.c.h.b16 %v540
        %v1963 = vunpack.c.l.b16 %v541
        %v1964 = vunpack.c.h.b16 %v541
        %v1965 = vunpack.c.l.b16 %v542
        %v1966 = vunpack.c.h.b16 %v542
        %v1967 = vunpack.c.l.b16 %v543
        %v1968 = vunpack.c.h.b16 %v543
        %v1969 = vunpack.c.l.b16 %v544
        %v1970 = vunpack.c.h.b16 %v544
        %v1971 = vunpack.c.l.b16 %v545
        %v1972 = vunpack.c.h.b16 %v545
        %v1973 = vunpack.c.l.b16 %v546
        %v1974 = vunpack.c.h.b16 %v546
        %v1975 = vunpack.c.l.b16 %v547
        %v1976 = vunpack.c.h.b16 %v547
        %v1977 = vunpack.c.l.b16 %v548
        %v1978 = vunpack.c.h.b16 %v548
        %v1979 = vunpack.c.l.b16 %v549
        %v1980 = vunpack.c.h.b16 %v549
        %v1981 = vunpack.c.l.b16 %v550
        %v1982 = vunpack.c.h.b16 %v550
        %v1983 = vunpack.c.l.b16 %v551
        %v1984 = vunpack.c.h.b16 %v551
        %v1985 = vunpack.c.l.b16 %v552
        %v1986 = vunpack.c.h.b16 %v552
        %v1987 = vunpack.c.l.b16 %v553
        %v1988 = vunpack.c.h.b16 %v553
        %v1989 = vunpack.c.l.b16 %v554
        %v1990 = vunpack.c.h.b16 %v554
        %v1991 = vunpack.c.l.b16 %v555
        %v1992 = vunpack.c.h.b16 %v555
        %v1993 = vunpack.c.l.b16 %v556
        %v1994 = vunpack.c.h.b16 %v556
        %v1995 = vunpack.c.l.b16 %v557
        %v1996 = vunpack.c.h.b16 %v557
        %v1997 = vunpack.c.l.b16 %v558
        %v1998 = vunpack.c.h.b16 %v558
        %v1999 = vunpack.c.l.b16 %v559
        %v2000 = vunpack.c.h.b16 %v559
        %v2001 = vunpack.c.l.b16 %v560
        %v2002 = vunpack.c.h.b16 %v560
        %v2003 = vunpack.c.l.b16 %v561
        %v2004 = vunpack.c.h.b16 %v561
        %v2005 = vunpack.c.l.b16 %v562
        %v2006 = vunpack.c.h.b16 %v562
        %v2007 = vunpack.c.l.b16 %v563
        %v2008 = vunpack.c.h.b16 %v563
        %v2009 = vunpack.c.l.b16 %v564
        %v2010 = vunpack.c.h.b16 %v564
        %v2011 = vunpack.c.l.b16 %v565
        %v2012 = vunpack.c.h.b16 %v565
        %v2013 = vunpack.c.l.b16 %v566
        %v2014 = vunpack.c.h.b16 %v566
        %v2015 = vunpack.c.l.b16 %v567
        %v2016 = vunpack.c.h.b16 %v567
        %v2017 = vunpack.c.l.b16 %v568
        %v2018 = vunpack.c.h.b16 %v568
        %v2019 = vunpack.c.l.b16 %v569
        %v2020 = vunpack.c.h.b16 %v569
        %v2021 = vunpack.c.l.b16 %v570
        %v2022 = vunpack.c.h.b16 %v570
        %v2023 = vunpack.c.l.b16 %v571
        %v2024 = vunpack.c.h.b16 %v571
        %v2025 = vunpack.c.l.b16 %v572
        %v2026 = vunpack.c.h.b16 %v572
        %v2027 = vunpack.c.l.b16 %v573
        %v2028 = vunpack.c.h.b16 %v573
        %v2029 = vunpack.c.l.b16 %v574
        %v2030 = vunpack.c.h.b16 %v574
        %v2031 = vunpack.c.l.b16 %v575
        %v2032 = vunpack.c.h.b16 %v575
        %v2033 = vunpack.c.l.b16 %v576
        %v2034 = vunpack.c.h.b16 %v576
        %v2035 = vunpack.c.l.b16 %v577
        %v2036 = vunpack.c.h.b16 %v577
        %v2037 = vunpack.c.l.b16 %v578
        %v2038 = vunpack.c.h.b16 %v578
        %v2039 = vunpack.c.l.b16 %v579
        %v2040 = vunpack.c.h.b16 %v579
        %v2041 = vunpack.c.l.b16 %v580
        %v2042 = vunpack.c.h.b16 %v580
        %v2043 = vunpack.c.l.b16 %v581
        %v2044 = vunpack.c.h.b16 %v581
        %v2045 = vunpack.c.l.b16 %v582
        %v2046 = vunpack.c.h.b16 %v582
        %v2047 = vunpack.c.l.b16 %v583
        %v2048 = vunpack.c.h.b16 %v583
        %v2049 = vunpack.c.l.b16 %v584
        %v2050 = vunpack.c.h.b16 %v584
        %v2051 = vunpack.c.l.b16 %v585
        %v2052 = vunpack.c.h.b16 %v585
        %v2053 = vunpack.c.l.b16 %v586
        %v2054 = vunpack.c.h.b16 %v586
        %v2055 = vunpack.c.l.b16 %v587
        %v2056 = vunpack.c.h.b16 %v587
        %v2057 = vunpack.c.l.b16 %v588
        %v2058 = vunpack.c.h.b16 %v588
        %v2059 = vunpack.c.l.b16 %v589
        %v2060 = vunpack.c.h.b16 %v589
        %v2061 = vunpack.c.l.b16 %v590
        %v2062 = vunpack.c.h.b16 %v590
        %v2063 = vunpack.c.l.b16 %v591
        %v2064 = vunpack.c.h.b16 %v591
        %v2065 = vunpack.c.l.b16 %v592
        %v2066 = vunpack.c.h.b16 %v592
        %v2067 = vunpack.c.l.b16 %v593
        %v2068 = vunpack.c.h.b16 %v593
        %v2069 = vunpack.c.l.b16 %v594
        %v2070 = vunpack.c.h.b16 %v594
        %v2071 = vunpack.c.l.b16 %v595
        %v2072 = vunpack.c.h.b16 %v595
        %v2073 = vunpack.c.l.b16 %v596
        %v2074 = vunpack.c.h.b16 %v596
        %v2075 = vunpack.c.l.b16 %v597
        %v2076 = vunpack.c.h.b16 %v597
        %v2077 = vunpack.c.l.b16 %v598
        %v2078 = vunpack.c.h.b16 %v598
        %v2079 = vunpack.c.l.b16 %v599
        %v2080 = vunpack.c.h.b16 %v599
        %v2081 = vunpack.c.l.b16 %v600
        %v2082 = vunpack.c.h.b16 %v600
        %v2083 = vunpack.c.l.b16 %v601
        %v2084 = vunpack.c.h.b16 %v601
        %v2085 = vunpack.c.l.b16 %v602
        %v2086 = vunpack.c.h.b16 %v602
        %v2087 = vunpack.c.l.b16 %v603
        %v2088 = vunpack.c.h.b16 %v603
        %v2089 = vunpack.c.l.b16 %v604
        %v2090 = vunpack.c.h.b16 %v604
        %v2091 = vunpack.c.l.b16 %v605
        %v2092 = vunpack.c.h.b16 %v605
        %v2093 = vunpack.c.l.b16 %v606
        %v2094 = vunpack.c.h.b16 %v606
        %v2095 = vunpack.c.l.b16 %v607
        %v2096 = vunpack.c.h.b16 %v607
        %v2097 = vunpack.c.l.b16 %v608
        %v2098 = vunpack.c.h.b16 %v608
        %v2099 = vunpack.c.l.b16 %v609
        %v2100 = vunpack.c.h.b16 %v609
        %v2101 = vunpack.c.l.b16 %v610
        %v2102 = vunpack.c.h.b16 %v610
        %v2103 = vunpack.c.l.b16 %v611
        %v2104 = vunpack.c.h.b16 %v611
        %v2105 = vunpack.c.l.b16 %v612
        %v2106 = vunpack.c.h.b16 %v612
        %v2107 = vunpack.c.l.b16 %v613
        %v2108 = vunpack.c.h.b16 %v613
        %v2109 = vunpack.c.l.b16 %v614
        %v2110 = vunpack.c.h.b16 %v614
        %v2111 = vunpack.c.l.b16 %v615
        %v2112 = vunpack.c.h.b16 %v615
        %v2113 = vunpack.c.l.b16 %v616
        %v2114 = vunpack.c.h.b16 %v616
        %v2115 = vunpack.c.l.b16 %v617
        %v2116 = vunpack.c.h.b16 %v617
        %v2117 = vunpack.c.l.b16 %v618
        %v2118 = vunpack.c.h.b16 %v618
        %v2119 = vunpack.c.l.b16 %v619
        %v2120 = vunpack.c.h.b16 %v619
        %v2121 = vunpack.c.l.b16 %v620
        %v2122 = vunpack.c.h.b16 %v620
        %v2123 = vunpack.c.l.b16 %v621
        %v2124 = vunpack.c.h.b16 %v621
        %v2125 = vunpack.c.l.b16 %v622
        %v2126 = vunpack.c.h.b16 %v622
        %v2127 = vunpack.c.l.b16 %v623
        %v2128 = vunpack.c.h.b16 %v623
        %v2129 = vunpack.c.l.b16 %v624
        %v2130 = vunpack.c.h.b16 %v624
        %v2131 = vunpack.c.l.b16 %v625
        %v2132 = vunpack.c.h.b16 %v625
        %v2133 = vunpack.c.l.b16 %v626
        %v2134 = vunpack.c.h.b16 %v626
        %v2135 = vunpack.c.l.b16 %v627
        %v2136 = vunpack.c.h.b16 %v627
        %v2137 = vunpack.c.l.b16 %v628
        %v2138 = vunpack.c.h.b16 %v628
        %v2139 = vunpack.c.l.b16 %v629
        %v2140 = vunpack.c.h.b16 %v629
        %v2141 = vunpack.c.l.b16 %v630
        %v2142 = vunpack.c.h.b16 %v630
        %v2143 = vunpack.c.l.b16 %v631
        %v2144 = vunpack.c.h.b16 %v631
        %v2145 = vunpack.c.l.b16 %v632
        %v2146 = vunpack.c.h.b16 %v632
        %v2147 = vunpack.c.l.b16 %v633
        %v2148 = vunpack.c.h.b16 %v633
        %v2149 = vunpack.c.l.b16 %v634
        %v2150 = vunpack.c.h.b16 %v634
        %v2151 = vunpack.c.l.b16 %v635
        %v2152 = vunpack.c.h.b16 %v635
        %v2153 = vunpack.c.l.b16 %v636
        %v2154 = vunpack.c.h.b16 %v636
        %v2155 = vunpack.c.l.b16 %v637
        %v2156 = vunpack.c.h.b16 %v637
        %v2157 = vunpack.c.l.b16 %v638
        %v2158 = vunpack.c.h.b16 %v638
        %v2159 = vunpack.c.l.b16 %v639
        %v2160 = vunpack.c.h.b16 %v639
        %v2161 = vunpack.c.l.b16 %v640
        %v2162 = vunpack.c.h.b16 %v640
        %v2163 = vunpack.c.l.b16 %v641
        %v2164 = vunpack.c.h.b16 %v641
        %v2165 = vunpack.c.l.b16 %v642
        %v2166 = vunpack.c.h.b16 %v642
        %v2167 = vunpack.c.l.b16 %v643
        %v2168 = vunpack.c.h.b16 %v643
        %v2169 = vunpack.c.l.b16 %v644
        %v2170 = vunpack.c.h.b16 %v644
        %v2171 = vunpack.c.l.b16 %v645
        %v2172 = vunpack.c.h.b16 %v645
        %v2173 = vunpack.c.l.b16 %v646
        %v2174 = vunpack.c.h.b16 %v646
        %v2175 = vunpack.c.l.b16 %v647
        %v2176 = vunpack.c.h.b16 %v647
        %v2177 = vunpack.c.l.b16 %v648
        %v2178 = vunpack.c.h.b16 %v648
        %v2179 = vunpack.c.l.b16 %v649
        %v2180 = vunpack.c.h.b16 %v649
        %v2181 = vunpack.c.l.b16 %v650
        %v2182 = vunpack.c.h.b16 %v650
        %v2183 = vunpack.c.l.b16 %v651
        %v2184 = vunpack.c.h.b16 %v651
        %v2185 = vunpack.c.l.b16 %v652
        %v2186 = vunpack.c.h.b16 %v652
        %v2187 = vunpack.c.l.b16 %v653
        %v2188 = vunpack.c.h.b16 %v653
        %v2189 = vunpack.c.l.b16 %v654
        %v2190 = vunpack.c.h.b16 %v654
        %v2191 = vunpack.c.l.b16 %v655
        %v2192 = vunpack.c.h.b16 %v655
        %v2193 = vunpack.c.l.b16 %v656
        %v2194 = vunpack.c.h.b16 %v656
        %v2195 = vunpack.c.l.b16 %v657
        %v2196 = vunpack.c.h.b16 %v657
        %v2197 = vunpack.c.l.b16 %v658
        %v2198 = vunpack.c.h.b16 %v658
        %v2199 = vunpack.c.l.b16 %v659
        %v2200 = vunpack.c.h.b16 %v659
        %v2201 = vunpack.c.l.b16 %v660
        %v2202 = vunpack.c.h.b16 %v660
        %v2203 = vunpack.c.l.b16 %v661
        %v2204 = vunpack.c.h.b16 %v661
        %v2205 = vunpack.c.l.b16 %v662
        %v2206 = vunpack.c.h.b16 %v662
        %v2207 = vunpack.c.l.b16 %v663
        %v2208 = vunpack.c.h.b16 %v663
        %v2209 = vunpack.c.l.b16 %v664
        %v2210 = vunpack.c.h.b16 %v664
        %v2211 = vunpack.c.l.b16 %v665
        %v2212 = vunpack.c.h.b16 %v665
        %v2213 = vunpack.c.l.b16 %v666
        %v2214 = vunpack.c.h.b16 %v666
        %v2215 = vunpack.c.l.b16 %v667
        %v2216 = vunpack.c.h.b16 %v667
        %v2217 = vunpack.c.l.b16 %v668
        %v2218 = vunpack.c.h.b16 %v668
        %v2219 = vunpack.c.l.b16 %v669
        %v2220 = vunpack.c.h.b16 %v669
        %v2221 = vunpack.c.l.b16 %v670
        %v2222 = vunpack.c.h.b16 %v670
        %v2223 = vunpack.c.l.b16 %v671
        %v2224 = vunpack.c.h.b16 %v671
        %v2225 = vunpack.c.l.b16 %v672
        %v2226 = vunpack.c.h.b16 %v672
        %v2227 = vunpack.c.l.b16 %v673
        %v2228 = vunpack.c.h.b16 %v673
        %v2229 = vunpack.c.l.b16 %v674
        %v2230 = vunpack.c.h.b16 %v674
        %v2231 = vunpack.c.l.b16 %v675
        %v2232 = vunpack.c.h.b16 %v675
        %v2233 = vunpack.c.l.b16 %v676
        %v2234 = vunpack.c.h.b16 %v676
        %v2235 = vunpack.c.l.b16 %v677
        %v2236 = vunpack.c.h.b16 %v677
        %v2237 = vunpack.c.l.b16 %v678
        %v2238 = vunpack.c.h.b16 %v678
        %v2239 = vunpack.c.l.b16 %v679
        %v2240 = vunpack.c.h.b16 %v679
        %v2241 = vunpack.c.l.b16 %v680
        %v2242 = vunpack.c.h.b16 %v680
        %v2243 = vunpack.c.l.b16 %v681
        %v2244 = vunpack.c.h.b16 %v681
        %v2245 = vunpack.c.l.b16 %v682
        %v2246 = vunpack.c.h.b16 %v682
        %v2247 = vunpack.c.l.b16 %v683
        %v2248 = vunpack.c.h.b16 %v683
        %v2249 = vunpack.c.l.b16 %v684
        %v2250 = vunpack.c.h.b16 %v684
        %v2251 = vunpack.c.l.b16 %v685
        %v2252 = vunpack.c.h.b16 %v685
        %v2253 = vunpack.c.l.b16 %v686
        %v2254 = vunpack.c.h.b16 %v686
        %v2255 = vunpack.c.l.b16 %v687
        %v2256 = vunpack.c.h.b16 %v687
        %v2257 = vunpack.c.l.b16 %v688
        %v2258 = vunpack.c.h.b16 %v688
        %v2259 = vunpack.c.l.b16 %v689
        %v2260 = vunpack.c.h.b16 %v689
        %v2261 = vunpack.c.l.b16 %v690
        %v2262 = vunpack.c.h.b16 %v690
        %v2263 = vunpack.c.l.b16 %v691
        %v2264 = vunpack.c.h.b16 %v691
        %v2265 = vunpack.c.l.b16 %v692
        %v2266 = vunpack.c.h.b16 %v692
        %v2267 = vunpack.c.l.b16 %v693
        %v2268 = vunpack.c.h.b16 %v693
        %v2269 = vunpack.c.l.b16 %v694
        %v2270 = vunpack.c.h.b16 %v694
        %v2271 = vunpack.c.l.b16 %v695
        %v2272 = vunpack.c.h.b16 %v695
        %v2273 = vunpack.c.l.b16 %v696
        %v2274 = vunpack.c.h.b16 %v696
        %v2275 = vunpack.c.l.b16 %v697
        %v2276 = vunpack.c.h.b16 %v697
        %v2277 = vunpack.c.l.b16 %v698
        %v2278 = vunpack.c.h.b16 %v698
        %v2279 = vunpack.c.l.b16 %v699
        %v2280 = vunpack.c.h.b16 %v699
        %v2281 = vunpack.c.l.b16 %v700
        %v2282 = vunpack.c.h.b16 %v700
        %v2283 = vunpack.c.l.b16 %v701
        %v2284 = vunpack.c.h.b16 %v701
        %v2285 = vunpack.c.l.b16 %v702
        %v2286 = vunpack.c.h.b16 %v702
        %v2287 = vunpack.c.l.b16 %v703
        %v2288 = vunpack.c.h.b16 %v703
        %v2289 = vunpack.c.l.b16 %v704
        %v2290 = vunpack.c.h.b16 %v704
        %v2291 = vunpack.c.l.b16 %v705
        %v2292 = vunpack.c.h.b16 %v705
        %v2293 = vunpack.c.l.b16 %v706
        %v2294 = vunpack.c.h.b16 %v706
        %v2295 = vunpack.c.l.b16 %v707
        %v2296 = vunpack.c.h.b16 %v707
        %v2297 = vunpack.c.l.b16 %v708
        %v2298 = vunpack.c.h.b16 %v708
        %v2299 = vunpack.c.l.b16 %v709
        %v2300 = vunpack.c.h.b16 %v709
        %v2301 = vunpack.c.l.b16 %v710
        %v2302 = vunpack.c.h.b16 %v710
        %v2303 = vunpack.c.l.b16 %v711
        %v2304 = vunpack.c.h.b16 %v711
        %v2305 = vunpack.c.l.b16 %v712
        %v2306 = vunpack.c.h.b16 %v712
        %v2307 = vunpack.c.l.b16 %v713
        %v2308 = vunpack.c.h.b16 %v713
        %v2309 = vunpack.c.l.b16 %v714
        %v2310 = vunpack.c.h.b16 %v714
        %v2311 = vunpack.c.l.b16 %v715
        %v2312 = vunpack.c.h.b16 %v715
        %v2313 = vunpack.c.l.b16 %v716
        %v2314 = vunpack.c.h.b16 %v716
        %v2315 = vunpack.c.l.b16 %v717
        %v2316 = vunpack.c.h.b16 %v717
        %v2317 = vunpack.c.l.b16 %v718
        %v2318 = vunpack.c.h.b16 %v718
        %v2319 = vunpack.c.l.b16 %v719
        %v2320 = vunpack.c.h.b16 %v719
        %v2321 = vunpack.c.l.b16 %v720
        %v2322 = vunpack.c.h.b16 %v720
        %v2323 = vunpack.c.l.b16 %v721
        %v2324 = vunpack.c.h.b16 %v721
        %v2325 = vunpack.c.l.b16 %v722
        %v2326 = vunpack.c.h.b16 %v722
        %v2327 = vunpack.c.l.b16 %v723
        %v2328 = vunpack.c.h.b16 %v723
        %v2329 = vunpack.c.l.b16 %v724
        %v2330 = vunpack.c.h.b16 %v724
        %v2331 = vunpack.c.l.b16 %v725
        %v2332 = vunpack.c.h.b16 %v725
        %v2333 = vunpack.c.l.b16 %v726
        %v2334 = vunpack.c.h.b16 %v726
        %v2335 = vunpack.c.l.b16 %v727
        %v2336 = vunpack.c.h.b16 %v727
        %v2337 = vunpack.c.l.b16 %v728
        %v2338 = vunpack.c.h.b16 %v728
        %v2339 = vunpack.c.l.b16 %v729
        %v2340 = vunpack.c.h.b16 %v729
        %v2341 = vunpack.c.l.b16 %v730
        %v2342 = vunpack.c.h.b16 %v730
        %v2343 = vunpack.c.l.b16 %v731
        %v2344 = vunpack.c.h.b16 %v731
        %v2345 = vunpack.c.l.b16 %v732
        %v2346 = vunpack.c.h.b16 %v732
        %v2347 = vunpack.c.l.b16 %v733
        %v2348 = vunpack.c.h.b16 %v733
        %v2349 = vunpack.c.l.b16 %v734
        %v2350 = vunpack.c.h.b16 %v734
        %v2351 = vunpack.c.l.b16 %v735
        %v2352 = vunpack.c.h.b16 %v735
        %v2353 = vunpack.c.l.b16 %v736
        %v2354 = vunpack.c.h.b16 %v736
        %v2355 = vunpack.c.l.b16 %v737
        %v2356 = vunpack.c.h.b16 %v737
        %v2357 = vunpack.c.l.b16 %v738
        %v2358 = vunpack.c.h.b16 %v738
        %v2359 = vunpack.c.l.b16 %v739
        %v2360 = vunpack.c.h.b16 %v739
        %v2361 = vunpack.c.l.b16 %v740
        %v2362 = vunpack.c.h.b16 %v740
        %v2363 = vunpack.c.l.b16 %v741
        %v2364 = vunpack.c.h.b16 %v741
        %v2365 = vunpack.c.l.b16 %v742
        %v2366 = vunpack.c.h.b16 %v742
        %v2367 = vunpack.c.l.b16 %v743
        %v2368 = vunpack.c.h.b16 %v743
        %v2369 = vunpack.c.l.b16 %v744
        %v2370 = vunpack.c.h.b16 %v744
        %v2371 = vunpack.c.l.b16 %v745
        %v2372 = vunpack.c.h.b16 %v745
        %v2373 = vunpack.c.l.b16 %v746
        %v2374 = vunpack.c.h.b16 %v746
        %v2375 = vunpack.c.l.b16 %v747
        %v2376 = vunpack.c.h.b16 %v747
        %v2377 = vunpack.c.l.b16 %v748
        %v2378 = vunpack.c.h.b16 %v748
        %v2379 = vunpack.c.l.b16 %v749
        %v2380 = vunpack.c.h.b16 %v749
        %v2381 = vunpack.c.l.b16 %v750
        %v2382 = vunpack.c.h.b16 %v750
        %v2383 = vunpack.c.l.b16 %v751
        %v2384 = vunpack.c.h.b16 %v751
        %v2385 = vunpack.c.l.b16 %v752
        %v2386 = vunpack.c.h.b16 %v752
        %v2387 = vunpack.c.l.b16 %v753
        %v2388 = vunpack.c.h.b16 %v753
        %v2389 = vunpack.c.l.b16 %v754
        %v2390 = vunpack.c.h.b16 %v754
        %v2391 = vunpack.c.l.b16 %v755
        %v2392 = vunpack.c.h.b16 %v755
        %v2393 = vunpack.c.l.b16 %v756
        %v2394 = vunpack.c.h.b16 %v756
        %v2395 = vunpack.c.l.b16 %v757
        %v2396 = vunpack.c.h.b16 %v757
        %v2397 = vunpack.c.l.b16 %v758
        %v2398 = vunpack.c.h.b16 %v758
        %v2399 = vunpack.c.l.b16 %v759
        %v2400 = vunpack.c.h.b16 %v759
        %v2401 = vunpack.c.l.b16 %v760
        %v2402 = vunpack.c.h.b16 %v760
        %v2403 = vunpack.c.l.b16 %v761
        %v2404 = vunpack.c.h.b16 %v761
        %v2405 = vunpack.c.l.b16 %v762
        %v2406 = vunpack.c.h.b16 %v762
        %v2407 = vunpack.c.l.b16 %v763
        %v2408 = vunpack.c.h.b16 %v763
        %v2409 = vunpack.c.l.b16 %v764
        %v2410 = vunpack.c.h.b16 %v764
        %v2411 = vunpack.c.l.b16 %v765
        %v2412 = vunpack.c.h.b16 %v765
        %v2413 = vunpack.c.l.b16 %v766
        %v2414 = vunpack.c.h.b16 %v766
        %v2415 = vunpack.c.l.b16 %v767
        %v2416 = vunpack.c.h.b16 %v767
        %v2417 = vunpack.c.l.b16 %v768
        %v2418 = vunpack.c.h.b16 %v768
        %v2419 = vunpack.c.l.b16 %v769
        %v2420 = vunpack.c.h.b16 %v769
        %v2421 = vunpack.c.l.b16 %v770
        %v2422 = vunpack.c.h.b16 %v770
        %v2423 = vunpack.c.l.b16 %v771
        %v2424 = vunpack.c.h.b16 %v771
        %v2425 = vunpack.c.l.b16 %v772
        %v2426 = vunpack.c.h.b16 %v772
        %v2427 = vunpack.c.l.b16 %v773
        %v2428 = vunpack.c.h.b16 %v773
        %v2429 = vunpack.c.l.b16 %v774
        %v2430 = vunpack.c.h.b16 %v774
        %v2431 = vunpack.c.l.b16 %v775
        %v2432 = vunpack.c.h.b16 %v775
        %v2433 = vunpack.c.l.b16 %v776
        %v2434 = vunpack.c.h.b16 %v776
        %v2435 = vunpack.c.l.b16 %v777
        %v2436 = vunpack.c.h.b16 %v777
        %v2437 = vunpack.c.l.b16 %v778
        %v2438 = vunpack.c.h.b16 %v778
        %v2439 = vunpack.c.l.b16 %v779
        %v2440 = vunpack.c.h.b16 %v779
        %v2441 = vunpack.c.l.b16 %v780
        %v2442 = vunpack.c.h.b16 %v780
        %v2443 = vunpack.c.l.b16 %v781
        %v2444 = vunpack.c.h.b16 %v781
        %v2445 = vunpack.c.l.b16 %v782
        %v2446 = vunpack.c.h.b16 %v782
        %v2447 = vunpack.c.l.b16 %v783
        %v2448 = vunpack.c.h.b16 %v783
        %v2449 = vunpack.c.l.b16 %v784
        %v2450 = vunpack.c.h.b16 %v784
        %v2451 = vunpack.c.l.b16 %v785
        %v2452 = vunpack.c.h.b16 %v785
        %v2453 = vunpack.c.l.b16 %v786
        %v2454 = vunpack.c.h.b16 %v786
        %v2455 = vunpack.c.l.b16 %v787
        %v2456 = vunpack.c.h.b16 %v787
        %v2457 = vunpack.c.l.b16 %v788
        %v2458 = vunpack.c.h.b16 %v788
        %v2459 = vunpack.c.l.b16 %v789
        %v2460 = vunpack.c.h.b16 %v789
        %v2461 = vunpack.c.l.b16 %v790
        %v2462 = vunpack.c.h.b16 %v790
        %v2463 = vunpack.c.l.b16 %v791
        %v2464 = vunpack.c.h.b16 %v791
        %v2465 = vunpack.c.l.b16 %v792
        %v2466 = vunpack.c.h.b16 %v792
        %v2467 = vunpack.c.l.b16 %v793
        %v2468 = vunpack.c.h.b16 %v793
        %v2469 = vunpack.c.l.b16 %v794
        %v2470 = vunpack.c.h.b16 %v794
        %v2471 = vunpack.c.l.b16 %v795
        %v2472 = vunpack.c.h.b16 %v795
        %v2473 = vunpack.c.l.b16 %v796
        %v2474 = vunpack.c.h.b16 %v796
        %v2475 = vunpack.c.l.b16 %v797
        %v2476 = vunpack.c.h.b16 %v797
        %v2477 = vunpack.c.l.b16 %v798
        %v2478 = vunpack.c.h.b16 %v798
        %v2479 = vunpack.c.l.b16 %v799
        %v2480 = vunpack.c.h.b16 %v799
        %v2481 = vunpack.c.l.b16 %v800
        %v2482 = vunpack.c.h.b16 %v800
        %v2483 = vunpack.c.l.b16 %v801
        %v2484 = vunpack.c.h.b16 %v801
        %v2485 = vunpack.c.l.b16 %v802
        %v2486 = vunpack.c.h.b16 %v802
        %v2487 = vunpack.c.l.b16 %v803
        %v2488 = vunpack.c.h.b16 %v803
        %v2489 = vunpack.c.l.b16 %v804
        %v2490 = vunpack.c.h.b16 %v804
        %v2491 = vunpack.c.l.b16 %v805
        %v2492 = vunpack.c.h.b16 %v805
        %v2493 = vunpack.c.l.b16 %v806
        %v2494 = vunpack.c.h.b16 %v806
        %v2495 = vunpack.c.l.b16 %v807
        %v2496 = vunpack.c.h.b16 %v807
        %v2497 = vunpack.c.l.b16 %v808
        %v2498 = vunpack.c.h.b16 %v808
        %v2499 = vunpack.c.l.b16 %v809
        %v2500 = vunpack.c.h.b16 %v809
        %v2501 = vunpack.c.l.b16 %v810
        %v2502 = vunpack.c.h.b16 %v810
        %v2503 = vunpack.c.l.b16 %v811
        %v2504 = vunpack.c.h.b16 %v811
        %v2505 = vunpack.c.l.b16 %v812
        %v2506 = vunpack.c.h.b16 %v812
        %v2507 = vunpack.c.l.b16 %v813
        %v2508 = vunpack.c.h.b16 %v813
        %v2509 = vunpack.c.l.b16 %v814
        %v2510 = vunpack.c.h.b16 %v814
        %v2511 = vpack.c.b16 %v1503, %v1487
        %v2512 = vpack.c.b16 %v1504, %v1488
        %v2513 = vpack.c.b16 %v1505, %v1489
        %v2514 = vpack.c.b16 %v1506, %v1490
        %v2515 = vpack.c.b16 %v1507, %v1491
        %v2516 = vpack.c.b16 %v1508, %v1492
        %v2517 = vpack.c.b16 %v1509, %v1493
        %v2518 = vpack.c.b16 %v1510, %v1494
        %v2519 = vpack.c.b16 %v1511, %v1495
        %v2520 = vpack.c.b16 %v1512, %v1496
        %v2521 = vpack.c.b16 %v1513, %v1497
        %v2522 = vpack.c.b16 %v1514, %v1498
        %v2523 = vpack.c.b16 %v1515, %v1499
        %v2524 = vpack.c.b16 %v1516, %v1500
        %v2525 = vpack.c.b16 %v1517, %v1501
        %v2526 = vpack.c.b16 %v1518, %v1502
        %v2527 = vpack.c.b16 %v1535, %v1519
        %v2528 = vpack.c.b16 %v1536, %v1520
        %v2529 = vpack.c.b16 %v1537, %v1521
        %v2530 = vpack.c.b16 %v1538, %v1522
        %v2531 = vpack.c.b16 %v1539, %v1523
        %v2532 = vpack.c.b16 %v1540, %v1524
        %v2533 = vpack.c.b16 %v1541, %v1525
        %v2534 = vpack.c.b16 %v1542, %v1526
        %v2535 = vpack.c.b16 %v1543, %v1527
        %v2536 = vpack.c.b16 %v1544, %v1528
        %v2537 = vpack.c.b16 %v1545, %v1529
        %v2538 = vpack.c.b16 %v1546, %v1530
        %v2539 = vpack.c.b16 %v1547, %v1531
        %v2540 = vpack.c.b16 %v1548, %v1532
        %v2541 = vpack.c.b16 %v1549, %v1533
        %v2542 = vpack.c.b16 %v1550, %v1534
        %v2543 = vpack.c.b16 %v1567, %v1551
        %v2544 = vpack.c.b16 %v1568, %v1552
        %v2545 = vpack.c.b16 %v1569, %v1553
        %v2546 = vpack.c.b16 %v1570, %v1554
        %v2547 = vpack.c.b16 %v1571, %v1555
        %v2548 = vpack.c.b16 %v1572, %v1556
        %v2549 = vpack.c.b16 %v1573, %v1557
        %v2550 = vpack.c.b16 %v1574, %v1558
        %v2551 = vpack.c.b16 %v1575, %v1559
        %v2552 = vpack.c.b16 %v1576, %v1560
        %v2553 = vpack.c.b16 %v1577, %v1561
        %v2554 = vpack.c.b16 %v1578, %v1562
        %v2555 = vpack.c.b16 %v1579, %v1563
        %v2556 = vpack.c.b16 %v1580, %v1564
        %v2557 = vpack.c.b16 %v1581, %v1565
        %v2558 = vpack.c.b16 %v1582, %v1566
        %v2559 = vpack.c.b16 %v1599, %v1583
        %v2560 = vpack.c.b16 %v1600, %v1584
        %v2561 = vpack.c.b16 %v1601, %v1585
        %v2562 = vpack.c.b16 %v1602, %v1586
        %v2563 = vpack.c.b16 %v1603, %v1587
        %v2564 = vpack.c.b16 %v1604, %v1588
        %v2565 = vpack.c.b16 %v1605, %v1589
        %v2566 = vpack.c.b16 %v1606, %v1590
        %v2567 = vpack.c.b16 %v1607, %v1591
        %v2568 = vpack.c.b16 %v1608, %v1592
        %v2569 = vpack.c.b16 %v1609, %v1593
        %v2570 = vpack.c.b16 %v1610, %v1594
        %v2571 = vpack.c.b16 %v1611, %v1595
        %v2572 = vpack.c.b16 %v1612, %v1596
        %v2573 = vpack.c.b16 %v1613, %v1597
        %v2574 = vpack.c.b16 %v1614, %v1598
        %v2575 = vpack.c.b16 %v1631, %v1615
        %v2576 = vpack.c.b16 %v1632, %v1616
        %v2577 = vpack.c.b16 %v1633, %v1617
        %v2578 = vpack.c.b16 %v1634, %v1618
        %v2579 = vpack.c.b16 %v1635, %v1619
        %v2580 = vpack.c.b16 %v1636, %v1620
        %v2581 = vpack.c.b16 %v1637, %v1621
        %v2582 = vpack.c.b16 %v1638, %v1622
        %v2583 = vpack.c.b16 %v1639, %v1623
        %v2584 = vpack.c.b16 %v1640, %v1624
        %v2585 = vpack.c.b16 %v1641, %v1625
        %v2586 = vpack.c.b16 %v1642, %v1626
        %v2587 = vpack.c.b16 %v1643, %v1627
        %v2588 = vpack.c.b16 %v1644, %v1628
        %v2589 = vpack.c.b16 %v1645, %v1629
        %v2590 = vpack.c.b16 %v1646, %v1630
        %v2591 = vpack.c.b16 %v1663, %v1647
        %v2592 = vpack.c.b16 %v1664, %v1648
        %v2593 = vpack.c.b16 %v1665, %v1649
        %v2594 = vpack.c.b16 %v1666, %v1650
        %v2595 = vpack.c.b16 %v1667, %v1651
        %v2596 = vpack.c.b16 %v1668, %v1652
        %v2597 = vpack.c.b16 %v1669, %v1653
        %v2598 = vpack.c.b16 %v1670, %v1654
        %v2599 = vpack.c.b16 %v1671, %v1655
        %v2600 = vpack.c.b16 %v1672, %v1656
        %v2601 = vpack.c.b16 %v1673, %v1657
        %v2602 = vpack.c.b16 %v1674, %v1658
        %v2603 = vpack.c.b16 %v1675, %v1659
        %v2604 = vpack.c.b16 %v1676, %v1660
        %v2605 = vpack.c.b16 %v1677, %v1661
        %v2606 = vpack.c.b16 %v1678, %v1662
        %v2607 = vpack.c.b16 %v1695, %v1679
        %v2608 = vpack.c.b16 %v1696, %v1680
        %v2609 = vpack.c.b16 %v1697, %v1681
        %v2610 = vpack.c.b16 %v1698, %v1682
        %v2611 = vpack.c.b16 %v1699, %v1683
        %v2612 = vpack.c.b16 %v1700, %v1684
        %v2613 = vpack.c.b16 %v1701, %v1685
        %v2614 = vpack.c.b16 %v1702, %v1686
        %v2615 = vpack.c.b16 %v1703, %v1687
        %v2616 = vpack.c.b16 %v1704, %v1688
        %v2617 = vpack.c.b16 %v1705, %v1689
        %v2618 = vpack.c.b16 %v1706, %v1690
        %v2619 = vpack.c.b16 %v1707, %v1691
        %v2620 = vpack.c.b16 %v1708, %v1692
        %v2621 = vpack.c.b16 %v1709, %v1693
        %v2622 = vpack.c.b16 %v1710, %v1694
        %v2623 = vpack.c.b16 %v1727, %v1711
        %v2624 = vpack.c.b16 %v1728, %v1712
        %v2625 = vpack.c.b16 %v1729, %v1713
        %v2626 = vpack.c.b16 %v1730, %v1714
        %v2627 = vpack.c.b16 %v1731, %v1715
        %v2628 = vpack.c.b16 %v1732, %v1716
        %v2629 = vpack.c.b16 %v1733, %v1717
        %v2630 = vpack.c.b16 %v1734, %v1718
        %v2631 = vpack.c.b16 %v1735, %v1719
        %v2632 = vpack.c.b16 %v1736, %v1720
        %v2633 = vpack.c.b16 %v1737, %v1721
        %v2634 = vpack.c.b16 %v1738, %v1722
        %v2635 = vpack.c.b16 %v1739, %v1723
        %v2636 = vpack.c.b16 %v1740, %v1724
        %v2637 = vpack.c.b16 %v1741, %v1725
        %v2638 = vpack.c.b16 %v1742, %v1726
        %v2639 = vpack.c.b16 %v1759, %v1743
        %v2640 = vpack.c.b16 %v1760, %v1744
        %v2641 = vpack.c.b16 %v1761, %v1745
        %v2642 = vpack.c.b16 %v1762, %v1746
        %v2643 = vpack.c.b16 %v1763, %v1747
        %v2644 = vpack.c.b16 %v1764, %v1748
        %v2645 = vpack.c.b16 %v1765, %v1749
        %v2646 = vpack.c.b16 %v1766, %v1750
        %v2647 = vpack.c.b16 %v1767, %v1751
        %v2648 = vpack.c.b16 %v1768, %v1752
        %v2649 = vpack.c.b16 %v1769, %v1753
        %v2650 = vpack.c.b16 %v1770, %v1754
        %v2651 = vpack.c.b16 %v1771, %v1755
        %v2652 = vpack.c.b16 %v1772, %v1756
        %v2653 = vpack.c.b16 %v1773, %v1757
        %v2654 = vpack.c.b16 %v1774, %v1758
        %v2655 = vpack.c.b16 %v1791, %v1775
        %v2656 = vpack.c.b16 %v1792, %v1776
        %v2657 = vpack.c.b16 %v1793, %v1777
        %v2658 = vpack.c.b16 %v1794, %v1778
        %v2659 = vpack.c.b16 %v1795, %v1779
        %v2660 = vpack.c.b16 %v1796, %v1780
        %v2661 = vpack.c.b16 %v1797, %v1781
        %v2662 = vpack.c.b16 %v1798, %v1782
        %v2663 = vpack.c.b16 %v1799, %v1783
        %v2664 = vpack.c.b16 %v1800, %v1784
        %v2665 = vpack.c.b16 %v1801, %v1785
        %v2666 = vpack.c.b16 %v1802, %v1786
        %v2667 = vpack.c.b16 %v1803, %v1787
        %v2668 = vpack.c.b16 %v1804, %v1788
        %v2669 = vpack.c.b16 %v1805, %v1789
        %v2670 = vpack.c.b16 %v1806, %v1790
        %v2671 = vpack.c.b16 %v1823, %v1807
        %v2672 = vpack.c.b16 %v1824, %v1808
        %v2673 = vpack.c.b16 %v1825, %v1809
        %v2674 = vpack.c.b16 %v1826, %v1810
        %v2675 = vpack.c.b16 %v1827, %v1811
        %v2676 = vpack.c.b16 %v1828, %v1812
        %v2677 = vpack.c.b16 %v1829, %v1813
        %v2678 = vpack.c.b16 %v1830, %v1814
        %v2679 = vpack.c.b16 %v1831, %v1815
        %v2680 = vpack.c.b16 %v1832, %v1816
        %v2681 = vpack.c.b16 %v1833, %v1817
        %v2682 = vpack.c.b16 %v1834, %v1818
        %v2683 = vpack.c.b16 %v1835, %v1819
        %v2684 = vpack.c.b16 %v1836, %v1820
        %v2685 = vpack.c.b16 %v1837, %v1821
        %v2686 = vpack.c.b16 %v1838, %v1822
        %v2687 = vpack.c.b16 %v1855, %v1839
        %v2688 = vpack.c.b16 %v1856, %v1840
        %v2689 = vpack.c.b16 %v1857, %v1841
        %v2690 = vpack.c.b16 %v1858, %v1842
        %v2691 = vpack.c.b16 %v1859, %v1843
        %v2692 = vpack.c.b16 %v1860, %v1844
        %v2693 = vpack.c.b16 %v1861, %v1845
        %v2694 = vpack.c.b16 %v1862, %v1846
        %v2695 = vpack.c.b16 %v1863, %v1847
        %v2696 = vpack.c.b16 %v1864, %v1848
        %v2697 = vpack.c.b16 %v1865, %v1849
        %v2698 = vpack.c.b16 %v1866, %v1850
        %v2699 = vpack.c.b16 %v1867, %v1851
        %v2700 = vpack.c.b16 %v1868, %v1852
        %v2701 = vpack.c.b16 %v1869, %v1853
        %v2702 = vpack.c.b16 %v1870, %v1854
        %v2703 = vpack.c.b16 %v1887, %v1871
        %v2704 = vpack.c.b16 %v1888, %v1872
        %v2705 = vpack.c.b16 %v1889, %v1873
        %v2706 = vpack.c.b16 %v1890, %v1874
        %v2707 = vpack.c.b16 %v1891, %v1875
        %v2708 = vpack.c.b16 %v1892, %v1876
        %v2709 = vpack.c.b16 %v1893, %v1877
        %v2710 = vpack.c.b16 %v1894, %v1878
        %v2711 = vpack.c.b16 %v1895, %v1879
        %v2712 = vpack.c.b16 %v1896, %v1880
        %v2713 = vpack.c.b16 %v1897, %v1881
        %v2714 = vpack.c.b16 %v1898, %v1882
        %v2715 = vpack.c.b16 %v1899, %v1883
        %v2716 = vpack.c.b16 %v1900, %v1884
        %v2717 = vpack.c.b16 %v1901, %v1885
        %v2718 = vpack.c.b16 %v1902, %v1886
        %v2719 = vpack.c.b16 %v1919, %v1903
        %v2720 = vpack.c.b16 %v1920, %v1904
        %v2721 = vpack.c.b16 %v1921, %v1905
        %v2722 = vpack.c.b16 %v1922, %v1906
        %v2723 = vpack.c.b16 %v1923, %v1907
        %v2724 = vpack.c.b16 %v1924, %v1908
        %v2725 = vpack.c.b16 %v1925, %v1909
        %v2726 = vpack.c.b16 %v1926, %v1910
        %v2727 = vpack.c.b16 %v1927, %v1911
        %v2728 = vpack.c.b16 %v1928, %v1912
        %v2729 = vpack.c.b16 %v1929, %v1913
        %v2730 = vpack.c.b16 %v1930, %v1914
        %v2731 = vpack.c.b16 %v1931, %v1915
        %v2732 = vpack.c.b16 %v1932, %v1916
        %v2733 = vpack.c.b16 %v1933, %v1917
        %v2734 = vpack.c.b16 %v1934, %v1918
        %v2735 = vpack.c.b16 %v1951, %v1935
        %v2736 = vpack.c.b16 %v1952, %v1936
        %v2737 = vpack.c.b16 %v1953, %v1937
        %v2738 = vpack.c.b16 %v1954, %v1938
        %v2739 = vpack.c.b16 %v1955, %v1939
        %v2740 = vpack.c.b16 %v1956, %v1940
        %v2741 = vpack.c.b16 %v1957, %v1941
        %v2742 = vpack.c.b16 %v1958, %v1942
        %v2743 = vpack.c.b16 %v1959, %v1943
        %v2744 = vpack.c.b16 %v1960, %v1944
        %v2745 = vpack.c.b16 %v1961, %v1945
        %v2746 = vpack.c.b16 %v1962, %v1946
        %v2747 = vpack.c.b16 %v1963, %v1947
        %v2748 = vpack.c.b16 %v1964, %v1948
        %v2749 = vpack.c.b16 %v1965, %v1949
        %v2750 = vpack.c.b16 %v1966, %v1950
        %v2751 = vpack.c.b16 %v1983, %v1967
        %v2752 = vpack.c.b16 %v1984, %v1968
        %v2753 = vpack.c.b16 %v1985, %v1969
        %v2754 = vpack.c.b16 %v1986, %v1970
        %v2755 = vpack.c.b16 %v1987, %v1971
        %v2756 = vpack.c.b16 %v1988, %v1972
        %v2757 = vpack.c.b16 %v1989, %v1973
        %v2758 = vpack.c.b16 %v1990, %v1974
        %v2759 = vpack.c.b16 %v1991, %v1975
        %v2760 = vpack.c.b16 %v1992, %v1976
        %v2761 = vpack.c.b16 %v1993, %v1977
        %v2762 = vpack.c.b16 %v1994, %v1978
        %v2763 = vpack.c.b16 %v1995, %v1979
        %v2764 = vpack.c.b16 %v1996, %v1980
        %v2765 = vpack.c.b16 %v1997, %v1981
        %v2766 = vpack.c.b16 %v1998, %v1982
        %v2767 = vpack.c.b16 %v2015, %v1999
        %v2768 = vpack.c.b16 %v2016, %v2000
        %v2769 = vpack.c.b16 %v2017, %v2001
        %v2770 = vpack.c.b16 %v2018, %v2002
        %v2771 = vpack.c.b16 %v2019, %v2003
        %v2772 = vpack.c.b16 %v2020, %v2004
        %v2773 = vpack.c.b16 %v2021, %v2005
        %v2774 = vpack.c.b16 %v2022, %v2006
        %v2775 = vpack.c.b16 %v2023, %v2007
        %v2776 = vpack.c.b16 %v2024, %v2008
        %v2777 = vpack.c.b16 %v2025, %v2009
        %v2778 = vpack.c.b16 %v2026, %v2010
        %v2779 = vpack.c.b16 %v2027, %v2011
        %v2780 = vpack.c.b16 %v2028, %v2012
        %v2781 = vpack.c.b16 %v2029, %v2013
        %v2782 = vpack.c.b16 %v2030, %v2014
        %v2783 = vpack.c.b16 %v2047, %v2031
        %v2784 = vpack.c.b16 %v2048, %v2032
        %v2785 = vpack.c.b16 %v2049, %v2033
        %v2786 = vpack.c.b16 %v2050, %v2034
        %v2787 = vpack.c.b16 %v2051, %v2035
        %v2788 = vpack.c.b16 %v2052, %v2036
        %v2789 = vpack.c.b16 %v2053, %v2037
        %v2790 = vpack.c.b16 %v2054, %v2038
        %v2791 = vpack.c.b16 %v2055, %v2039
        %v2792 = vpack.c.b16 %v2056, %v2040
        %v2793 = vpack.c.b16 %v2057, %v2041
        %v2794 = vpack.c.b16 %v2058, %v2042
        %v2795 = vpack.c.b16 %v2059, %v2043
        %v2796 = vpack.c.b16 %v2060, %v2044
        %v2797 = vpack.c.b16 %v2061, %v2045
        %v2798 = vpack.c.b16 %v2062, %v2046
        %v2799 = vpack.c.b16 %v2079, %v2063
        %v2800 = vpack.c.b16 %v2080, %v2064
        %v2801 = vpack.c.b16 %v2081, %v2065
        %v2802 = vpack.c.b16 %v2082, %v2066
        %v2803 = vpack.c.b16 %v2083, %v2067
        %v2804 = vpack.c.b16 %v2084, %v2068
        %v2805 = vpack.c.b16 %v2085, %v2069
        %v2806 = vpack.c.b16 %v2086, %v2070
        %v2807 = vpack.c.b16 %v2087, %v2071
        %v2808 = vpack.c.b16 %v2088, %v2072
        %v2809 = vpack.c.b16 %v2089, %v2073
        %v2810 = vpack.c.b16 %v2090, %v2074
        %v2811 = vpack.c.b16 %v2091, %v2075
        %v2812 = vpack.c.b16 %v2092, %v2076
        %v2813 = vpack.c.b16 %v2093, %v2077
        %v2814 = vpack.c.b16 %v2094, %v2078
        %v2815 = vpack.c.b16 %v2111, %v2095
        %v2816 = vpack.c.b16 %v2112, %v2096
        %v2817 = vpack.c.b16 %v2113, %v2097
        %v2818 = vpack.c.b16 %v2114, %v2098
        %v2819 = vpack.c.b16 %v2115, %v2099
        %v2820 = vpack.c.b16 %v2116, %v2100
        %v2821 = vpack.c.b16 %v2117, %v2101
        %v2822 = vpack.c.b16 %v2118, %v2102
        %v2823 = vpack.c.b16 %v2119, %v2103
        %v2824 = vpack.c.b16 %v2120, %v2104
        %v2825 = vpack.c.b16 %v2121, %v2105
        %v2826 = vpack.c.b16 %v2122, %v2106
        %v2827 = vpack.c.b16 %v2123, %v2107
        %v2828 = vpack.c.b16 %v2124, %v2108
        %v2829 = vpack.c.b16 %v2125, %v2109
        %v2830 = vpack.c.b16 %v2126, %v2110
        %v2831 = vpack.c.b16 %v2143, %v2127
        %v2832 = vpack.c.b16 %v2144, %v2128
        %v2833 = vpack.c.b16 %v2145, %v2129
        %v2834 = vpack.c.b16 %v2146, %v2130
        %v2835 = vpack.c.b16 %v2147, %v2131
        %v2836 = vpack.c.b16 %v2148, %v2132
        %v2837 = vpack.c.b16 %v2149, %v2133
        %v2838 = vpack.c.b16 %v2150, %v2134
        %v2839 = vpack.c.b16 %v2151, %v2135
        %v2840 = vpack.c.b16 %v2152, %v2136
        %v2841 = vpack.c.b16 %v2153, %v2137
        %v2842 = vpack.c.b16 %v2154, %v2138
        %v2843 = vpack.c.b16 %v2155, %v2139
        %v2844 = vpack.c.b16 %v2156, %v2140
        %v2845 = vpack.c.b16 %v2157, %v2141
        %v2846 = vpack.c.b16 %v2158, %v2142
        %v2847 = vpack.c.b16 %v2175, %v2159
        %v2848 = vpack.c.b16 %v2176, %v2160
        %v2849 = vpack.c.b16 %v2177, %v2161
        %v2850 = vpack.c.b16 %v2178, %v2162
        %v2851 = vpack.c.b16 %v2179, %v2163
        %v2852 = vpack.c.b16 %v2180, %v2164
        %v2853 = vpack.c.b16 %v2181, %v2165
        %v2854 = vpack.c.b16 %v2182, %v2166
        %v2855 = vpack.c.b16 %v2183, %v2167
        %v2856 = vpack.c.b16 %v2184, %v2168
        %v2857 = vpack.c.b16 %v2185, %v2169
        %v2858 = vpack.c.b16 %v2186, %v2170
        %v2859 = vpack.c.b16 %v2187, %v2171
        %v2860 = vpack.c.b16 %v2188, %v2172
        %v2861 = vpack.c.b16 %v2189, %v2173
        %v2862 = vpack.c.b16 %v2190, %v2174
        %v2863 = vpack.c.b16 %v2207, %v2191
        %v2864 = vpack.c.b16 %v2208, %v2192
        %v2865 = vpack.c.b16 %v2209, %v2193
        %v2866 = vpack.c.b16 %v2210, %v2194
        %v2867 = vpack.c.b16 %v2211, %v2195
        %v2868 = vpack.c.b16 %v2212, %v2196
        %v2869 = vpack.c.b16 %v2213, %v2197
        %v2870 = vpack.c.b16 %v2214, %v2198
        %v2871 = vpack.c.b16 %v2215, %v2199
        %v2872 = vpack.c.b16 %v2216, %v2200
        %v2873 = vpack.c.b16 %v2217, %v2201
        %v2874 = vpack.c.b16 %v2218, %v2202
        %v2875 = vpack.c.b16 %v2219, %v2203
        %v2876 = vpack.c.b16 %v2220, %v2204
        %v2877 = vpack.c.b16 %v2221, %v2205
        %v2878 = vpack.c.b16 %v2222, %v2206
        %v2879 = vpack.c.b16 %v2239, %v2223
        %v2880 = vpack.c.b16 %v2240, %v2224
        %v2881 = vpack.c.b16 %v2241, %v2225
        %v2882 = vpack.c.b16 %v2242, %v2226
        %v2883 = vpack.c.b16 %v2243, %v2227
        %v2884 = vpack.c.b16 %v2244, %v2228
        %v2885 = vpack.c.b16 %v2245, %v2229
        %v2886 = vpack.c.b16 %v2246, %v2230
        %v2887 = vpack.c.b16 %v2247, %v2231
        %v2888 = vpack.c.b16 %v2248, %v2232
        %v2889 = vpack.c.b16 %v2249, %v2233
        %v2890 = vpack.c.b16 %v2250, %v2234
        %v2891 = vpack.c.b16 %v2251, %v2235
        %v2892 = vpack.c.b16 %v2252, %v2236
        %v2893 = vpack.c.b16 %v2253, %v2237
        %v2894 = vpack.c.b16 %v2254, %v2238
        %v2895 = vpack.c.b16 %v2271, %v2255
        %v2896 = vpack.c.b16 %v2272, %v2256
        %v2897 = vpack.c.b16 %v2273, %v2257
        %v2898 = vpack.c.b16 %v2274, %v2258
        %v2899 = vpack.c.b16 %v2275, %v2259
        %v2900 = vpack.c.b16 %v2276, %v2260
        %v2901 = vpack.c.b16 %v2277, %v2261
        %v2902 = vpack.c.b16 %v2278, %v2262
        %v2903 = vpack.c.b16 %v2279, %v2263
        %v2904 = vpack.c.b16 %v2280, %v2264
        %v2905 = vpack.c.b16 %v2281, %v2265
        %v2906 = vpack.c.b16 %v2282, %v2266
        %v2907 = vpack.c.b16 %v2283, %v2267
        %v2908 = vpack.c.b16 %v2284, %v2268
        %v2909 = vpack.c.b16 %v2285, %v2269
        %v2910 = vpack.c.b16 %v2286, %v2270
        %v2911 = vpack.c.b16 %v2303, %v2287
        %v2912 = vpack.c.b16 %v2304, %v2288
        %v2913 = vpack.c.b16 %v2305, %v2289
        %v2914 = vpack.c.b16 %v2306, %v2290
        %v2915 = vpack.c.b16 %v2307, %v2291
        %v2916 = vpack.c.b16 %v2308, %v2292
        %v2917 = vpack.c.b16 %v2309, %v2293
        %v2918 = vpack.c.b16 %v2310, %v2294
        %v2919 = vpack.c.b16 %v2311, %v2295
        %v2920 = vpack.c.b16 %v2312, %v2296
        %v2921 = vpack.c.b16 %v2313, %v2297
        %v2922 = vpack.c.b16 %v2314, %v2298
        %v2923 = vpack.c.b16 %v2315, %v2299
        %v2924 = vpack.c.b16 %v2316, %v2300
        %v2925 = vpack.c.b16 %v2317, %v2301
        %v2926 = vpack.c.b16 %v2318, %v2302
        %v2927 = vpack.c.b16 %v2335, %v2319
        %v2928 = vpack.c.b16 %v2336, %v2320
        %v2929 = vpack.c.b16 %v2337, %v2321
        %v2930 = vpack.c.b16 %v2338, %v2322
        %v2931 = vpack.c.b16 %v2339, %v2323
        %v2932 = vpack.c.b16 %v2340, %v2324
        %v2933 = vpack.c.b16 %v2341, %v2325
        %v2934 = vpack.c.b16 %v2342, %v2326
        %v2935 = vpack.c.b16 %v2343, %v2327
        %v2936 = vpack.c.b16 %v2344, %v2328
        %v2937 = vpack.c.b16 %v2345, %v2329
        %v2938 = vpack.c.b16 %v2346, %v2330
        %v2939 = vpack.c.b16 %v2347, %v2331
        %v2940 = vpack.c.b16 %v2348, %v2332
        %v2941 = vpack.c.b16 %v2349, %v2333
        %v2942 = vpack.c.b16 %v2350, %v2334
        %v2943 = vpack.c.b16 %v2367, %v2351
        %v2944 = vpack.c.b16 %v2368, %v2352
        %v2945 = vpack.c.b16 %v2369, %v2353
        %v2946 = vpack.c.b16 %v2370, %v2354
        %v2947 = vpack.c.b16 %v2371, %v2355
        %v2948 = vpack.c.b16 %v2372, %v2356
        %v2949 = vpack.c.b16 %v2373, %v2357
        %v2950 = vpack.c.b16 %v2374, %v2358
        %v2951 = vpack.c.b16 %v2375, %v2359
        %v2952 = vpack.c.b16 %v2376, %v2360
        %v2953 = vpack.c.b16 %v2377, %v2361
        %v2954 = vpack.c.b16 %v2378, %v2362
        %v2955 = vpack.c.b16 %v2379, %v2363
        %v2956 = vpack.c.b16 %v2380, %v2364
        %v2957 = vpack.c.b16 %v2381, %v2365
        %v2958 = vpack.c.b16 %v2382, %v2366
        %v2959 = vpack.c.b16 %v2399, %v2383
        %v2960 = vpack.c.b16 %v2400, %v2384
        %v2961 = vpack.c.b16 %v2401, %v2385
        %v2962 = vpack.c.b16 %v2402, %v2386
        %v2963 = vpack.c.b16 %v2403, %v2387
        %v2964 = vpack.c.b16 %v2404, %v2388
        %v2965 = vpack.c.b16 %v2405, %v2389
        %v2966 = vpack.c.b16 %v2406, %v2390
        %v2967 = vpack.c.b16 %v2407, %v2391
        %v2968 = vpack.c.b16 %v2408, %v2392
        %v2969 = vpack.c.b16 %v2409, %v2393
        %v2970 = vpack.c.b16 %v2410, %v2394
        %v2971 = vpack.c.b16 %v2411, %v2395
        %v2972 = vpack.c.b16 %v2412, %v2396
        %v2973 = vpack.c.b16 %v2413, %v2397
        %v2974 = vpack.c.b16 %v2414, %v2398
        %v2975 = vpack.c.b16 %v2431, %v2415
        %v2976 = vpack.c.b16 %v2432, %v2416
        %v2977 = vpack.c.b16 %v2433, %v2417
        %v2978 = vpack.c.b16 %v2434, %v2418
        %v2979 = vpack.c.b16 %v2435, %v2419
        %v2980 = vpack.c.b16 %v2436, %v2420
        %v2981 = vpack.c.b16 %v2437, %v2421
        %v2982 = vpack.c.b16 %v2438, %v2422
        %v2983 = vpack.c.b16 %v2439, %v2423
        %v2984 = vpack.c.b16 %v2440, %v2424
        %v2985 = vpack.c.b16 %v2441, %v2425
        %v2986 = vpack.c.b16 %v2442, %v2426
        %v2987 = vpack.c.b16 %v2443, %v2427
        %v2988 = vpack.c.b16 %v2444, %v2428
        %v2989 = vpack.c.b16 %v2445, %v2429
        %v2990 = vpack.c.b16 %v2446, %v2430
        %v2991 = vpack.c.b16 %v2463, %v2447
        %v2992 = vpack.c.b16 %v2464, %v2448
        %v2993 = vpack.c.b16 %v2465, %v2449
        %v2994 = vpack.c.b16 %v2466, %v2450
        %v2995 = vpack.c.b16 %v2467, %v2451
        %v2996 = vpack.c.b16 %v2468, %v2452
        %v2997 = vpack.c.b16 %v2469, %v2453
        %v2998 = vpack.c.b16 %v2470, %v2454
        %v2999 = vpack.c.b16 %v2471, %v2455
        %v3000 = vpack.c.b16 %v2472, %v2456
        %v3001 = vpack.c.b16 %v2473, %v2457
        %v3002 = vpack.c.b16 %v2474, %v2458
        %v3003 = vpack.c.b16 %v2475, %v2459
        %v3004 = vpack.c.b16 %v2476, %v2460
        %v3005 = vpack.c.b16 %v2477, %v2461
        %v3006 = vpack.c.b16 %v2478, %v2462
        %v3007 = vpack.c.b16 %v2495, %v2479
        %v3008 = vpack.c.b16 %v2496, %v2480
        %v3009 = vpack.c.b16 %v2497, %v2481
        %v3010 = vpack.c.b16 %v2498, %v2482
        %v3011 = vpack.c.b16 %v2499, %v2483
        %v3012 = vpack.c.b16 %v2500, %v2484
        %v3013 = vpack.c.b16 %v2501, %v2485
        %v3014 = vpack.c.b16 %v2502, %v2486
        %v3015 = vpack.c.b16 %v2503, %v2487
        %v3016 = vpack.c.b16 %v2504, %v2488
        %v3017 = vpack.c.b16 %v2505, %v2489
        %v3018 = vpack.c.b16 %v2506, %v2490
        %v3019 = vpack.c.b16 %v2507, %v2491
        %v3020 = vpack.c.b16 %v2508, %v2492
        %v3021 = vpack.c.b16 %v2509, %v2493
        %v3022 = vpack.c.b16 %v2510, %v2494
        %3535 = vmatprep.subr.bf16.mxu0 %v2512
        %3536 = vmatpush1.bf16.xpose.msra.mxu0 %v2511
        %3537 = vmatprep.subr.bf16.mxu0 %v2528
        %3538 = vmatpush1.bf16.xpose.msra.mxu0 %v2527
        %3539 = vmatprep.subr.bf16.mxu0 %v2544
        %3540 = vmatpush1.bf16.xpose.msra.mxu0 %v2543
        %3541 = vmatprep.subr.bf16.mxu0 %v2560
        %3542 = vmatpush1.bf16.xpose.msra.mxu0 %v2559
        %3543 = vmatprep.subr.bf16.mxu0 %v2576
        %3544 = vmatpush1.bf16.xpose.msra.mxu0 %v2575
        %3545 = vmatprep.subr.bf16.mxu0 %v2592
        %3546 = vmatpush1.bf16.xpose.msra.mxu0 %v2591
        %3547 = vmatprep.subr.bf16.mxu0 %v2608
        %3548 = vmatpush1.bf16.xpose.msra.mxu0 %v2607
        %3549 = vmatprep.subr.bf16.mxu0 %v2624
        %3550 = vmatpush1.bf16.xpose.msra.mxu0 %v2623
        %3551 = vmatprep.subr.bf16.mxu0 %v2640
        %3552 = vmatpush1.bf16.xpose.msra.mxu0 %v2639
        %3553 = vmatprep.subr.bf16.mxu0 %v2656
        %3554 = vmatpush1.bf16.xpose.msra.mxu0 %v2655
        %3555 = vmatprep.subr.bf16.mxu0 %v2672
        %3556 = vmatpush1.bf16.xpose.msra.mxu0 %v2671
        %3557 = vmatprep.subr.bf16.mxu0 %v2688
        %3558 = vmatpush1.bf16.xpose.msra.mxu0 %v2687
        %3559 = vmatprep.subr.bf16.mxu0 %v2704
        %3560 = vmatpush1.bf16.xpose.msra.mxu0 %v2703
        %3561 = vmatprep.subr.bf16.mxu0 %v2720
        %3562 = vmatpush1.bf16.xpose.msra.mxu0 %v2719
        %3563 = vmatprep.subr.bf16.mxu0 %v2736
        %3564 = vmatpush1.bf16.xpose.msra.mxu0 %v2735
        %3565 = vmatprep.subr.bf16.mxu0 %v2752
        %3566 = vmatpush1.bf16.xpose.msra.mxu0 %v2751
        %3567 = vmatprep.mubr.bf16.mxu0 %v912
        %3568 = vmatmul.mubr.bf16.gmra.mrb[0].mxu0 %v911
        %v3569 = vpop.f32.mrb[0].mxu0
        %v3570 = vadd.f32 0.0, %v3569
        %v3571 = vpop.f32.mrb[0].mxu0
        %v3572 = vadd.f32 0.0, %v3571
        %v3573 = vpop.f32.mrb[0].mxu0
        %v3574 = vadd.f32 0.0, %v3573
        %v3575 = vpop.f32.mrb[0].mxu0
        %v3576 = vadd.f32 0.0, %v3575
        %3577 = vmatprep.mubr.bf16.mxu0 %v928
        %3578 = vmatmul.mubr.bf16.gmra.mrb[0].mxu0 %v927
        %v3579 = vpop.f32.mrb[0].mxu0
        %v3580 = vadd.f32 0.0, %v3579
        %v3581 = vpop.f32.mrb[0].mxu0
        %v3582 = vadd.f32 0.0, %v3581
        %v3583 = vpop.f32.mrb[0].mxu0
        %v3584 = vadd.f32 0.0, %v3583
        %v3585 = vpop.f32.mrb[0].mxu0
        %v3586 = vadd.f32 0.0, %v3585
        %3587 = vdwg.mxu0
        %3588 = vmatprep.subr.bf16.mxu0 %v2514
        %3589 = vmatpush1.bf16.xpose.msra.mxu0 %v2513
        %3590 = vmatprep.subr.bf16.mxu0 %v2530
        %3591 = vmatpush1.bf16.xpose.msra.mxu0 %v2529
        %3592 = vmatprep.subr.bf16.mxu0 %v2546
        %3593 = vmatpush1.bf16.xpose.msra.mxu0 %v2545
        %3594 = vmatprep.subr.bf16.mxu0 %v2562
        %3595 = vmatpush1.bf16.xpose.msra.mxu0 %v2561
        %3596 = vmatprep.subr.bf16.mxu0 %v2578
        %3597 = vmatpush1.bf16.xpose.msra.mxu0 %v2577
        %3598 = vmatprep.subr.bf16.mxu0 %v2594
        %3599 = vmatpush1.bf16.xpose.msra.mxu0 %v2593
        %3600 = vmatprep.subr.bf16.mxu0 %v2610
        %3601 = vmatpush1.bf16.xpose.msra.mxu0 %v2609
        %3602 = vmatprep.subr.bf16.mxu0 %v2626
        %3603 = vmatpush1.bf16.xpose.msra.mxu0 %v2625
        %3604 = vmatprep.subr.bf16.mxu0 %v2642
        %3605 = vmatpush1.bf16.xpose.msra.mxu0 %v2641
        %3606 = vmatprep.subr.bf16.mxu0 %v2658
        %3607 = vmatpush1.bf16.xpose.msra.mxu0 %v2657
        %3608 = vmatprep.subr.bf16.mxu0 %v2674
        %3609 = vmatpush1.bf16.xpose.msra.mxu0 %v2673
        %3610 = vmatprep.subr.bf16.mxu0 %v2690
        %3611 = vmatpush1.bf16.xpose.msra.mxu0 %v2689
        %3612 = vmatprep.subr.bf16.mxu0 %v2706
        %3613 = vmatpush1.bf16.xpose.msra.mxu0 %v2705
        %3614 = vmatprep.subr.bf16.mxu0 %v2722
        %3615 = vmatpush1.bf16.xpose.msra.mxu0 %v2721
        %3616 = vmatprep.subr.bf16.mxu0 %v2738
        %3617 = vmatpush1.bf16.xpose.msra.mxu0 %v2737
        %3618 = vmatprep.subr.bf16.mxu0 %v2754
        %3619 = vmatpush1.bf16.xpose.msra.mxu0 %v2753
        %3620 = vmatprep.mubr.bf16.mxu0 %v914
        %3621 = vmatmul.mubr.bf16.gmra.mrb[0].mxu0 %v913
        %v3622 = vpop.f32.mrb[0].mxu0
        %v3623 = vadd.f32 %v3570, %v3622
        %v3624 = vpop.f32.mrb[0].mxu0
        %v3625 = vadd.f32 %v3572, %v3624
        %v3626 = vpop.f32.mrb[0].mxu0
        %v3627 = vadd.f32 %v3574, %v3626
        %v3628 = vpop.f32.mrb[0].mxu0
        %v3629 = vadd.f32 %v3576, %v3628
        %3630 = vmatprep.mubr.bf16.mxu0 %v930
        %3631 = vmatmul.mubr.bf16.gmra.mrb[0].mxu0 %v929
        %v3632 = vpop.f32.mrb[0].mxu0
        %v3633 = vadd.f32 %v3580, %v3632
        %v3634 = vpop.f32.mrb[0].mxu0
        %v3635 = vadd.f32 %v3582, %v3634
        %v3636 = vpop.f32.mrb[0].mxu0
        %v3637 = vadd.f32 %v3584, %v3636
        %v3638 = vpop.f32.mrb[0].mxu0
        %v3639 = vadd.f32 %v3586, %v3638
        %3640 = vdwg.mxu0
        %3641 = vmatprep.subr.bf16.mxu0 %v2516
        %3642 = vmatpush1.bf16.xpose.msra.mxu0 %v2515
        %3643 = vmatprep.subr.bf16.mxu0 %v2532
        %3644 = vmatpush1.bf16.xpose.msra.mxu0 %v2531
        %3645 = vmatprep.subr.bf16.mxu0 %v2548
        %3646 = vmatpush1.bf16.xpose.msra.mxu0 %v2547
        %3647 = vmatprep.subr.bf16.mxu0 %v2564
        %3648 = vmatpush1.bf16.xpose.msra.mxu0 %v2563
        %3649 = vmatprep.subr.bf16.mxu0 %v2580
        %3650 = vmatpush1.bf16.xpose.msra.mxu0 %v2579
        %3651 = vmatprep.subr.bf16.mxu0 %v2596
        %3652 = vmatpush1.bf16.xpose.msra.mxu0 %v2595
        %3653 = vmatprep.subr.bf16.mxu0 %v2612
        %3654 = vmatpush1.bf16.xpose.msra.mxu0 %v2611
        %3655 = vmatprep.subr.bf16.mxu0 %v2628
        %3656 = vmatpush1.bf16.xpose.msra.mxu0 %v2627
        %3657 = vmatprep.subr.bf16.mxu0 %v2644
        %3658 = vmatpush1.bf16.xpose.msra.mxu0 %v2643
        %3659 = vmatprep.subr.bf16.mxu0 %v2660
        %3660 = vmatpush1.bf16.xpose.msra.mxu0 %v2659
        %3661 = vmatprep.subr.bf16.mxu0 %v2676
        %3662 = vmatpush1.bf16.xpose.msra.mxu0 %v2675
        %3663 = vmatprep.subr.bf16.mxu0 %v2692
        %3664 = vmatpush1.bf16.xpose.msra.mxu0 %v2691
        %3665 = vmatprep.subr.bf16.mxu0 %v2708
        %3666 = vmatpush1.bf16.xpose.msra.mxu0 %v2707
        %3667 = vmatprep.subr.bf16.mxu0 %v2724
        %3668 = vmatpush1.bf16.xpose.msra.mxu0 %v2723
        %3669 = vmatprep.subr.bf16.mxu0 %v2740
        %3670 = vmatpush1.bf16.xpose.msra.mxu0 %v2739
        %3671 = vmatprep.subr.bf16.mxu0 %v2756
        %3672 = vmatpush1.bf16.xpose.msra.mxu0 %v2755
        %3673 = vmatprep.mubr.bf16.mxu0 %v916
        %3674 = vmatmul.mubr.bf16.gmra.mrb[0].mxu0 %v915
        %v3675 = vpop.f32.mrb[0].mxu0
        %v3676 = vadd.f32 %v3623, %v3675
        %v3677 = vpop.f32.mrb[0].mxu0
        %v3678 = vadd.f32 %v3625, %v3677
        %v3679 = vpop.f32.mrb[0].mxu0
        %v3680 = vadd.f32 %v3627, %v3679
        %v3681 = vpop.f32.mrb[0].mxu0
        %v3682 = vadd.f32 %v3629, %v3681
        %3683 = vmatprep.mubr.bf16.mxu0 %v932
        %3684 = vmatmul.mubr.bf16.gmra.mrb[0].mxu0 %v931
        %v3685 = vpop.f32.mrb[0].mxu0
        %v3686 = vadd.f32 %v3633, %v3685
        %v3687 = vpop.f32.mrb[0].mxu0
        %v3688 = vadd.f32 %v3635, %v3687
        %v3689 = vpop.f32.mrb[0].mxu0
        %v3690 = vadd.f32 %v3637, %v3689
        %v3691 = vpop.f32.mrb[0].mxu0
        %v3692 = vadd.f32 %v3639, %v3691
        %3693 = vdwg.mxu0
        %3694 = vmatprep.subr.bf16.mxu0 %v2518
        %3695 = vmatpush1.bf16.xpose.msra.mxu0 %v2517
        %3696 = vmatprep.subr.bf16.mxu0 %v2534
        %3697 = vmatpush1.bf16.xpose.msra.mxu0 %v2533
        %3698 = vmatprep.subr.bf16.mxu0 %v2550
        %3699 = vmatpush1.bf16.xpose.msra.mxu0 %v2549
        %3700 = vmatprep.subr.bf16.mxu0 %v2566
        %3701 = vmatpush1.bf16.xpose.msra.mxu0 %v2565
        %3702 = vmatprep.subr.bf16.mxu0 %v2582
        %3703 = vmatpush1.bf16.xpose.msra.mxu0 %v2581
        %3704 = vmatprep.subr.bf16.mxu0 %v2598
        %3705 = vmatpush1.bf16.xpose.msra.mxu0 %v2597
        %3706 = vmatprep.subr.bf16.mxu0 %v2614
        %3707 = vmatpush1.bf16.xpose.msra.mxu0 %v2613
        %3708 = vmatprep.subr.bf16.mxu0 %v2630
        %3709 = vmatpush1.bf16.xpose.msra.mxu0 %v2629
        %3710 = vmatprep.subr.bf16.mxu0 %v2646
        %3711 = vmatpush1.bf16.xpose.msra.mxu0 %v2645
        %3712 = vmatprep.subr.bf16.mxu0 %v2662
        %3713 = vmatpush1.bf16.xpose.msra.mxu0 %v2661
        %3714 = vmatprep.subr.bf16.mxu0 %v2678
        %3715 = vmatpush1.bf16.xpose.msra.mxu0 %v2677
        %3716 = vmatprep.subr.bf16.mxu0 %v2694
        %3717 = vmatpush1.bf16.xpose.msra.mxu0 %v2693
        %3718 = vmatprep.subr.bf16.mxu0 %v2710
        %3719 = vmatpush1.bf16.xpose.msra.mxu0 %v2709
        %3720 = vmatprep.subr.bf16.mxu0 %v2726
        %3721 = vmatpush1.bf16.xpose.msra.mxu0 %v2725
        %3722 = vmatprep.subr.bf16.mxu0 %v2742
        %3723 = vmatpush1.bf16.xpose.msra.mxu0 %v2741
        %3724 = vmatprep.subr.bf16.mxu0 %v2758
        %3725 = vmatpush1.bf16.xpose.msra.mxu0 %v2757
        %3726 = vmatprep.mubr.bf16.mxu0 %v918
        %3727 = vmatmul.mubr.bf16.gmra.mrb[0].mxu0 %v917
        %v3728 = vpop.f32.mrb[0].mxu0
        %v3729 = vadd.f32 %v3676, %v3728
        %v3730 = vpop.f32.mrb[0].mxu0
        %v3731 = vadd.f32 %v3678, %v3730
        %v3732 = vpop.f32.mrb[0].mxu0
        %v3733 = vadd.f32 %v3680, %v3732
        %v3734 = vpop.f32.mrb[0].mxu0
        %v3735 = vadd.f32 %v3682, %v3734
        %3736 = vmatprep.mubr.bf16.mxu0 %v934
        %3737 = vmatmul.mubr.bf16.gmra.mrb[0].mxu0 %v933
        %v3738 = vpop.f32.mrb[0].mxu0
        %v3739 = vadd.f32 %v3686, %v3738
        %v3740 = vpop.f32.mrb[0].mxu0
        %v3741 = vadd.f32 %v3688, %v3740
        %v3742 = vpop.f32.mrb[0].mxu0
        %v3743 = vadd.f32 %v3690, %v3742
        %v3744 = vpop.f32.mrb[0].mxu0
        %v3745 = vadd.f32 %v3692, %v3744
        %3746 = vdwg.mxu0
        %3747 = vmatprep.subr.bf16.mxu0 %v2520
        %3748 = vmatpush1.bf16.xpose.msra.mxu0 %v2519
        %3749 = vmatprep.subr.bf16.mxu0 %v2536
        %3750 = vmatpush1.bf16.xpose.msra.mxu0 %v2535
        %3751 = vmatprep.subr.bf16.mxu0 %v2552
        %3752 = vmatpush1.bf16.xpose.msra.mxu0 %v2551
        %3753 = vmatprep.subr.bf16.mxu0 %v2568
        %3754 = vmatpush1.bf16.xpose.msra.mxu0 %v2567
        %3755 = vmatprep.subr.bf16.mxu0 %v2584
        %3756 = vmatpush1.bf16.xpose.msra.mxu0 %v2583
        %3757 = vmatprep.subr.bf16.mxu0 %v2600
        %3758 = vmatpush1.bf16.xpose.msra.mxu0 %v2599
        %3759 = vmatprep.subr.bf16.mxu0 %v2616
        %3760 = vmatpush1.bf16.xpose.msra.mxu0 %v2615
        %3761 = vmatprep.subr.bf16.mxu0 %v2632
        %3762 = vmatpush1.bf16.xpose.msra.mxu0 %v2631
        %3763 = vmatprep.subr.bf16.mxu0 %v2648
        %3764 = vmatpush1.bf16.xpose.msra.mxu0 %v2647
        %3765 = vmatprep.subr.bf16.mxu0 %v2664
        %3766 = vmatpush1.bf16.xpose.msra.mxu0 %v2663
        %3767 = vmatprep.subr.bf16.mxu0 %v2680
        %3768 = vmatpush1.bf16.xpose.msra.mxu0 %v2679
        %3769 = vmatprep.subr.bf16.mxu0 %v2696
        %3770 = vmatpush1.bf16.xpose.msra.mxu0 %v2695
        %3771 = vmatprep.subr.bf16.mxu0 %v2712
        %3772 = vmatpush1.bf16.xpose.msra.mxu0 %v2711
        %3773 = vmatprep.subr.bf16.mxu0 %v2728
        %3774 = vmatpush1.bf16.xpose.msra.mxu0 %v2727
        %3775 = vmatprep.subr.bf16.mxu0 %v2744
        %3776 = vmatpush1.bf16.xpose.msra.mxu0 %v2743
        %3777 = vmatprep.subr.bf16.mxu0 %v2760
        %3778 = vmatpush1.bf16.xpose.msra.mxu0 %v2759
        %3779 = vmatprep.mubr.bf16.mxu0 %v920
        %3780 = vmatmul.mubr.bf16.gmra.mrb[0].mxu0 %v919
        %v3781 = vpop.f32.mrb[0].mxu0
        %v3782 = vadd.f32 %v3729, %v3781
        %v3783 = vpop.f32.mrb[0].mxu0
        %v3784 = vadd.f32 %v3731, %v3783
        %v3785 = vpop.f32.mrb[0].mxu0
        %v3786 = vadd.f32 %v3733, %v3785
        %v3787 = vpop.f32.mrb[0].mxu0
        %v3788 = vadd.f32 %v3735, %v3787
        %3789 = vmatprep.mubr.bf16.mxu0 %v936
        %3790 = vmatmul.mubr.bf16.gmra.mrb[0].mxu0 %v935
        %v3791 = vpop.f32.mrb[0].mxu0
        %v3792 = vadd.f32 %v3739, %v3791
        %v3793 = vpop.f32.mrb[0].mxu0
        %v3794 = vadd.f32 %v3741, %v3793
        %v3795 = vpop.f32.mrb[0].mxu0
        %v3796 = vadd.f32 %v3743, %v3795
        %v3797 = vpop.f32.mrb[0].mxu0
        %v3798 = vadd.f32 %v3745, %v3797
        %3799 = vdwg.mxu0
        %3800 = vmatprep.subr.bf16.mxu0 %v2522
        %3801 = vmatpush1.bf16.xpose.msra.mxu0 %v2521
        %3802 = vmatprep.subr.bf16.mxu0 %v2538
        %3803 = vmatpush1.bf16.xpose.msra.mxu0 %v2537
        %3804 = vmatprep.subr.bf16.mxu0 %v2554
        %3805 = vmatpush1.bf16.xpose.msra.mxu0 %v2553
        %3806 = vmatprep.subr.bf16.mxu0 %v2570
        %3807 = vmatpush1.bf16.xpose.msra.mxu0 %v2569
        %3808 = vmatprep.subr.bf16.mxu0 %v2586
        %3809 = vmatpush1.bf16.xpose.msra.mxu0 %v2585
        %3810 = vmatprep.subr.bf16.mxu0 %v2602
        %3811 = vmatpush1.bf16.xpose.msra.mxu0 %v2601
        %3812 = vmatprep.subr.bf16.mxu0 %v2618
        %3813 = vmatpush1.bf16.xpose.msra.mxu0 %v2617
        %3814 = vmatprep.subr.bf16.mxu0 %v2634
        %3815 = vmatpush1.bf16.xpose.msra.mxu0 %v2633
        %3816 = vmatprep.subr.bf16.mxu0 %v2650
        %3817 = vmatpush1.bf16.xpose.msra.mxu0 %v2649
        %3818 = vmatprep.subr.bf16.mxu0 %v2666
        %3819 = vmatpush1.bf16.xpose.msra.mxu0 %v2665
        %3820 = vmatprep.subr.bf16.mxu0 %v2682
        %3821 = vmatpush1.bf16.xpose.msra.mxu0 %v2681
        %3822 = vmatprep.subr.bf16.mxu0 %v2698
        %3823 = vmatpush1.bf16.xpose.msra.mxu0 %v2697
        %3824 = vmatprep.subr.bf16.mxu0 %v2714
        %3825 = vmatpush1.bf16.xpose.msra.mxu0 %v2713
        %3826 = vmatprep.subr.bf16.mxu0 %v2730
        %3827 = vmatpush1.bf16.xpose.msra.mxu0 %v2729
        %3828 = vmatprep.subr.bf16.mxu0 %v2746
        %3829 = vmatpush1.bf16.xpose.msra.mxu0 %v2745
        %3830 = vmatprep.subr.bf16.mxu0 %v2762
        %3831 = vmatpush1.bf16.xpose.msra.mxu0 %v2761
        %3832 = vmatprep.mubr.bf16.mxu0 %v922
        %3833 = vmatmul.mubr.bf16.gmra.mrb[0].mxu0 %v921
        %v3834 = vpop.f32.mrb[0].mxu0
        %v3835 = vadd.f32 %v3782, %v3834
        %v3836 = vpop.f32.mrb[0].mxu0
        %v3837 = vadd.f32 %v3784, %v3836
        %v3838 = vpop.f32.mrb[0].mxu0
        %v3839 = vadd.f32 %v3786, %v3838
        %v3840 = vpop.f32.mrb[0].mxu0
        %v3841 = vadd.f32 %v3788, %v3840
        %3842 = vmatprep.mubr.bf16.mxu0 %v938
        %3843 = vmatmul.mubr.bf16.gmra.mrb[0].mxu0 %v937
        %v3844 = vpop.f32.mrb[0].mxu0
        %v3845 = vadd.f32 %v3792, %v3844
        %v3846 = vpop.f32.mrb[0].mxu0
        %v3847 = vadd.f32 %v3794, %v3846
        %v3848 = vpop.f32.mrb[0].mxu0
        %v3849 = vadd.f32 %v3796, %v3848
        %v3850 = vpop.f32.mrb[0].mxu0
        %v3851 = vadd.f32 %v3798, %v3850
        %3852 = vdwg.mxu0
        %3853 = vmatprep.subr.bf16.mxu0 %v2524
        %3854 = vmatpush1.bf16.xpose.msra.mxu0 %v2523
        %3855 = vmatprep.subr.bf16.mxu0 %v2540
        %3856 = vmatpush1.bf16.xpose.msra.mxu0 %v2539
        %3857 = vmatprep.subr.bf16.mxu0 %v2556
        %3858 = vmatpush1.bf16.xpose.msra.mxu0 %v2555
        %3859 = vmatprep.subr.bf16.mxu0 %v2572
        %3860 = vmatpush1.bf16.xpose.msra.mxu0 %v2571
        %3861 = vmatprep.subr.bf16.mxu0 %v2588
        %3862 = vmatpush1.bf16.xpose.msra.mxu0 %v2587
        %3863 = vmatprep.subr.bf16.mxu0 %v2604
        %3864 = vmatpush1.bf16.xpose.msra.mxu0 %v2603
        %3865 = vmatprep.subr.bf16.mxu0 %v2620
        %3866 = vmatpush1.bf16.xpose.msra.mxu0 %v2619
        %3867 = vmatprep.subr.bf16.mxu0 %v2636
        %3868 = vmatpush1.bf16.xpose.msra.mxu0 %v2635
        %3869 = vmatprep.subr.bf16.mxu0 %v2652
        %3870 = vmatpush1.bf16.xpose.msra.mxu0 %v2651
        %3871 = vmatprep.subr.bf16.mxu0 %v2668
        %3872 = vmatpush1.bf16.xpose.msra.mxu0 %v2667
        %3873 = vmatprep.subr.bf16.mxu0 %v2684
        %3874 = vmatpush1.bf16.xpose.msra.mxu0 %v2683
        %3875 = vmatprep.subr.bf16.mxu0 %v2700
        %3876 = vmatpush1.bf16.xpose.msra.mxu0 %v2699
        %3877 = vmatprep.subr.bf16.mxu0 %v2716
        %3878 = vmatpush1.bf16.xpose.msra.mxu0 %v2715
        %3879 = vmatprep.subr.bf16.mxu0 %v2732
        %3880 = vmatpush1.bf16.xpose.msra.mxu0 %v2731
        %3881 = vmatprep.subr.bf16.mxu0 %v2748
        %3882 = vmatpush1.bf16.xpose.msra.mxu0 %v2747
        %3883 = vmatprep.subr.bf16.mxu0 %v2764
        %3884 = vmatpush1.bf16.xpose.msra.mxu0 %v2763
        %3885 = vmatprep.mubr.bf16.mxu0 %v924
        %3886 = vmatmul.mubr.bf16.gmra.mrb[0].mxu0 %v923
        %v3887 = vpop.f32.mrb[0].mxu0
        %v3888 = vadd.f32 %v3835, %v3887
        %v3889 = vpop.f32.mrb[0].mxu0
        %v3890 = vadd.f32 %v3837, %v3889
        %v3891 = vpop.f32.mrb[0].mxu0
        %v3892 = vadd.f32 %v3839, %v3891
        %v3893 = vpop.f32.mrb[0].mxu0
        %v3894 = vadd.f32 %v3841, %v3893
        %3895 = vmatprep.mubr.bf16.mxu0 %v940
        %3896 = vmatmul.mubr.bf16.gmra.mrb[0].mxu0 %v939
        %v3897 = vpop.f32.mrb[0].mxu0
        %v3898 = vadd.f32 %v3845, %v3897
        %v3899 = vpop.f32.mrb[0].mxu0
        %v3900 = vadd.f32 %v3847, %v3899
        %v3901 = vpop.f32.mrb[0].mxu0
        %v3902 = vadd.f32 %v3849, %v3901
        %v3903 = vpop.f32.mrb[0].mxu0
        %v3904 = vadd.f32 %v3851, %v3903
        %3905 = vdwg.mxu0
        %3906 = vmatprep.subr.bf16.mxu0 %v2526
        %3907 = vmatpush1.bf16.xpose.msra.mxu0 %v2525
        %3908 = vmatprep.subr.bf16.mxu0 %v2542
        %3909 = vmatpush1.bf16.xpose.msra.mxu0 %v2541
        %3910 = vmatprep.subr.bf16.mxu0 %v2558
        %3911 = vmatpush1.bf16.xpose.msra.mxu0 %v2557
        %3912 = vmatprep.subr.bf16.mxu0 %v2574
        %3913 = vmatpush1.bf16.xpose.msra.mxu0 %v2573
        %3914 = vmatprep.subr.bf16.mxu0 %v2590
        %3915 = vmatpush1.bf16.xpose.msra.mxu0 %v2589
        %3916 = vmatprep.subr.bf16.mxu0 %v2606
        %3917 = vmatpush1.bf16.xpose.msra.mxu0 %v2605
        %3918 = vmatprep.subr.bf16.mxu0 %v2622
        %3919 = vmatpush1.bf16.xpose.msra.mxu0 %v2621
        %3920 = vmatprep.subr.bf16.mxu0 %v2638
        %3921 = vmatpush1.bf16.xpose.msra.mxu0 %v2637
        %3922 = vmatprep.subr.bf16.mxu0 %v2654
        %3923 = vmatpush1.bf16.xpose.msra.mxu0 %v2653
        %3924 = vmatprep.subr.bf16.mxu0 %v2670
        %3925 = vmatpush1.bf16.xpose.msra.mxu0 %v2669
        %3926 = vmatprep.subr.bf16.mxu0 %v2686
        %3927 = vmatpush1.bf16.xpose.msra.mxu0 %v2685
        %3928 = vmatprep.subr.bf16.mxu0 %v2702
        %3929 = vmatpush1.bf16.xpose.msra.mxu0 %v2701
        %3930 = vmatprep.subr.bf16.mxu0 %v2718
        %3931 = vmatpush1.bf16.xpose.msra.mxu0 %v2717
        %3932 = vmatprep.subr.bf16.mxu0 %v2734
        %3933 = vmatpush1.bf16.xpose.msra.mxu0 %v2733
        %3934 = vmatprep.subr.bf16.mxu0 %v2750
        %3935 = vmatpush1.bf16.xpose.msra.mxu0 %v2749
        %3936 = vmatprep.subr.bf16.mxu0 %v2766
        %3937 = vmatpush1.bf16.xpose.msra.mxu0 %v2765
        %3938 = vmatprep.mubr.bf16.mxu0 %v926
        %3939 = vmatmul.mubr.bf16.gmra.mrb[0].mxu0 %v925
        %v3940 = vpop.f32.mrb[0].mxu0
        %v3941 = vadd.f32 %v3888, %v3940
        %v3942 = vpop.f32.mrb[0].mxu0
        %v3943 = vadd.f32 %v3890, %v3942
        %v3944 = vpop.f32.mrb[0].mxu0
        %v3945 = vadd.f32 %v3892, %v3944
        %v3946 = vpop.f32.mrb[0].mxu0
        %v3947 = vadd.f32 %v3894, %v3946
        %3948 = vmatprep.mubr.bf16.mxu0 %v942
        %3949 = vmatmul.mubr.bf16.gmra.mrb[0].mxu0 %v941
        %v3950 = vpop.f32.mrb[0].mxu0
        %v3951 = vadd.f32 %v3898, %v3950
        %v3952 = vpop.f32.mrb[0].mxu0
        %v3953 = vadd.f32 %v3900, %v3952
        %v3954 = vpop.f32.mrb[0].mxu0
        %v3955 = vadd.f32 %v3902, %v3954
        %v3956 = vpop.f32.mrb[0].mxu0
        %v3957 = vadd.f32 %v3904, %v3956
        %3958 = vdwg.mxu0
        %3959 = vmatprep.subr.bf16.mxu0 %v2768
        %3960 = vmatpush1.bf16.xpose.msra.mxu0 %v2767
        %3961 = vmatprep.subr.bf16.mxu0 %v2784
        %3962 = vmatpush1.bf16.xpose.msra.mxu0 %v2783
        %3963 = vmatprep.subr.bf16.mxu0 %v2800
        %3964 = vmatpush1.bf16.xpose.msra.mxu0 %v2799
        %3965 = vmatprep.subr.bf16.mxu0 %v2816
        %3966 = vmatpush1.bf16.xpose.msra.mxu0 %v2815
        %3967 = vmatprep.subr.bf16.mxu0 %v2832
        %3968 = vmatpush1.bf16.xpose.msra.mxu0 %v2831
        %3969 = vmatprep.subr.bf16.mxu0 %v2848
        %3970 = vmatpush1.bf16.xpose.msra.mxu0 %v2847
        %3971 = vmatprep.subr.bf16.mxu0 %v2864
        %3972 = vmatpush1.bf16.xpose.msra.mxu0 %v2863
        %3973 = vmatprep.subr.bf16.mxu0 %v2880
        %3974 = vmatpush1.bf16.xpose.msra.mxu0 %v2879
        %3975 = vmatprep.subr.bf16.mxu0 %v2896
        %3976 = vmatpush1.bf16.xpose.msra.mxu0 %v2895
        %3977 = vmatprep.subr.bf16.mxu0 %v2912
        %3978 = vmatpush1.bf16.xpose.msra.mxu0 %v2911
        %3979 = vmatprep.subr.bf16.mxu0 %v2928
        %3980 = vmatpush1.bf16.xpose.msra.mxu0 %v2927
        %3981 = vmatprep.subr.bf16.mxu0 %v2944
        %3982 = vmatpush1.bf16.xpose.msra.mxu0 %v2943
        %3983 = vmatprep.subr.bf16.mxu0 %v2960
        %3984 = vmatpush1.bf16.xpose.msra.mxu0 %v2959
        %3985 = vmatprep.subr.bf16.mxu0 %v2976
        %3986 = vmatpush1.bf16.xpose.msra.mxu0 %v2975
        %3987 = vmatprep.subr.bf16.mxu0 %v2992
        %3988 = vmatpush1.bf16.xpose.msra.mxu0 %v2991
        %3989 = vmatprep.subr.bf16.mxu0 %v3008
        %3990 = vmatpush1.bf16.xpose.msra.mxu0 %v3007
        %3991 = vmatprep.mubr.bf16.mxu0 %v912
        %3992 = vmatmul.mubr.bf16.gmra.mrb[0].mxu0 %v911
        %v3993 = vpop.f32.mrb[0].mxu0
        %v3994 = vadd.f32 0.0, %v3993
        %v3995 = vpop.f32.mrb[0].mxu0
        %v3996 = vadd.f32 0.0, %v3995
        %v3997 = vpop.f32.mrb[0].mxu0
        %v3998 = vadd.f32 0.0, %v3997
        %v3999 = vpop.f32.mrb[0].mxu0
        %v4000 = vadd.f32 0.0, %v3999
        %4001 = vmatprep.mubr.bf16.mxu0 %v928
        %4002 = vmatmul.mubr.bf16.gmra.mrb[0].mxu0 %v927
        %v4003 = vpop.f32.mrb[0].mxu0
        %v4004 = vadd.f32 0.0, %v4003
        %v4005 = vpop.f32.mrb[0].mxu0
        %v4006 = vadd.f32 0.0, %v4005
        %v4007 = vpop.f32.mrb[0].mxu0
        %v4008 = vadd.f32 0.0, %v4007
        %v4009 = vpop.f32.mrb[0].mxu0
        %v4010 = vadd.f32 0.0, %v4009
        %4011 = vdwg.mxu0
        %4012 = vmatprep.subr.bf16.mxu0 %v2770
        %4013 = vmatpush1.bf16.xpose.msra.mxu0 %v2769
        %4014 = vmatprep.subr.bf16.mxu0 %v2786
        %4015 = vmatpush1.bf16.xpose.msra.mxu0 %v2785
        %4016 = vmatprep.subr.bf16.mxu0 %v2802
        %4017 = vmatpush1.bf16.xpose.msra.mxu0 %v2801
        %4018 = vmatprep.subr.bf16.mxu0 %v2818
        %4019 = vmatpush1.bf16.xpose.msra.mxu0 %v2817
        %4020 = vmatprep.subr.bf16.mxu0 %v2834
        %4021 = vmatpush1.bf16.xpose.msra.mxu0 %v2833
        %4022 = vmatprep.subr.bf16.mxu0 %v2850
        %4023 = vmatpush1.bf16.xpose.msra.mxu0 %v2849
        %4024 = vmatprep.subr.bf16.mxu0 %v2866
        %4025 = vmatpush1.bf16.xpose.msra.mxu0 %v2865
        %4026 = vmatprep.subr.bf16.mxu0 %v2882
        %4027 = vmatpush1.bf16.xpose.msra.mxu0 %v2881
        %4028 = vmatprep.subr.bf16.mxu0 %v2898
        %4029 = vmatpush1.bf16.xpose.msra.mxu0 %v2897
        %4030 = vmatprep.subr.bf16.mxu0 %v2914
        %4031 = vmatpush1.bf16.xpose.msra.mxu0 %v2913
        %4032 = vmatprep.subr.bf16.mxu0 %v2930
        %4033 = vmatpush1.bf16.xpose.msra.mxu0 %v2929
        %4034 = vmatprep.subr.bf16.mxu0 %v2946
        %4035 = vmatpush1.bf16.xpose.msra.mxu0 %v2945
        %4036 = vmatprep.subr.bf16.mxu0 %v2962
        %4037 = vmatpush1.bf16.xpose.msra.mxu0 %v2961
        %4038 = vmatprep.subr.bf16.mxu0 %v2978
        %4039 = vmatpush1.bf16.xpose.msra.mxu0 %v2977
        %4040 = vmatprep.subr.bf16.mxu0 %v2994
        %4041 = vmatpush1.bf16.xpose.msra.mxu0 %v2993
        %4042 = vmatprep.subr.bf16.mxu0 %v3010
        %4043 = vmatpush1.bf16.xpose.msra.mxu0 %v3009
        %4044 = vmatprep.mubr.bf16.mxu0 %v914
        %4045 = vmatmul.mubr.bf16.gmra.mrb[0].mxu0 %v913
        %v4046 = vpop.f32.mrb[0].mxu0
        %v4047 = vadd.f32 %v3994, %v4046
        %v4048 = vpop.f32.mrb[0].mxu0
        %v4049 = vadd.f32 %v3996, %v4048
        %v4050 = vpop.f32.mrb[0].mxu0
        %v4051 = vadd.f32 %v3998, %v4050
        %v4052 = vpop.f32.mrb[0].mxu0
        %v4053 = vadd.f32 %v4000, %v4052
        %4054 = vmatprep.mubr.bf16.mxu0 %v930
        %4055 = vmatmul.mubr.bf16.gmra.mrb[0].mxu0 %v929
        %v4056 = vpop.f32.mrb[0].mxu0
        %v4057 = vadd.f32 %v4004, %v4056
        %v4058 = vpop.f32.mrb[0].mxu0
        %v4059 = vadd.f32 %v4006, %v4058
        %v4060 = vpop.f32.mrb[0].mxu0
        %v4061 = vadd.f32 %v4008, %v4060
        %v4062 = vpop.f32.mrb[0].mxu0
        %v4063 = vadd.f32 %v4010, %v4062
        %4064 = vdwg.mxu0
        %4065 = vmatprep.subr.bf16.mxu0 %v2772
        %4066 = vmatpush1.bf16.xpose.msra.mxu0 %v2771
        %4067 = vmatprep.subr.bf16.mxu0 %v2788
        %4068 = vmatpush1.bf16.xpose.msra.mxu0 %v2787
        %4069 = vmatprep.subr.bf16.mxu0 %v2804
        %4070 = vmatpush1.bf16.xpose.msra.mxu0 %v2803
        %4071 = vmatprep.subr.bf16.mxu0 %v2820
        %4072 = vmatpush1.bf16.xpose.msra.mxu0 %v2819
        %4073 = vmatprep.subr.bf16.mxu0 %v2836
        %4074 = vmatpush1.bf16.xpose.msra.mxu0 %v2835
        %4075 = vmatprep.subr.bf16.mxu0 %v2852
        %4076 = vmatpush1.bf16.xpose.msra.mxu0 %v2851
        %4077 = vmatprep.subr.bf16.mxu0 %v2868
        %4078 = vmatpush1.bf16.xpose.msra.mxu0 %v2867
        %4079 = vmatprep.subr.bf16.mxu0 %v2884
        %4080 = vmatpush1.bf16.xpose.msra.mxu0 %v2883
        %4081 = vmatprep.subr.bf16.mxu0 %v2900
        %4082 = vmatpush1.bf16.xpose.msra.mxu0 %v2899
        %4083 = vmatprep.subr.bf16.mxu0 %v2916
        %4084 = vmatpush1.bf16.xpose.msra.mxu0 %v2915
        %4085 = vmatprep.subr.bf16.mxu0 %v2932
        %4086 = vmatpush1.bf16.xpose.msra.mxu0 %v2931
        %4087 = vmatprep.subr.bf16.mxu0 %v2948
        %4088 = vmatpush1.bf16.xpose.msra.mxu0 %v2947
        %4089 = vmatprep.subr.bf16.mxu0 %v2964
        %4090 = vmatpush1.bf16.xpose.msra.mxu0 %v2963
        %4091 = vmatprep.subr.bf16.mxu0 %v2980
        %4092 = vmatpush1.bf16.xpose.msra.mxu0 %v2979
        %4093 = vmatprep.subr.bf16.mxu0 %v2996
        %4094 = vmatpush1.bf16.xpose.msra.mxu0 %v2995
        %4095 = vmatprep.subr.bf16.mxu0 %v3012
        %4096 = vmatpush1.bf16.xpose.msra.mxu0 %v3011
        %4097 = vmatprep.mubr.bf16.mxu0 %v916
        %4098 = vmatmul.mubr.bf16.gmra.mrb[0].mxu0 %v915
        %v4099 = vpop.f32.mrb[0].mxu0
        %v4100 = vadd.f32 %v4047, %v4099
        %v4101 = vpop.f32.mrb[0].mxu0
        %v4102 = vadd.f32 %v4049, %v4101
        %v4103 = vpop.f32.mrb[0].mxu0
        %v4104 = vadd.f32 %v4051, %v4103
        %v4105 = vpop.f32.mrb[0].mxu0
        %v4106 = vadd.f32 %v4053, %v4105
        %4107 = vmatprep.mubr.bf16.mxu0 %v932
        %4108 = vmatmul.mubr.bf16.gmra.mrb[0].mxu0 %v931
        %v4109 = vpop.f32.mrb[0].mxu0
        %v4110 = vadd.f32 %v4057, %v4109
        %v4111 = vpop.f32.mrb[0].mxu0
        %v4112 = vadd.f32 %v4059, %v4111
        %v4113 = vpop.f32.mrb[0].mxu0
        %v4114 = vadd.f32 %v4061, %v4113
        %v4115 = vpop.f32.mrb[0].mxu0
        %v4116 = vadd.f32 %v4063, %v4115
        %4117 = vdwg.mxu0
        %4118 = vmatprep.subr.bf16.mxu0 %v2774
        %4119 = vmatpush1.bf16.xpose.msra.mxu0 %v2773
        %4120 = vmatprep.subr.bf16.mxu0 %v2790
        %4121 = vmatpush1.bf16.xpose.msra.mxu0 %v2789
        %4122 = vmatprep.subr.bf16.mxu0 %v2806
        %4123 = vmatpush1.bf16.xpose.msra.mxu0 %v2805
        %4124 = vmatprep.subr.bf16.mxu0 %v2822
        %4125 = vmatpush1.bf16.xpose.msra.mxu0 %v2821
        %4126 = vmatprep.subr.bf16.mxu0 %v2838
        %4127 = vmatpush1.bf16.xpose.msra.mxu0 %v2837
        %4128 = vmatprep.subr.bf16.mxu0 %v2854
        %4129 = vmatpush1.bf16.xpose.msra.mxu0 %v2853
        %4130 = vmatprep.subr.bf16.mxu0 %v2870
        %4131 = vmatpush1.bf16.xpose.msra.mxu0 %v2869
        %4132 = vmatprep.subr.bf16.mxu0 %v2886
        %4133 = vmatpush1.bf16.xpose.msra.mxu0 %v2885
        %4134 = vmatprep.subr.bf16.mxu0 %v2902
        %4135 = vmatpush1.bf16.xpose.msra.mxu0 %v2901
        %4136 = vmatprep.subr.bf16.mxu0 %v2918
        %4137 = vmatpush1.bf16.xpose.msra.mxu0 %v2917
        %4138 = vmatprep.subr.bf16.mxu0 %v2934
        %4139 = vmatpush1.bf16.xpose.msra.mxu0 %v2933
        %4140 = vmatprep.subr.bf16.mxu0 %v2950
        %4141 = vmatpush1.bf16.xpose.msra.mxu0 %v2949
        %4142 = vmatprep.subr.bf16.mxu0 %v2966
        %4143 = vmatpush1.bf16.xpose.msra.mxu0 %v2965
        %4144 = vmatprep.subr.bf16.mxu0 %v2982
        %4145 = vmatpush1.bf16.xpose.msra.mxu0 %v2981
        %4146 = vmatprep.subr.bf16.mxu0 %v2998
        %4147 = vmatpush1.bf16.xpose.msra.mxu0 %v2997
        %4148 = vmatprep.subr.bf16.mxu0 %v3014
        %4149 = vmatpush1.bf16.xpose.msra.mxu0 %v3013
        %4150 = vmatprep.mubr.bf16.mxu0 %v918
        %4151 = vmatmul.mubr.bf16.gmra.mrb[0].mxu0 %v917
        %v4152 = vpop.f32.mrb[0].mxu0
        %v4153 = vadd.f32 %v4100, %v4152
        %v4154 = vpop.f32.mrb[0].mxu0
        %v4155 = vadd.f32 %v4102, %v4154
        %v4156 = vpop.f32.mrb[0].mxu0
        %v4157 = vadd.f32 %v4104, %v4156
        %v4158 = vpop.f32.mrb[0].mxu0
        %v4159 = vadd.f32 %v4106, %v4158
        %4160 = vmatprep.mubr.bf16.mxu0 %v934
        %4161 = vmatmul.mubr.bf16.gmra.mrb[0].mxu0 %v933
        %v4162 = vpop.f32.mrb[0].mxu0
        %v4163 = vadd.f32 %v4110, %v4162
        %v4164 = vpop.f32.mrb[0].mxu0
        %v4165 = vadd.f32 %v4112, %v4164
        %v4166 = vpop.f32.mrb[0].mxu0
        %v4167 = vadd.f32 %v4114, %v4166
        %v4168 = vpop.f32.mrb[0].mxu0
        %v4169 = vadd.f32 %v4116, %v4168
        %4170 = vdwg.mxu0
        %4171 = vmatprep.subr.bf16.mxu0 %v2776
        %4172 = vmatpush1.bf16.xpose.msra.mxu0 %v2775
        %4173 = vmatprep.subr.bf16.mxu0 %v2792
        %4174 = vmatpush1.bf16.xpose.msra.mxu0 %v2791
        %4175 = vmatprep.subr.bf16.mxu0 %v2808
        %4176 = vmatpush1.bf16.xpose.msra.mxu0 %v2807
        %4177 = vmatprep.subr.bf16.mxu0 %v2824
        %4178 = vmatpush1.bf16.xpose.msra.mxu0 %v2823
        %4179 = vmatprep.subr.bf16.mxu0 %v2840
        %4180 = vmatpush1.bf16.xpose.msra.mxu0 %v2839
        %4181 = vmatprep.subr.bf16.mxu0 %v2856
        %4182 = vmatpush1.bf16.xpose.msra.mxu0 %v2855
        %4183 = vmatprep.subr.bf16.mxu0 %v2872
        %4184 = vmatpush1.bf16.xpose.msra.mxu0 %v2871
        %4185 = vmatprep.subr.bf16.mxu0 %v2888
        %4186 = vmatpush1.bf16.xpose.msra.mxu0 %v2887
        %4187 = vmatprep.subr.bf16.mxu0 %v2904
        %4188 = vmatpush1.bf16.xpose.msra.mxu0 %v2903
        %4189 = vmatprep.subr.bf16.mxu0 %v2920
        %4190 = vmatpush1.bf16.xpose.msra.mxu0 %v2919
        %4191 = vmatprep.subr.bf16.mxu0 %v2936
        %4192 = vmatpush1.bf16.xpose.msra.mxu0 %v2935
        %4193 = vmatprep.subr.bf16.mxu0 %v2952
        %4194 = vmatpush1.bf16.xpose.msra.mxu0 %v2951
        %4195 = vmatprep.subr.bf16.mxu0 %v2968
        %4196 = vmatpush1.bf16.xpose.msra.mxu0 %v2967
        %4197 = vmatprep.subr.bf16.mxu0 %v2984
        %4198 = vmatpush1.bf16.xpose.msra.mxu0 %v2983
        %4199 = vmatprep.subr.bf16.mxu0 %v3000
        %4200 = vmatpush1.bf16.xpose.msra.mxu0 %v2999
        %4201 = vmatprep.subr.bf16.mxu0 %v3016
        %4202 = vmatpush1.bf16.xpose.msra.mxu0 %v3015
        %4203 = vmatprep.mubr.bf16.mxu0 %v920
        %4204 = vmatmul.mubr.bf16.gmra.mrb[0].mxu0 %v919
        %v4205 = vpop.f32.mrb[0].mxu0
        %v4206 = vadd.f32 %v4153, %v4205
        %v4207 = vpop.f32.mrb[0].mxu0
        %v4208 = vadd.f32 %v4155, %v4207
        %v4209 = vpop.f32.mrb[0].mxu0
        %v4210 = vadd.f32 %v4157, %v4209
        %v4211 = vpop.f32.mrb[0].mxu0
        %v4212 = vadd.f32 %v4159, %v4211
        %4213 = vmatprep.mubr.bf16.mxu0 %v936
        %4214 = vmatmul.mubr.bf16.gmra.mrb[0].mxu0 %v935
        %v4215 = vpop.f32.mrb[0].mxu0
        %v4216 = vadd.f32 %v4163, %v4215
        %v4217 = vpop.f32.mrb[0].mxu0
        %v4218 = vadd.f32 %v4165, %v4217
        %v4219 = vpop.f32.mrb[0].mxu0
        %v4220 = vadd.f32 %v4167, %v4219
        %v4221 = vpop.f32.mrb[0].mxu0
        %v4222 = vadd.f32 %v4169, %v4221
        %4223 = vdwg.mxu0
        %4224 = vmatprep.subr.bf16.mxu0 %v2778
        %4225 = vmatpush1.bf16.xpose.msra.mxu0 %v2777
        %4226 = vmatprep.subr.bf16.mxu0 %v2794
        %4227 = vmatpush1.bf16.xpose.msra.mxu0 %v2793
        %4228 = vmatprep.subr.bf16.mxu0 %v2810
        %4229 = vmatpush1.bf16.xpose.msra.mxu0 %v2809
        %4230 = vmatprep.subr.bf16.mxu0 %v2826
        %4231 = vmatpush1.bf16.xpose.msra.mxu0 %v2825
        %4232 = vmatprep.subr.bf16.mxu0 %v2842
        %4233 = vmatpush1.bf16.xpose.msra.mxu0 %v2841
        %4234 = vmatprep.subr.bf16.mxu0 %v2858
        %4235 = vmatpush1.bf16.xpose.msra.mxu0 %v2857
        %4236 = vmatprep.subr.bf16.mxu0 %v2874
        %4237 = vmatpush1.bf16.xpose.msra.mxu0 %v2873
        %4238 = vmatprep.subr.bf16.mxu0 %v2890
        %4239 = vmatpush1.bf16.xpose.msra.mxu0 %v2889
        %4240 = vmatprep.subr.bf16.mxu0 %v2906
        %4241 = vmatpush1.bf16.xpose.msra.mxu0 %v2905
        %4242 = vmatprep.subr.bf16.mxu0 %v2922
        %4243 = vmatpush1.bf16.xpose.msra.mxu0 %v2921
        %4244 = vmatprep.subr.bf16.mxu0 %v2938
        %4245 = vmatpush1.bf16.xpose.msra.mxu0 %v2937
        %4246 = vmatprep.subr.bf16.mxu0 %v2954
        %4247 = vmatpush1.bf16.xpose.msra.mxu0 %v2953
        %4248 = vmatprep.subr.bf16.mxu0 %v2970
        %4249 = vmatpush1.bf16.xpose.msra.mxu0 %v2969
        %4250 = vmatprep.subr.bf16.mxu0 %v2986
        %4251 = vmatpush1.bf16.xpose.msra.mxu0 %v2985
        %4252 = vmatprep.subr.bf16.mxu0 %v3002
        %4253 = vmatpush1.bf16.xpose.msra.mxu0 %v3001
        %4254 = vmatprep.subr.bf16.mxu0 %v3018
        %4255 = vmatpush1.bf16.xpose.msra.mxu0 %v3017
        %4256 = vmatprep.mubr.bf16.mxu0 %v922
        %4257 = vmatmul.mubr.bf16.gmra.mrb[0].mxu0 %v921
        %v4258 = vpop.f32.mrb[0].mxu0
        %v4259 = vadd.f32 %v4206, %v4258
        %v4260 = vpop.f32.mrb[0].mxu0
        %v4261 = vadd.f32 %v4208, %v4260
        %v4262 = vpop.f32.mrb[0].mxu0
        %v4263 = vadd.f32 %v4210, %v4262
        %v4264 = vpop.f32.mrb[0].mxu0
        %v4265 = vadd.f32 %v4212, %v4264
        %4266 = vmatprep.mubr.bf16.mxu0 %v938
        %4267 = vmatmul.mubr.bf16.gmra.mrb[0].mxu0 %v937
        %v4268 = vpop.f32.mrb[0].mxu0
        %v4269 = vadd.f32 %v4216, %v4268
        %v4270 = vpop.f32.mrb[0].mxu0
        %v4271 = vadd.f32 %v4218, %v4270
        %v4272 = vpop.f32.mrb[0].mxu0
        %v4273 = vadd.f32 %v4220, %v4272
        %v4274 = vpop.f32.mrb[0].mxu0
        %v4275 = vadd.f32 %v4222, %v4274
        %4276 = vdwg.mxu0
        %4277 = vmatprep.subr.bf16.mxu0 %v2780
        %4278 = vmatpush1.bf16.xpose.msra.mxu0 %v2779
        %4279 = vmatprep.subr.bf16.mxu0 %v2796
        %4280 = vmatpush1.bf16.xpose.msra.mxu0 %v2795
        %4281 = vmatprep.subr.bf16.mxu0 %v2812
        %4282 = vmatpush1.bf16.xpose.msra.mxu0 %v2811
        %4283 = vmatprep.subr.bf16.mxu0 %v2828
        %4284 = vmatpush1.bf16.xpose.msra.mxu0 %v2827
        %4285 = vmatprep.subr.bf16.mxu0 %v2844
        %4286 = vmatpush1.bf16.xpose.msra.mxu0 %v2843
        %4287 = vmatprep.subr.bf16.mxu0 %v2860
        %4288 = vmatpush1.bf16.xpose.msra.mxu0 %v2859
        %4289 = vmatprep.subr.bf16.mxu0 %v2876
        %4290 = vmatpush1.bf16.xpose.msra.mxu0 %v2875
        %4291 = vmatprep.subr.bf16.mxu0 %v2892
        %4292 = vmatpush1.bf16.xpose.msra.mxu0 %v2891
        %4293 = vmatprep.subr.bf16.mxu0 %v2908
        %4294 = vmatpush1.bf16.xpose.msra.mxu0 %v2907
        %4295 = vmatprep.subr.bf16.mxu0 %v2924
        %4296 = vmatpush1.bf16.xpose.msra.mxu0 %v2923
        %4297 = vmatprep.subr.bf16.mxu0 %v2940
        %4298 = vmatpush1.bf16.xpose.msra.mxu0 %v2939
        %4299 = vmatprep.subr.bf16.mxu0 %v2956
        %4300 = vmatpush1.bf16.xpose.msra.mxu0 %v2955
        %4301 = vmatprep.subr.bf16.mxu0 %v2972
        %4302 = vmatpush1.bf16.xpose.msra.mxu0 %v2971
        %4303 = vmatprep.subr.bf16.mxu0 %v2988
        %4304 = vmatpush1.bf16.xpose.msra.mxu0 %v2987
        %4305 = vmatprep.subr.bf16.mxu0 %v3004
        %4306 = vmatpush1.bf16.xpose.msra.mxu0 %v3003
        %4307 = vmatprep.subr.bf16.mxu0 %v3020
        %4308 = vmatpush1.bf16.xpose.msra.mxu0 %v3019
        %4309 = vmatprep.mubr.bf16.mxu0 %v924
        %4310 = vmatmul.mubr.bf16.gmra.mrb[0].mxu0 %v923
        %v4311 = vpop.f32.mrb[0].mxu0
        %v4312 = vadd.f32 %v4259, %v4311
        %v4313 = vpop.f32.mrb[0].mxu0
        %v4314 = vadd.f32 %v4261, %v4313
        %v4315 = vpop.f32.mrb[0].mxu0
        %v4316 = vadd.f32 %v4263, %v4315
        %v4317 = vpop.f32.mrb[0].mxu0
        %v4318 = vadd.f32 %v4265, %v4317
        %4319 = vmatprep.mubr.bf16.mxu0 %v940
        %4320 = vmatmul.mubr.bf16.gmra.mrb[0].mxu0 %v939
        %v4321 = vpop.f32.mrb[0].mxu0
        %v4322 = vadd.f32 %v4269, %v4321
        %v4323 = vpop.f32.mrb[0].mxu0
        %v4324 = vadd.f32 %v4271, %v4323
        %v4325 = vpop.f32.mrb[0].mxu0
        %v4326 = vadd.f32 %v4273, %v4325
        %v4327 = vpop.f32.mrb[0].mxu0
        %v4328 = vadd.f32 %v4275, %v4327
        %4329 = vdwg.mxu0
        %4330 = vmatprep.subr.bf16.mxu0 %v2782
        %4331 = vmatpush1.bf16.xpose.msra.mxu0 %v2781
        %4332 = vmatprep.subr.bf16.mxu0 %v2798
        %4333 = vmatpush1.bf16.xpose.msra.mxu0 %v2797
        %4334 = vmatprep.subr.bf16.mxu0 %v2814
        %4335 = vmatpush1.bf16.xpose.msra.mxu0 %v2813
        %4336 = vmatprep.subr.bf16.mxu0 %v2830
        %4337 = vmatpush1.bf16.xpose.msra.mxu0 %v2829
        %4338 = vmatprep.subr.bf16.mxu0 %v2846
        %4339 = vmatpush1.bf16.xpose.msra.mxu0 %v2845
        %4340 = vmatprep.subr.bf16.mxu0 %v2862
        %4341 = vmatpush1.bf16.xpose.msra.mxu0 %v2861
        %4342 = vmatprep.subr.bf16.mxu0 %v2878
        %4343 = vmatpush1.bf16.xpose.msra.mxu0 %v2877
        %4344 = vmatprep.subr.bf16.mxu0 %v2894
        %4345 = vmatpush1.bf16.xpose.msra.mxu0 %v2893
        %4346 = vmatprep.subr.bf16.mxu0 %v2910
        %4347 = vmatpush1.bf16.xpose.msra.mxu0 %v2909
        %4348 = vmatprep.subr.bf16.mxu0 %v2926
        %4349 = vmatpush1.bf16.xpose.msra.mxu0 %v2925
        %4350 = vmatprep.subr.bf16.mxu0 %v2942
        %4351 = vmatpush1.bf16.xpose.msra.mxu0 %v2941
        %4352 = vmatprep.subr.bf16.mxu0 %v2958
        %4353 = vmatpush1.bf16.xpose.msra.mxu0 %v2957
        %4354 = vmatprep.subr.bf16.mxu0 %v2974
        %4355 = vmatpush1.bf16.xpose.msra.mxu0 %v2973
        %4356 = vmatprep.subr.bf16.mxu0 %v2990
        %4357 = vmatpush1.bf16.xpose.msra.mxu0 %v2989
        %4358 = vmatprep.subr.bf16.mxu0 %v3006
        %4359 = vmatpush1.bf16.xpose.msra.mxu0 %v3005
        %4360 = vmatprep.subr.bf16.mxu0 %v3022
        %4361 = vmatpush1.bf16.xpose.msra.mxu0 %v3021
        %4362 = vmatprep.mubr.bf16.mxu0 %v926
        %4363 = vmatmul.mubr.bf16.gmra.mrb[0].mxu0 %v925
        %v4364 = vpop.f32.mrb[0].mxu0
        %v4365 = vadd.f32 %v4312, %v4364
        %v4366 = vpop.f32.mrb[0].mxu0
        %v4367 = vadd.f32 %v4314, %v4366
        %v4368 = vpop.f32.mrb[0].mxu0
        %v4369 = vadd.f32 %v4316, %v4368
        %v4370 = vpop.f32.mrb[0].mxu0
        %v4371 = vadd.f32 %v4318, %v4370
        %4372 = vmatprep.mubr.bf16.mxu0 %v942
        %4373 = vmatmul.mubr.bf16.gmra.mrb[0].mxu0 %v941
        %v4374 = vpop.f32.mrb[0].mxu0
        %v4375 = vadd.f32 %v4322, %v4374
        %v4376 = vpop.f32.mrb[0].mxu0
        %v4377 = vadd.f32 %v4324, %v4376
        %v4378 = vpop.f32.mrb[0].mxu0
        %v4379 = vadd.f32 %v4326, %v4378
        %v4380 = vpop.f32.mrb[0].mxu0
        %v4381 = vadd.f32 %v4328, %v4380
        %4382 = vdwg.mxu0
        %4383 = vst [vmem:[%s222] sm:$0xff] %v3941
        %4384 = vst [vmem:[%s222 + $0x8] sm:$0xff] %v3943
        %4385 = vst [vmem:[%s222 + $0x10] sm:$0xff] %v4365
        %4386 = vst [vmem:[%s222 + $0x18] sm:$0xff] %v4367
        %4387 = vst [vmem:[%s222 + $0x20] sm:$0xff] %v3945
        %4388 = vst [vmem:[%s222 + $0x28] sm:$0xff] %v3947
        %4389 = vst [vmem:[%s222 + $0x30] sm:$0xff] %v4369
        %4390 = vst [vmem:[%s222 + $0x38] sm:$0xff] %v4371
        %4391 = vst [vmem:[%s222 + $0x40] sm:$0xff] %v3951
        %4392 = vst [vmem:[%s222 + $0x48] sm:$0xff] %v3953
        %4393 = vst [vmem:[%s222 + $0x50] sm:$0xff] %v4375
        %4394 = vst [vmem:[%s222 + $0x58] sm:$0xff] %v4377
        %4395 = vst [vmem:[%s222 + $0x60] sm:$0xff] %v3955
        %4396 = vst [vmem:[%s222 + $0x68] sm:$0xff] %v3957
        %4397 = vst [vmem:[%s222 + $0x70] sm:$0xff] %v4379
        %4398 = vst [vmem:[%s222 + $0x78] sm:$0xff] %v4381
        %v4399 = vld [vmem:[%s254] sm:$0xf]
        %v4400 = vadd.f32 %v3941, %v3945
        %v4401 = vadd.f32 %v4400, %v3951
        %v4402 = vadd.f32 %v4401, %v3955
        %v4403 = vrot.slane %v4402, 4
        %v4404 = vadd.f32 %v4402, %v4403
        %v4405 = vrot.slane %v4404, 2
        %v4406 = vadd.f32 %v4404, %v4405
        %v4407 = vrot.slane %v4406, 1
        %v4408 = vadd.f32 %v4406, %v4407
        %v4409 = vadd.f32 %v3943, %v3947
        %v4410 = vadd.f32 %v4409, %v3953
        %v4411 = vadd.f32 %v4410, %v3957
        %v4412 = vrot.slane %v4411, 4
        %v4413 = vadd.f32 %v4411, %v4412
        %v4414 = vrot.slane %v4413, 2
        %v4415 = vadd.f32 %v4413, %v4414
        %v4416 = vrot.slane %v4415, 1
        %v4417 = vadd.f32 %v4415, %v4416
        %v4418 = vadd.f32 %v4365, %v4369
        %v4419 = vadd.f32 %v4418, %v4375
        %v4420 = vadd.f32 %v4419, %v4379
        %v4421 = vrot.slane %v4420, 4
        %v4422 = vadd.f32 %v4420, %v4421
        %v4423 = vrot.slane %v4422, 2
        %v4424 = vadd.f32 %v4422, %v4423
        %v4425 = vrot.slane %v4424, 1
        %v4426 = vadd.f32 %v4424, %v4425
        %v4427 = vadd.f32 %v4367, %v4371
        %v4428 = vadd.f32 %v4427, %v4377
        %v4429 = vadd.f32 %v4428, %v4381
        %v4430 = vrot.slane %v4429, 4
        %v4431 = vadd.f32 %v4429, %v4430
        %v4432 = vrot.slane %v4431, 2
        %v4433 = vadd.f32 %v4431, %v4432
        %v4434 = vrot.slane %v4433, 1
        %v4435 = vadd.f32 %v4433, %v4434
        %v4440 = vcombine.low %v4408, %v4417
        %v4441 = vcombine.low %v4426, %v4435
        %v4443 = vunpack.c.l.s4 1966171168
        %v4444 = vunpack.c.0.s8 %v4443
        %v4445 = vlaneseq
        %v4446 = vshrl.u32 %v4445, 7
        %v4447 = vsub.s32 %v4444, %v4446
        %v4448 = vrot.slane %v4440, %v4447
        %v4450 = vunpack.c.l.s4 1966171168
        %v4451 = vunpack.c.0.s8 %v4450
        %v4452 = vlaneseq
        %v4453 = vshrl.u32 %v4452, 7
        %v4454 = vsub.s32 %v4451, %v4453
        %v4455 = vrot.slane %v4441, %v4454
        %v4456 = vcombine.low %v4448, %v4455
        %v4458 = vunpack.c.l.s4 1966171168
        %v4459 = vunpack.c.0.s8 %v4458
        %v4460 = vlaneseq
        %v4461 = vshrl.u32 %v4460, 7
        %v4462 = vsub.s32 %v4459, %v4461
        %v4463 = vrot.slane %v4456, %v4462
        %v4465 = vadd.f32 %v4399, %v4463
        %v4466 = vlaneseq
        %vm4467 = vcmp.ge.s32.totalorder %v4466, 0
        %vm4468 = vcmp.lt.s32.totalorder %v4466, 512
        %vm4469 = vmand %vm4467, %vm4468
        %4470 = vst.msk [vmem:[%s254] sm:$0xf] %vm4469, %v4465
        %v4471 = vld [vmem:[%s259] sm:$0xf]
        %v4472 = vmul.f32 %v3941, %v3941
        %v4473 = vmul.f32 %v3943, %v3943
        %v4474 = vmul.f32 %v4365, %v4365
        %v4475 = vmul.f32 %v4367, %v4367
        %v4476 = vmul.f32 %v3945, %v3945
        %v4477 = vmul.f32 %v3947, %v3947
        %v4478 = vmul.f32 %v4369, %v4369
        %v4479 = vmul.f32 %v4371, %v4371
        %v4480 = vmul.f32 %v3951, %v3951
        %v4481 = vmul.f32 %v3953, %v3953
        %v4482 = vmul.f32 %v4375, %v4375
        %v4483 = vmul.f32 %v4377, %v4377
        %v4484 = vmul.f32 %v3955, %v3955
        %v4485 = vmul.f32 %v3957, %v3957
        %v4486 = vmul.f32 %v4379, %v4379
        %v4487 = vmul.f32 %v4381, %v4381
        %v4488 = vadd.f32 %v4472, %v4476
        %v4489 = vadd.f32 %v4488, %v4480
        %v4490 = vadd.f32 %v4489, %v4484
        %v4491 = vrot.slane %v4490, 4
        %v4492 = vadd.f32 %v4490, %v4491
        %v4493 = vrot.slane %v4492, 2
        %v4494 = vadd.f32 %v4492, %v4493
        %v4495 = vrot.slane %v4494, 1
        %v4496 = vadd.f32 %v4494, %v4495
        %v4497 = vadd.f32 %v4473, %v4477
        %v4498 = vadd.f32 %v4497, %v4481
        %v4499 = vadd.f32 %v4498, %v4485
        %v4500 = vrot.slane %v4499, 4
        %v4501 = vadd.f32 %v4499, %v4500
        %v4502 = vrot.slane %v4501, 2
        %v4503 = vadd.f32 %v4501, %v4502
        %v4504 = vrot.slane %v4503, 1
        %v4505 = vadd.f32 %v4503, %v4504
        %v4506 = vadd.f32 %v4474, %v4478
        %v4507 = vadd.f32 %v4506, %v4482
        %v4508 = vadd.f32 %v4507, %v4486
        %v4509 = vrot.slane %v4508, 4
        %v4510 = vadd.f32 %v4508, %v4509
        %v4511 = vrot.slane %v4510, 2
        %v4512 = vadd.f32 %v4510, %v4511
        %v4513 = vrot.slane %v4512, 1
        %v4514 = vadd.f32 %v4512, %v4513
        %v4515 = vadd.f32 %v4475, %v4479
        %v4516 = vadd.f32 %v4515, %v4483
        %v4517 = vadd.f32 %v4516, %v4487
        %v4518 = vrot.slane %v4517, 4
        %v4519 = vadd.f32 %v4517, %v4518
        %v4520 = vrot.slane %v4519, 2
        %v4521 = vadd.f32 %v4519, %v4520
        %v4522 = vrot.slane %v4521, 1
        %v4523 = vadd.f32 %v4521, %v4522
        %v4528 = vcombine.low %v4496, %v4505
        %v4529 = vcombine.low %v4514, %v4523
        %v4531 = vunpack.c.l.s4 1966171168
        %v4532 = vunpack.c.0.s8 %v4531
        %v4533 = vlaneseq
        %v4534 = vshrl.u32 %v4533, 7
        %v4535 = vsub.s32 %v4532, %v4534
        %v4536 = vrot.slane %v4528, %v4535
        %v4538 = vunpack.c.l.s4 1966171168
        %v4539 = vunpack.c.0.s8 %v4538
        %v4540 = vlaneseq
        %v4541 = vshrl.u32 %v4540, 7
        %v4542 = vsub.s32 %v4539, %v4541
        %v4543 = vrot.slane %v4529, %v4542
        %v4544 = vcombine.low %v4536, %v4543
        %v4546 = vunpack.c.l.s4 1966171168
        %v4547 = vunpack.c.0.s8 %v4546
        %v4548 = vlaneseq
        %v4549 = vshrl.u32 %v4548, 7
        %v4550 = vsub.s32 %v4547, %v4549
        %v4551 = vrot.slane %v4544, %v4550
        %v4553 = vadd.f32 %v4471, %v4551
        %4554 = vst.msk [vmem:[%s259] sm:$0xf] %vm4469, %v4553
        %s4555 = sand.u32 %s90, 1
        %s4556 = sand.u32 %s90, 1
        %s4557 = smul.addr %s4556, 128
        %s4558 = scalar_lea.vmem [#allocation2], %s4557
        %s4559 = smul.u32 4, %s20
        %p4560 = scmp.lt.s32.totalorder %s4559, 15
        %s4561 = scalar_select %p4560, %s4559, 15
        %s4562 = scalar_lea.vmem %s3, %s4561
        %s4563 = smul.u32 4, %s20
        %p4564 = scmp.lt.s32.totalorder %s4563, 15
        %s4565 = scalar_select %p4564, %s4563, 15
        %s4566 = scalar_lea.vmem %s4, %s4565
        // Predicated region
        $region33: #{fcn_forward.2} parent=27 // pred_check
          %p4567 = pneg %p100
        $region34: #{fcn_forward.2} parent=27 // pred_check_branch
          %4569 = sbr.rel (%p4567) target = $region36
        $region35: #{fcn_forward.2} parent=27 // pred_region
          %s4570 = smul.u32 4, %s21
          %s4571 = smul.u32 4, %s20
          %s4572 = smul.addr %s4570, 16
          %s4573 = sadd.s32 %s4571, %s4572
          %s4574 = smul.addr %s4573, 8
          %s4575 = scalar_lea.vmem %s2, %s4574
          // Predicated region
          $region37: #{fcn_forward.2} parent=35 // pred_check
            _
          $region38: #{fcn_forward.2} parent=35 // pred_check_branch
            %4577 = sbr.rel (0) target = $region40
          $region39: #{fcn_forward.2} parent=35 // pred_region
            // Predicated region
            $region41: #{fcn_forward.2} parent=39 // pred_check
              _
            $region42: #{fcn_forward.2} parent=39 // pred_check_branch
              %4579 = sbr.rel (0) target = $region44
            $region43: #{fcn_forward.2} parent=39 // pred_region
              loop: start=0, step=1, limit=1
              $region45: #{fcn_forward.2} parent=43 // loop_pre_header
                _
              $region46: #{fcn_forward.2} parent=43 // loop_header
                %s4581 = sphi 0, %s4585
                %p4582 = scmp.ge.s32.totalorder %s4581, 1
                %s4586 = sphi %s4558, %s4558
                %s4587 = sphi %s4575, %s4575
              $region47: #{fcn_forward.2} parent=43 // loop_header_branch
                %4584 = sbr.rel (%p4582) target = $region51
              $region48: #{fcn_forward.2} parent=43 // loop_body
                %v4588 = vld [vmem:[%s4586] sm:$0xff]
                %4589 = vst [vmem:[%s4587] sm:$0xff] %v4588
                %v4590 = vld [vmem:[%s4586 + $0x8] sm:$0xff]
                %4591 = vst [vmem:[%s4587 + $0x8] sm:$0xff] %v4590
                %v4592 = vld [vmem:[%s4586 + $0x10] sm:$0xff]
                %4593 = vst [vmem:[%s4587 + $0x10] sm:$0xff] %v4592
                %v4594 = vld [vmem:[%s4586 + $0x18] sm:$0xff]
                %4595 = vst [vmem:[%s4587 + $0x18] sm:$0xff] %v4594
                %v4596 = vld [vmem:[%s4586 + $0x20] sm:$0xff]
                %4597 = vst [vmem:[%s4587 + $0x80] sm:$0xff] %v4596
                %v4598 = vld [vmem:[%s4586 + $0x28] sm:$0xff]
                %4599 = vst [vmem:[%s4587 + $0x88] sm:$0xff] %v4598
                %v4600 = vld [vmem:[%s4586 + $0x30] sm:$0xff]
                %4601 = vst [vmem:[%s4587 + $0x90] sm:$0xff] %v4600
                %v4602 = vld [vmem:[%s4586 + $0x38] sm:$0xff]
                %4603 = vst [vmem:[%s4587 + $0x98] sm:$0xff] %v4602
                %v4604 = vld [vmem:[%s4586 + $0x40] sm:$0xff]
                %4605 = vst [vmem:[%s4587 + $0x100] sm:$0xff] %v4604
                %v4606 = vld [vmem:[%s4586 + $0x48] sm:$0xff]
                %4607 = vst [vmem:[%s4587 + $0x108] sm:$0xff] %v4606
                %v4608 = vld [vmem:[%s4586 + $0x50] sm:$0xff]
                %4609 = vst [vmem:[%s4587 + $0x110] sm:$0xff] %v4608
                %v4610 = vld [vmem:[%s4586 + $0x58] sm:$0xff]
                %4611 = vst [vmem:[%s4587 + $0x118] sm:$0xff] %v4610
                %v4612 = vld [vmem:[%s4586 + $0x60] sm:$0xff]
                %4613 = vst [vmem:[%s4587 + $0x180] sm:$0xff] %v4612
                %v4614 = vld [vmem:[%s4586 + $0x68] sm:$0xff]
                %4615 = vst [vmem:[%s4587 + $0x188] sm:$0xff] %v4614
                %v4616 = vld [vmem:[%s4586 + $0x70] sm:$0xff]
                %4617 = vst [vmem:[%s4587 + $0x190] sm:$0xff] %v4616
                %v4618 = vld [vmem:[%s4586 + $0x78] sm:$0xff]
                %4619 = vst [vmem:[%s4587 + $0x198] sm:$0xff] %v4618
              $region49: #{fcn_forward.2} parent=43 // loop_footer
                %s4585 = sadd.s32 1, %s4581
              $region50: #{fcn_forward.2} parent=43 // loop_footer_branch
                %4580 = sbr.rel target = $region46
              $region51: #{fcn_forward.2} parent=43 // loop_exit
                _
            $region44: #{fcn_forward.2} parent=39 // pred_fallthru
              _
            // Predicated region
            $region52: #{fcn_forward.2} parent=39 // pred_check
              _
            $region53: #{fcn_forward.2} parent=39 // pred_check_branch
              %4621 = sbr.rel target = $region55
            $region54: #{fcn_forward.2} parent=39 // pred_region
              _
            $region55: #{fcn_forward.2} parent=39 // pred_fallthru
              _
          $region40: #{fcn_forward.2} parent=35 // pred_fallthru
            _
          %4622 = vnop
        $region36: #{fcn_forward.2} parent=27 // pred_fallthru
          _
        // Predicated region
        $region56: #{fcn_forward.2} parent=27 // pred_check
          %p4623 = pneg %p126
        $region57: #{fcn_forward.2} parent=27 // pred_check_branch
          %4625 = sbr.rel (%p4623) target = $region59
        $region58: #{fcn_forward.2} parent=27 // pred_region
          %s4626 = smul.u32 4, %s20
        $region59: #{fcn_forward.2} parent=27 // pred_fallthru
          _
        // Predicated region
        $region60: #{fcn_forward.2} parent=27 // pred_check
          %p4627 = pneg %p152
        $region61: #{fcn_forward.2} parent=27 // pred_check_branch
          %4629 = sbr.rel (%p4627) target = $region63
        $region62: #{fcn_forward.2} parent=27 // pred_region
          %s4630 = smul.u32 4, %s20
        $region63: #{fcn_forward.2} parent=27 // pred_fallthru
          _
      $region28: #{fcn_forward.2} parent=5 // pred_fallthru
        _
      %p4631 = scmp.le.s32.totalorder 2, %s11
      // Predicated region
      $region64: #{fcn_forward.2} parent=5 // pred_check
        %p4632 = pneg %p4631
      $region65: #{fcn_forward.2} parent=5 // pred_check_branch
        %4634 = sbr.rel (%p4632) target = $region67
      $region66: #{fcn_forward.2} parent=5 // pred_region
        %s4635 = ssub.s32 %s11, 2
        // Predicated region
        $region68: #{fcn_forward.2} parent=66 // pred_check
          %p4636 = pneg %p106
        $region69: #{fcn_forward.2} parent=66 // pred_check_branch
          %4638 = sbr.rel (%p4636) target = $region71
        $region70: #{fcn_forward.2} parent=66 // pred_region
          %s4639 = sand.u32 %s91, 1
          %s4640 = sand.u32 %s91, 1
          %s4641 = smul.addr %s4640, 128
          %s4642 = scalar_lea.vmem [#allocation2], %s4641
        $region71: #{fcn_forward.2} parent=66 // pred_fallthru
          _
        // Predicated region
        $region72: #{fcn_forward.2} parent=66 // pred_check
          %p4643 = pneg %p132
        $region73: #{fcn_forward.2} parent=66 // pred_check_branch
          %4645 = sbr.rel (%p4643) target = $region75
        $region74: #{fcn_forward.2} parent=66 // pred_region
          %s4646 = smul.u32 4, %s22
          %p4647 = scmp.lt.s32.totalorder %s4646, 15
          %s4648 = scalar_select %p4647, %s4646, 15
          %s4649 = scalar_lea.vmem %s3, %s4648
        $region75: #{fcn_forward.2} parent=66 // pred_fallthru
          _
        // Predicated region
        $region76: #{fcn_forward.2} parent=66 // pred_check
          %p4650 = pneg %p158
        $region77: #{fcn_forward.2} parent=66 // pred_check_branch
          %4652 = sbr.rel (%p4650) target = $region79
        $region78: #{fcn_forward.2} parent=66 // pred_region
          %s4653 = smul.u32 4, %s22
          %p4654 = scmp.lt.s32.totalorder %s4653, 15
          %s4655 = scalar_select %p4654, %s4653, 15
          %s4656 = scalar_lea.vmem %s4, %s4655
        $region79: #{fcn_forward.2} parent=66 // pred_fallthru
          _
      $region67: #{fcn_forward.2} parent=5 // pred_fallthru
        _
    $region6: #{fcn_forward.2} parent=1 // loop_footer
      %s15 = sadd.s32 1, %s11
    $region7: #{fcn_forward.2} parent=1 // loop_footer_branch
      %10 = sbr.rel target = $region3
    $region8: #{fcn_forward.2} parent=1 // loop_exit
      _

</llo_original>
